<compile_context>
chip_gen: v7x
topology: tpu7x:2x2x1
jax: 0.10.0
libtpu: 0.0.40
codegen_flags: <defaults>
</compile_context>

<pallas_src>
import functools

import numpy as np
import jax
import jax.numpy as jnp
from jax.experimental import pallas as pl
from jax.experimental.pallas import tpu as pltpu


# ----------------------------------------------------------------------------
# Small helpers
# ----------------------------------------------------------------------------
def _round_up(x, m):
    return ((x + m - 1) // m) * m


@functools.lru_cache(maxsize=None)
def _hw_roll_ok(dtype_name):
    """Probe: does pltpu.roll lower for this dtype AND match jnp.roll semantics?"""
    dtype = jnp.dtype(dtype_name)

    def _probe(x_ref, o_ref):
        o_ref[...] = pltpu.roll(x_ref[...], 5, axis=1)

    try:
        x = jnp.arange(16 * 256, dtype=jnp.float32).reshape(16, 256).astype(dtype)
        y = pl.pallas_call(
            _probe, out_shape=jax.ShapeDtypeStruct((16, 256), dtype))(x)
        y = jax.block_until_ready(y)
        return bool(jnp.array_equal(y, jnp.roll(x, 5, axis=1)))
    except Exception:
        return False        # lowering unsupported -> use the slice+concat fallback


def _roll_lanes(x, delta):
    """result[..., i] = x[..., (i + delta) % n] along the lane (last) axis."""
    n = x.shape[-1]
    delta = delta % n
    if delta == 0:
        return x
    if n % 128 == 0 and _hw_roll_ok(str(x.dtype)):
        # XLU lane rotate -- keeps the shifts off the VALU / load-store slots.
        return pltpu.roll(x, n - delta, axis=x.ndim - 1)
    # Fallback: two static lane slices + concat (always lowers, any dtype / width).
    return jnp.concatenate([x[..., delta:], x[..., :delta]], axis=-1)


# ----------------------------------------------------------------------------
# The fused localization-trunk kernel (one grid step == one batch sample)
# ----------------------------------------------------------------------------
def _fused_localizer_kernel(x_ref, *refs, levels, compute_dtype):
    *lvl_refs, out_ref = refs
    act = x_ref[0].astype(compute_dtype)                 # (C_prev_p, N) flat voxels

    for li, lv in enumerate(levels):
        w_ref, mask_ref, s_ref, t_ref, sel_ref = lvl_refs[5 * li: 5 * li + 5]
        Dl, Hl, Wl = lv["dims"]
        Nl = Dl * Hl * Wl
        K = lv["kernel_size"]
        pad = (K - 1) // 2
        cpp = lv["c_prev_p"]
        ng = lv["n_groups"]
        gpad = lv["group_pad"]
        tpg = (K ** 3) // ng

        # ---- Conv3d(K, padding='same') as im2col matmul(s) ------------------
        # Each tap = one XLU lane roll + one bf16 multiply by a precomputed 0/1
        # boundary-mask row (sublane-broadcast).  Cyclic wraps are exactly the
        # out-of-bounds taps, so the mask zeroes them.
        y = None
        for g in range(ng):
            pieces = []
            for j in range(tpg):
                tap = g * tpg + j
                kd, kh, kw = tap // (K * K), (tap // K) % K, tap % K
                dd, dh, dw = kd - pad, kh - pad, kw - pad
                if dd == 0 and dh == 0 and dw == 0:
                    pieces.append(act)                    # centre tap: all-ones mask
                    continue
                nb = _roll_lanes(act, dd * Hl * Wl + dh * Wl + dw)
                pieces.append(nb * mask_ref[tap:tap + 1, :])
            rows = tpg * cpp
            if gpad > rows:                               # 128-aligned contraction
                pieces.append(jnp.zeros((gpad - rows, Nl), compute_dtype))
            patches = jnp.concatenate(pieces, axis=0)     # (gpad, Nl)
            part = jnp.dot(w_ref[:, g * gpad:(g + 1) * gpad], patches,
                           preferred_element_type=jnp.float32)
            y = part if y is None else y + part           # (C_hid, Nl) f32

        # conv bias + eval-mode BatchNorm folded into per-channel scale/shift (f32)
        y = y * s_ref[...] + t_ref[...]

        # ---- MaxPool3d(2, 2): shifted maxima (wraps land only on dead lanes) ---
        m = jnp.maximum(y, _roll_lanes(y, 1))             # pair along W
        m = jnp.maximum(m, _roll_lanes(m, Wl))            # pair along H
        m = jnp.maximum(m, _roll_lanes(m, Hl * Wl))       # pair along D

        # ---- compact the pooled lanes to a dense grid via a 0/1 selection matmul
        pooled = jnp.dot(m.astype(compute_dtype), sel_ref[...],
                         preferred_element_type=jnp.float32)   # (C_hid, Nl // 8)
        pooled = jnp.maximum(pooled, 0.0)                 # ReLU (commutes with select)

        if li + 1 < len(levels):
            act = pooled.astype(compute_dtype)
        else:
            out_ref[0] = pooled.astype(out_ref.dtype)     # (C_hid, Sp)


# ----------------------------------------------------------------------------
# Host-side layout plumbing (one-time, trace-time constants)
# ----------------------------------------------------------------------------
def _tap_masks_np(Dl, Hl, Wl, K):
    """(K^3, Dl*Hl*Wl) 0/1 validity of every conv tap under 'same' padding."""
    pad = (K - 1) // 2
    d, h, w = np.indices((Dl, Hl, Wl))
    rows = []
    for kd in range(K):
        for kh in range(K):
            for kw in range(K):
                dd, dh, dw = kd - pad, kh - pad, kw - pad
                ok = ((d + dd >= 0) & (d + dd < Dl) & (h + dh >= 0) &
                      (h + dh < Hl) & (w + dw >= 0) & (w + dw < Wl))
                rows.append(ok.reshape(-1))
    return np.stack(rows, 0).astype(np.float32)


def _pool_select_np(Dl, Hl, Wl):
    """(Dl*Hl*Wl, Dl*Hl*Wl//8) 0/1 matrix picking the MaxPool(2,2) output lanes."""
    Dp, Hp, Wp = Dl // 2, Hl // 2, Wl // 2
    sel = np.zeros((Dl * Hl * Wl, Dp * Hp * Wp), np.float32)
    for dp in range(Dp):
        for hp in range(Hp):
            for wp in range(Wp):
                src = (2 * dp) * Hl * Wl + (2 * hp) * Wl + (2 * wp)
                sel[src, (dp * Hp + hp) * Wp + wp] = 1.0
    return sel


def _conv_weight_matrix(w, c_pad, n_groups, group_pad, compute_dtype):
    """(Cout,Cin,K,K,K) -> (Cout, n_groups*group_pad), kd-group-major, (kh,kw,cin)-minor."""
    cout, cin, k0, k1, k2 = w.shape
    w = jnp.pad(w, ((0, 0), (0, c_pad - cin), (0, 0), (0, 0), (0, 0)))
    wt = jnp.transpose(w, (0, 2, 3, 4, 1))                # (Cout, kd, kh, kw, c_pad)
    tpg = (k0 * k1 * k2) // n_groups
    wt = wt.reshape(cout, n_groups, tpg * c_pad)
    wt = jnp.pad(wt, ((0, 0), (0, 0), (0, group_pad - tpg * c_pad)))
    return wt.reshape(cout, n_groups * group_pad).astype(compute_dtype)


def _bn_fold(conv_bias, bn):
    # TODO(synk): BatchNorm3d is eval-mode only (running stats); training-mode
    # batch statistics are not computed.
    s = bn["gamma"] * jax.lax.rsqrt(bn["var"] + bn["eps"])
    t = (conv_bias - bn["mean"]) * s + bn["beta"]
    return (s.reshape(-1, 1).astype(jnp.float32),
            t.reshape(-1, 1).astype(jnp.float32))


def rotation_6d_to_matrix(d6):
    a1, a2 = d6[..., :3], d6[..., 3:]
    b1 = a1 / jnp.maximum(jnp.linalg.norm(a1, axis=-1, keepdims=True), 1e-12)
    b2 = a2 - jnp.sum(b1 * a2, axis=-1, keepdims=True) * b1
    b2 = b2 / jnp.maximum(jnp.linalg.norm(b2, axis=-1, keepdims=True), 1e-12)
    b3 = jnp.cross(b1, b2)
    return jnp.stack((b1, b2, b3), axis=-2)


# ----------------------------------------------------------------------------
# Forward wrapper
# ----------------------------------------------------------------------------
def localizer_features(feature_grid, params, *, hidden_channels=32, kernel_size=3,
                       num_levels=2, compute_dtype=jnp.bfloat16,
                       kd_group_bytes=8 * 2 ** 20):
    """Fused localization trunk; returns pooled features (B, hidden, Sp) in f32,
    spatial axis flattened (d, h, w)-major == PyTorch's .view(B, -1) order."""
    B, C_in, D, H, W = feature_grid.shape
    K = kernel_size
    assert K % 2 == 1, "only odd kernel sizes ('same' padding) supported"
    uf = 2 ** num_levels
    # TODO(synk): odd spatial dims (MaxPool3d floor semantics) are not supported.
    assert D % uf == 0 and H % uf == 0 and W % uf == 0
    N = D * H * W
    sub = 16 if jnp.dtype(compute_dtype) == jnp.dtype(jnp.bfloat16) else 8
    assert hidden_channels % sub == 0
    C_in_p = _round_up(max(C_in, sub), sub)
    itemsize = jnp.dtype(compute_dtype).itemsize

    # input: metadata-only reshape to (B, C, D*H*W); pad channels to the sublane tile
    x = feature_grid.reshape(B, C_in, N)
    x = jnp.pad(x, ((0, 0), (0, C_in_p - C_in), (0, 0))).astype(compute_dtype)

    lvl_inputs, levels_meta = [], []
    c_prev_p = C_in_p
    Dl, Hl, Wl = D, H, W
    for i in range(num_levels):
        Nl = Dl * Hl * Wl
        patch_bytes = (K ** 3) * c_prev_p * Nl * itemsize
        n_groups = K if patch_bytes > kd_group_bytes else 1   # v7x/v5e VMEM guard
        tpg = (K ** 3) // n_groups
        group_pad = _round_up(tpg * c_prev_p, 128)
        wmat = _conv_weight_matrix(params[f"conv{i + 1}_w"], c_prev_p, n_groups,
                                   group_pad, compute_dtype)
        masks = jnp.asarray(_tap_masks_np(Dl, Hl, Wl, K), dtype=compute_dtype)
        s, t = _bn_fold(params[f"conv{i + 1}_b"], params[f"bn{i + 1}"])
        # TODO(synk): dense (Nl, Nl/8) selection matrix; should be blocked per
        # d-slab for very large volume_dim (it grows quadratically with the grid).
        sel = jnp.asarray(_pool_select_np(Dl, Hl, Wl), dtype=compute_dtype)
        lvl_inputs += [wmat, masks, s, t, sel]
        levels_meta.append(dict(dims=(Dl, Hl, Wl), kernel_size=K,
                                c_prev_p=c_prev_p, n_groups=n_groups,
                                group_pad=group_pad))
        c_prev_p = hidden_channels
        Dl, Hl, Wl = Dl // 2, Hl // 2, Wl // 2

    Sp = Dl * Hl * Wl                                  # pooled voxels after last level

    kernel = functools.partial(_fused_localizer_kernel,
                               levels=tuple(levels_meta),
                               compute_dtype=compute_dtype)

    def _const_spec(a):
        nd = a.ndim
        return pl.BlockSpec(a.shape, lambda i: (0,) * nd)

    in_specs = ([pl.BlockSpec((1, C_in_p, N), lambda i: (i, 0, 0))] +
                [_const_spec(a) for a in lvl_inputs])

    # Explicit scoped-VMEM budget (per review: default differs per TPU generation).
    const_bytes = sum(int(np.prod(a.shape)) * jnp.dtype(a.dtype).itemsize
                      for a in lvl_inputs)
    patch_peak = max(m["group_pad"] * (m["dims"][0] * m["dims"][1] * m["dims"][2])
                     for m in levels_meta) * itemsize
    work_bytes = (const_bytes + 4 * C_in_p * N * itemsize + 2 * patch_peak +
                  4 * hidden_channels * N * 4)
    vmem_limit = int(min(64 * 2 ** 20, max(32 * 2 ** 20, 2 * work_bytes)))

    pooled = pl.pallas_call(
        kernel,
        out_shape=jax.ShapeDtypeStruct((B, hidden_channels, Sp), jnp.float32),
        grid=(B,),
        in_specs=in_specs,
        out_specs=pl.BlockSpec((1, hidden_channels, Sp), lambda i: (i, 0, 0)),
        compiler_params=pltpu.CompilerParams(
            dimension_semantics=("parallel",),         # batches across TCs (v7x)
            vmem_limit_bytes=vmem_limit),
    )(x, *lvl_inputs)
    return pooled


def rigid_grid_localizer_forward(feature_grid, params, *, scale_factor=1.0,
                                 hidden_channels=32, kernel_size=3, num_levels=2,
                                 compute_dtype=jnp.bfloat16):
    pooled = localizer_features(feature_grid, params,
                                hidden_channels=hidden_channels,
                                kernel_size=kernel_size, num_levels=num_levels,
                                compute_dtype=compute_dtype)
    B, C_hid, Sp = pooled.shape
    assert params["lin1_w"].shape[1] == C_hid * Sp

    # flatten order (c, d, h, w) == PyTorch .view(B, -1); mapping MLP stays f32 and
    # runs as one batched XLA GEMM (review: no per-lane gather / K=1 matvec in-kernel).
    flat = pooled.reshape(B, C_hid * Sp)
    h1 = jnp.maximum(flat @ params["lin1_w"].T + params["lin1_b"], 0.0)
    # TODO(synk): Dropout (training-time) not implemented; module default dropout=0.
    x = h1 @ params["lin2_w"].T + params["lin2_b"]

    # TODO(synk): regress_rotation=False head variant not implemented (default True).
    scales = scale_factor * 0.5 * (jnp.tanh(x[:, :3]) + 1.0)
    scales_mat = scales[:, :, None] * jnp.eye(3, dtype=x.dtype)[None]
    rotation = rotation_6d_to_matrix(x[:, 3:9])
    scaled_rotation = jnp.einsum("bij,bjk->bik", scales_mat, rotation)
    translation = jnp.tanh(x[:, 9:])
    transformation = jnp.concatenate([scaled_rotation, translation[..., None]],
                                     axis=-1)
    return transformation, scales


# ----------------------------------------------------------------------------
# Pure-JAX f32 reference of the localization trunk (tolerance test, review ask)
# ----------------------------------------------------------------------------
def _localization_reference(feature_grid, params, *, kernel_size=3, num_levels=2):
    pad = (kernel_size - 1) // 2
    x = feature_grid
    for i in range(num_levels):
        w, b, bn = params[f"conv{i + 1}_w"], params[f"conv{i + 1}_b"], params[f"bn{i + 1}"]
        x = jax.lax.conv_general_dilated(
            x, w, window_strides=(1, 1, 1), padding=[(pad, pad)] * 3,
            dimension_numbers=("NCDHW", "OIDHW", "NCDHW"))
        x = x + b.reshape(1, -1, 1, 1, 1)
        s = bn["gamma"] * jax.lax.rsqrt(bn["var"] + bn["eps"])
        x = ((x - bn["mean"].reshape(1, -1, 1, 1, 1)) * s.reshape(1, -1, 1, 1, 1)
             + bn["beta"].reshape(1, -1, 1, 1, 1))
        x = jax.lax.reduce_window(x, -jnp.inf, jax.lax.max,
                                  (1, 1, 2, 2, 2), (1, 1, 2, 2, 2), "VALID")
        x = jnp.maximum(x, 0.0)
    return x.reshape(x.shape[0], x.shape[1], -1)


# ----------------------------------------------------------------------------
# Deterministic parameters matching the module's __init__ / _initialize_weights.
# ----------------------------------------------------------------------------
def make_params(key, input_channels, volume_dim, hidden_channels=32,
                kernel_size=3, num_levels=2, num_out_features=12):
    keys = jax.random.split(key, num_levels + 2)
    params = {}
    in_ch = input_channels
    for i in range(num_levels):
        params[f"conv{i + 1}_w"] = 0.001 * jax.random.normal(
            keys[i], (hidden_channels, in_ch) + (kernel_size,) * 3, jnp.float32)
        params[f"conv{i + 1}_b"] = jnp.zeros((hidden_channels,), jnp.float32)
        params[f"bn{i + 1}"] = dict(
            gamma=jnp.ones((hidden_channels,), jnp.float32),
            beta=jnp.zeros((hidden_channels,), jnp.float32),
            mean=jnp.zeros((hidden_channels,), jnp.float32),
            var=jnp.ones((hidden_channels,), jnp.float32),
            eps=jnp.float32(1e-5))
        in_ch = hidden_channels
    pooled = max(int(volume_dim / float(2 ** num_levels)), 1)
    in_features = hidden_channels * pooled ** 3
    bound = 1.0 / (in_features ** 0.5)
    params["lin1_w"] = jax.random.uniform(
        keys[-2], (3 * hidden_channels, in_features), jnp.float32, -bound, bound)
    params["lin1_b"] = jax.random.uniform(
        keys[-1], (3 * hidden_channels,), jnp.float32, -bound, bound)
    params["lin2_w"] = jnp.zeros((num_out_features, 3 * hidden_channels), jnp.float32)
    params["lin2_b"] = jnp.array([3, 3, 3, 1, 0, 0, 0, 1, 0, 0, 0, 0], jnp.float32)
    return params


if __name__ == "__main__":
    B, F, V = 2, 4, 8              # batch, input_channels, volume_dim
    key = jax.random.PRNGKey(0)
    pkey, xkey = jax.random.split(key)
    params = make_params(pkey, input_channels=F, volume_dim=V)
    feature_grid = jax.random.normal(xkey, (B, F, V, V, V), jnp.float32)

    # Warm up the pltpu.roll lowering/direction probe outside of any trace.
    _ = _hw_roll_ok("float32"), _hw_roll_ok("bfloat16")

    # -- fused Pallas trunk vs pure-JAX f32 reference (bf16-level tolerance) --
    feats = jax.jit(localizer_features)(feature_grid, params)
    feats = jax.block_until_ready(feats)
    ref = _localization_reference(feature_grid, params)
    rel_err = float(jnp.linalg.norm(feats - ref) / (jnp.linalg.norm(ref) + 1e-12))
    assert rel_err < 0.1, f"localization trunk mismatch vs reference: {rel_err:.4f}"

    # -- full forward ----------------------------------------------------------
    fwd = jax.jit(functools.partial(rigid_grid_localizer_forward, scale_factor=1.0))
    transformation, scales = fwd(feature_grid, params)
    jax.block_until_ready((transformation, scales))

    assert transformation.shape == (B, 3, 4)
    assert scales.shape == (B, 3)
    # With the zero-initialised last mapping layer the output equals its bias:
    # scales = 0.5*(tanh(3)+1), rotation = I, translation = 0 (also catches NaNs).
    expected_scale = 0.5 * (jnp.tanh(3.0) + 1.0)
    assert jnp.allclose(scales, expected_scale, atol=1e-4)
    assert jnp.allclose(transformation[:, :, 3], 0.0, atol=1e-5)
    assert jnp.allclose(transformation[:, :, :3],
                        expected_scale * jnp.eye(3)[None], atol=1e-4)
    print("KERNEL_OK")
</pallas_src>

<mosaic_0001>
module attributes {stable_mosaic.version = 11 : i64} {
  func.func @_probe(%arg0: memref<16x256xf32, #tpu.memory_space<vmem>>, %arg1: memref<16x256xf32, #tpu.memory_space<vmem>>) attributes {dimension_semantics = [], scalar_prefetch = 0 : i64, scratch_operands = 0 : i64, tpu.core_type = #tpu.core_type<tc>} {
    %c0 = arith.constant 0 : index
    %c0_0 = arith.constant 0 : index
    %0 = vector.load %arg0[%c0, %c0_0] : memref<16x256xf32, #tpu.memory_space<vmem>>, vector<16x256xf32>
    %c5_i32 = arith.constant 5 : i32
    %1 = tpu.dynamic_rotate %0 by %c5_i32 dim 1 : vector<16x256xf32>, i32 -> vector<16x256xf32>
    %c0_1 = arith.constant 0 : index
    %c0_2 = arith.constant 0 : index
    %2 = vector.load %arg1[%c0_1, %c0_2] : memref<16x256xf32, #tpu.memory_space<vmem>>, vector<16x256xf32>
    tpu.vector_store %arg1[%c0_1, %c0_2], %1 {strides = array<i32>} : memref<16x256xf32, #tpu.memory_space<vmem>>, vector<16x256xf32>,
    return
  }
}

module attributes {stable_mosaic.version = 11 : i64} {
  func.func @_probe(%arg0: memref<16x256xbf16, #tpu.memory_space<vmem>>, %arg1: memref<16x256xbf16, #tpu.memory_space<vmem>>) attributes {dimension_semantics = [], scalar_prefetch = 0 : i64, scratch_operands = 0 : i64, tpu.core_type = #tpu.core_type<tc>} {
    %c0 = arith.constant 0 : index
    %c0_0 = arith.constant 0 : index
    %0 = vector.load %arg0[%c0, %c0_0] : memref<16x256xbf16, #tpu.memory_space<vmem>>, vector<16x256xbf16>
    %c5_i32 = arith.constant 5 : i32
    %1 = tpu.dynamic_rotate %0 by %c5_i32 dim 1 : vector<16x256xbf16>, i32 -> vector<16x256xbf16>
    %c0_1 = arith.constant 0 : index
    %c0_2 = arith.constant 0 : index
    %2 = vector.load %arg1[%c0_1, %c0_2] : memref<16x256xbf16, #tpu.memory_space<vmem>>, vector<16x256xbf16>
    tpu.vector_store %arg1[%c0_1, %c0_2], %1 {strides = array<i32>} : memref<16x256xbf16, #tpu.memory_space<vmem>>, vector<16x256xbf16>,
    return
  }
}

module attributes {stable_mosaic.version = 11 : i64} {
  func.func @_fused_localizer_kernel(%arg0: i32, %arg1: memref<1x16x512xbf16, #tpu.memory_space<vmem>>, %arg2: memref<32x512xbf16, #tpu.memory_space<vmem>>, %arg3: memref<27x512xbf16, #tpu.memory_space<vmem>>, %arg4: memref<32x1xf32, #tpu.memory_space<vmem>>, %arg5: memref<32x1xf32, #tpu.memory_space<vmem>>, %arg6: memref<512x64xbf16, #tpu.memory_space<vmem>>, %arg7: memref<32x896xbf16, #tpu.memory_space<vmem>>, %arg8: memref<27x64xbf16, #tpu.memory_space<vmem>>, %arg9: memref<32x1xf32, #tpu.memory_space<vmem>>, %arg10: memref<32x1xf32, #tpu.memory_space<vmem>>, %arg11: memref<64x8xbf16, #tpu.memory_space<vmem>>, %arg12: memref<1x32x8xf32, #tpu.memory_space<vmem>>) attributes {dimension_semantics = [#tpu.dimension_semantics<parallel>], iteration_bounds = array<i64: 2>, scalar_prefetch = 0 : i64, scratch_operands = 0 : i64, tpu.core_type = #tpu.core_type<tc>, window_params = [{transform_indices = @transform_0, window_bounds = array<i64: 1, 16, 512>}, {pipeline_mode = #tpu.pipeline_mode<synchronous>, transform_indices = @transform_1, window_bounds = array<i64: 32, 512>}, {pipeline_mode = #tpu.pipeline_mode<synchronous>, transform_indices = @transform_2, window_bounds = array<i64: 27, 512>}, {pipeline_mode = #tpu.pipeline_mode<synchronous>, transform_indices = @transform_3, window_bounds = array<i64: 32, 1>}, {pipeline_mode = #tpu.pipeline_mode<synchronous>, transform_indices = @transform_4, window_bounds = array<i64: 32, 1>}, {pipeline_mode = #tpu.pipeline_mode<synchronous>, transform_indices = @transform_5, window_bounds = array<i64: 512, 64>}, {pipeline_mode = #tpu.pipeline_mode<synchronous>, transform_indices = @transform_6, window_bounds = array<i64: 32, 896>}, {pipeline_mode = #tpu.pipeline_mode<synchronous>, transform_indices = @transform_7, window_bounds = array<i64: 27, 64>}, {pipeline_mode = #tpu.pipeline_mode<synchronous>, transform_indices = @transform_8, window_bounds = array<i64: 32, 1>}, {pipeline_mode = #tpu.pipeline_mode<synchronous>, transform_indices = @transform_9, window_bounds = array<i64: 32, 1>}, {pipeline_mode = #tpu.pipeline_mode<synchronous>, transform_indices = @transform_10, window_bounds = array<i64: 64, 8>}, {transform_indices = @transform_11, window_bounds = array<i64: 1, 32, 8>}]} {
    %c0 = arith.constant 0 : index
    %c0_0 = arith.constant 0 : index
    %c0_1 = arith.constant 0 : index
    %0 = vector.load %arg1[%c0, %c0_0, %c0_1] : memref<1x16x512xbf16, #tpu.memory_space<vmem>>, vector<1x16x512xbf16>
    %1 = vector.shape_cast %0 : vector<1x16x512xbf16> to vector<16x512xbf16>
    %2 = vector.extract_strided_slice %1 {offsets = [0, 439], sizes = [16, 73], strides = [1, 1]} : vector<16x512xbf16> to vector<16x73xbf16>
    %3 = vector.extract_strided_slice %1 {offsets = [0, 0], sizes = [16, 439], strides = [1, 1]} : vector<16x512xbf16> to vector<16x439xbf16>
    %4 = tpu.concatenate %2, %3 in 1 : vector<16x73xbf16>, vector<16x439xbf16> -> vector<16x512xbf16>
    %c0_2 = arith.constant 0 : index
    %c0_3 = arith.constant 0 : index
    %5 = vector.load %arg3[%c0_2, %c0_3] : memref<27x512xbf16, #tpu.memory_space<vmem>>, vector<1x512xbf16>
    %6 = vector.broadcast %5 : vector<1x512xbf16> to vector<16x512xbf16>
    %7 = arith.mulf %4, %6 : vector<16x512xbf16>
    %8 = vector.extract_strided_slice %1 {offsets = [0, 440], sizes = [16, 72], strides = [1, 1]} : vector<16x512xbf16> to vector<16x72xbf16>
    %9 = vector.extract_strided_slice %1 {offsets = [0, 0], sizes = [16, 440], strides = [1, 1]} : vector<16x512xbf16> to vector<16x440xbf16>
    %10 = tpu.concatenate %8, %9 in 1 : vector<16x72xbf16>, vector<16x440xbf16> -> vector<16x512xbf16>
    %c1 = arith.constant 1 : index
    %c0_4 = arith.constant 0 : index
    %11 = vector.load %arg3[%c1, %c0_4] : memref<27x512xbf16, #tpu.memory_space<vmem>>, vector<1x512xbf16>
    %12 = vector.broadcast %11 : vector<1x512xbf16> to vector<16x512xbf16>
    %13 = arith.mulf %10, %12 : vector<16x512xbf16>
    %14 = vector.extract_strided_slice %1 {offsets = [0, 441], sizes = [16, 71], strides = [1, 1]} : vector<16x512xbf16> to vector<16x71xbf16>
    %15 = vector.extract_strided_slice %1 {offsets = [0, 0], sizes = [16, 441], strides = [1, 1]} : vector<16x512xbf16> to vector<16x441xbf16>
    %16 = tpu.concatenate %14, %15 in 1 : vector<16x71xbf16>, vector<16x441xbf16> -> vector<16x512xbf16>
    %c2 = arith.constant 2 : index
    %c0_5 = arith.constant 0 : index
    %17 = vector.load %arg3[%c2, %c0_5] : memref<27x512xbf16, #tpu.memory_space<vmem>>, vector<1x512xbf16>
    %18 = vector.broadcast %17 : vector<1x512xbf16> to vector<16x512xbf16>
    %19 = arith.mulf %16, %18 : vector<16x512xbf16>
    %20 = vector.extract_strided_slice %1 {offsets = [0, 447], sizes = [16, 65], strides = [1, 1]} : vector<16x512xbf16> to vector<16x65xbf16>
    %21 = vector.extract_strided_slice %1 {offsets = [0, 0], sizes = [16, 447], strides = [1, 1]} : vector<16x512xbf16> to vector<16x447xbf16>
    %22 = tpu.concatenate %20, %21 in 1 : vector<16x65xbf16>, vector<16x447xbf16> -> vector<16x512xbf16>
    %c3 = arith.constant 3 : index
    %c0_6 = arith.constant 0 : index
    %23 = vector.load %arg3[%c3, %c0_6] : memref<27x512xbf16, #tpu.memory_space<vmem>>, vector<1x512xbf16>
    %24 = vector.broadcast %23 : vector<1x512xbf16> to vector<16x512xbf16>
    %25 = arith.mulf %22, %24 : vector<16x512xbf16>
    %26 = vector.extract_strided_slice %1 {offsets = [0, 448], sizes = [16, 64], strides = [1, 1]} : vector<16x512xbf16> to vector<16x64xbf16>
    %27 = vector.extract_strided_slice %1 {offsets = [0, 0], sizes = [16, 448], strides = [1, 1]} : vector<16x512xbf16> to vector<16x448xbf16>
    %28 = tpu.concatenate %26, %27 in 1 : vector<16x64xbf16>, vector<16x448xbf16> -> vector<16x512xbf16>
    %c4 = arith.constant 4 : index
    %c0_7 = arith.constant 0 : index
    %29 = vector.load %arg3[%c4, %c0_7] : memref<27x512xbf16, #tpu.memory_space<vmem>>, vector<1x512xbf16>
    %30 = vector.broadcast %29 : vector<1x512xbf16> to vector<16x512xbf16>
    %31 = arith.mulf %28, %30 : vector<16x512xbf16>
    %32 = vector.extract_strided_slice %1 {offsets = [0, 449], sizes = [16, 63], strides = [1, 1]} : vector<16x512xbf16> to vector<16x63xbf16>
    %33 = vector.extract_strided_slice %1 {offsets = [0, 0], sizes = [16, 449], strides = [1, 1]} : vector<16x512xbf16> to vector<16x449xbf16>
    %34 = tpu.concatenate %32, %33 in 1 : vector<16x63xbf16>, vector<16x449xbf16> -> vector<16x512xbf16>
    %c5 = arith.constant 5 : index
    %c0_8 = arith.constant 0 : index
    %35 = vector.load %arg3[%c5, %c0_8] : memref<27x512xbf16, #tpu.memory_space<vmem>>, vector<1x512xbf16>
    %36 = vector.broadcast %35 : vector<1x512xbf16> to vector<16x512xbf16>
    %37 = arith.mulf %34, %36 : vector<16x512xbf16>
    %38 = vector.extract_strided_slice %1 {offsets = [0, 455], sizes = [16, 57], strides = [1, 1]} : vector<16x512xbf16> to vector<16x57xbf16>
    %39 = vector.extract_strided_slice %1 {offsets = [0, 0], sizes = [16, 455], strides = [1, 1]} : vector<16x512xbf16> to vector<16x455xbf16>
    %40 = tpu.concatenate %38, %39 in 1 : vector<16x57xbf16>, vector<16x455xbf16> -> vector<16x512xbf16>
    %c6 = arith.constant 6 : index
    %c0_9 = arith.constant 0 : index
    %41 = vector.load %arg3[%c6, %c0_9] : memref<27x512xbf16, #tpu.memory_space<vmem>>, vector<1x512xbf16>
    %42 = vector.broadcast %41 : vector<1x512xbf16> to vector<16x512xbf16>
    %43 = arith.mulf %40, %42 : vector<16x512xbf16>
    %44 = vector.extract_strided_slice %1 {offsets = [0, 456], sizes = [16, 56], strides = [1, 1]} : vector<16x512xbf16> to vector<16x56xbf16>
    %45 = vector.extract_strided_slice %1 {offsets = [0, 0], sizes = [16, 456], strides = [1, 1]} : vector<16x512xbf16> to vector<16x456xbf16>
    %46 = tpu.concatenate %44, %45 in 1 : vector<16x56xbf16>, vector<16x456xbf16> -> vector<16x512xbf16>
    %c7 = arith.constant 7 : index
    %c0_10 = arith.constant 0 : index
    %47 = vector.load %arg3[%c7, %c0_10] : memref<27x512xbf16, #tpu.memory_space<vmem>>, vector<1x512xbf16>
    %48 = vector.broadcast %47 : vector<1x512xbf16> to vector<16x512xbf16>
    %49 = arith.mulf %46, %48 : vector<16x512xbf16>
    %50 = vector.extract_strided_slice %1 {offsets = [0, 457], sizes = [16, 55], strides = [1, 1]} : vector<16x512xbf16> to vector<16x55xbf16>
    %51 = vector.extract_strided_slice %1 {offsets = [0, 0], sizes = [16, 457], strides = [1, 1]} : vector<16x512xbf16> to vector<16x457xbf16>
    %52 = tpu.concatenate %50, %51 in 1 : vector<16x55xbf16>, vector<16x457xbf16> -> vector<16x512xbf16>
    %c8 = arith.constant 8 : index
    %c0_11 = arith.constant 0 : index
    %53 = vector.load %arg3[%c8, %c0_11] : memref<27x512xbf16, #tpu.memory_space<vmem>>, vector<1x512xbf16>
    %54 = vector.broadcast %53 : vector<1x512xbf16> to vector<16x512xbf16>
    %55 = arith.mulf %52, %54 : vector<16x512xbf16>
    %56 = vector.extract_strided_slice %1 {offsets = [0, 503], sizes = [16, 9], strides = [1, 1]} : vector<16x512xbf16> to vector<16x9xbf16>
    %57 = vector.extract_strided_slice %1 {offsets = [0, 0], sizes = [16, 503], strides = [1, 1]} : vector<16x512xbf16> to vector<16x503xbf16>
    %58 = tpu.concatenate %56, %57 in 1 : vector<16x9xbf16>, vector<16x503xbf16> -> vector<16x512xbf16>
    %c9 = arith.constant 9 : index
    %c0_12 = arith.constant 0 : index
    %59 = vector.load %arg3[%c9, %c0_12] : memref<27x512xbf16, #tpu.memory_space<vmem>>, vector<1x512xbf16>
    %60 = vector.broadcast %59 : vector<1x512xbf16> to vector<16x512xbf16>
    %61 = arith.mulf %58, %60 : vector<16x512xbf16>
    %62 = vector.extract_strided_slice %1 {offsets = [0, 504], sizes = [16, 8], strides = [1, 1]} : vector<16x512xbf16> to vector<16x8xbf16>
    %63 = vector.extract_strided_slice %1 {offsets = [0, 0], sizes = [16, 504], strides = [1, 1]} : vector<16x512xbf16> to vector<16x504xbf16>
    %64 = tpu.concatenate %62, %63 in 1 : vector<16x8xbf16>, vector<16x504xbf16> -> vector<16x512xbf16>
    %c10 = arith.constant 10 : index
    %c0_13 = arith.constant 0 : index
    %65 = vector.load %arg3[%c10, %c0_13] : memref<27x512xbf16, #tpu.memory_space<vmem>>, vector<1x512xbf16>
    %66 = vector.broadcast %65 : vector<1x512xbf16> to vector<16x512xbf16>
    %67 = arith.mulf %64, %66 : vector<16x512xbf16>
    %68 = vector.extract_strided_slice %1 {offsets = [0, 505], sizes = [16, 7], strides = [1, 1]} : vector<16x512xbf16> to vector<16x7xbf16>
    %69 = vector.extract_strided_slice %1 {offsets = [0, 0], sizes = [16, 505], strides = [1, 1]} : vector<16x512xbf16> to vector<16x505xbf16>
    %70 = tpu.concatenate %68, %69 in 1 : vector<16x7xbf16>, vector<16x505xbf16> -> vector<16x512xbf16>
    %c11 = arith.constant 11 : index
    %c0_14 = arith.constant 0 : index
    %71 = vector.load %arg3[%c11, %c0_14] : memref<27x512xbf16, #tpu.memory_space<vmem>>, vector<1x512xbf16>
    %72 = vector.broadcast %71 : vector<1x512xbf16> to vector<16x512xbf16>
    %73 = arith.mulf %70, %72 : vector<16x512xbf16>
    %74 = vector.extract_strided_slice %1 {offsets = [0, 511], sizes = [16, 1], strides = [1, 1]} : vector<16x512xbf16> to vector<16x1xbf16>
    %75 = vector.extract_strided_slice %1 {offsets = [0, 0], sizes = [16, 511], strides = [1, 1]} : vector<16x512xbf16> to vector<16x511xbf16>
    %76 = tpu.concatenate %74, %75 in 1 : vector<16x1xbf16>, vector<16x511xbf16> -> vector<16x512xbf16>
    %c12 = arith.constant 12 : index
    %c0_15 = arith.constant 0 : index
    %77 = vector.load %arg3[%c12, %c0_15] : memref<27x512xbf16, #tpu.memory_space<vmem>>, vector<1x512xbf16>
    %78 = vector.broadcast %77 : vector<1x512xbf16> to vector<16x512xbf16>
    %79 = arith.mulf %76, %78 : vector<16x512xbf16>
    %80 = vector.extract_strided_slice %1 {offsets = [0, 1], sizes = [16, 511], strides = [1, 1]} : vector<16x512xbf16> to vector<16x511xbf16>
    %81 = vector.extract_strided_slice %1 {offsets = [0, 0], sizes = [16, 1], strides = [1, 1]} : vector<16x512xbf16> to vector<16x1xbf16>
    %82 = tpu.concatenate %80, %81 in 1 : vector<16x511xbf16>, vector<16x1xbf16> -> vector<16x512xbf16>
    %c14 = arith.constant 14 : index
    %c0_16 = arith.constant 0 : index
    %83 = vector.load %arg3[%c14, %c0_16] : memref<27x512xbf16, #tpu.memory_space<vmem>>, vector<1x512xbf16>
    %84 = vector.broadcast %83 : vector<1x512xbf16> to vector<16x512xbf16>
    %85 = arith.mulf %82, %84 : vector<16x512xbf16>
    %86 = vector.extract_strided_slice %1 {offsets = [0, 7], sizes = [16, 505], strides = [1, 1]} : vector<16x512xbf16> to vector<16x505xbf16>
    %87 = vector.extract_strided_slice %1 {offsets = [0, 0], sizes = [16, 7], strides = [1, 1]} : vector<16x512xbf16> to vector<16x7xbf16>
    %88 = tpu.concatenate %86, %87 in 1 : vector<16x505xbf16>, vector<16x7xbf16> -> vector<16x512xbf16>
    %c15 = arith.constant 15 : index
    %c0_17 = arith.constant 0 : index
    %89 = vector.load %arg3[%c15, %c0_17] : memref<27x512xbf16, #tpu.memory_space<vmem>>, vector<1x512xbf16>
    %90 = vector.broadcast %89 : vector<1x512xbf16> to vector<16x512xbf16>
    %91 = arith.mulf %88, %90 : vector<16x512xbf16>
    %92 = vector.extract_strided_slice %1 {offsets = [0, 8], sizes = [16, 504], strides = [1, 1]} : vector<16x512xbf16> to vector<16x504xbf16>
    %93 = vector.extract_strided_slice %1 {offsets = [0, 0], sizes = [16, 8], strides = [1, 1]} : vector<16x512xbf16> to vector<16x8xbf16>
    %94 = tpu.concatenate %92, %93 in 1 : vector<16x504xbf16>, vector<16x8xbf16> -> vector<16x512xbf16>
    %c16 = arith.constant 16 : index
    %c0_18 = arith.constant 0 : index
    %95 = vector.load %arg3[%c16, %c0_18] : memref<27x512xbf16, #tpu.memory_space<vmem>>, vector<1x512xbf16>
    %96 = vector.broadcast %95 : vector<1x512xbf16> to vector<16x512xbf16>
    %97 = arith.mulf %94, %96 : vector<16x512xbf16>
    %98 = vector.extract_strided_slice %1 {offsets = [0, 9], sizes = [16, 503], strides = [1, 1]} : vector<16x512xbf16> to vector<16x503xbf16>
    %99 = vector.extract_strided_slice %1 {offsets = [0, 0], sizes = [16, 9], strides = [1, 1]} : vector<16x512xbf16> to vector<16x9xbf16>
    %100 = tpu.concatenate %98, %99 in 1 : vector<16x503xbf16>, vector<16x9xbf16> -> vector<16x512xbf16>
    %c17 = arith.constant 17 : index
    %c0_19 = arith.constant 0 : index
    %101 = vector.load %arg3[%c17, %c0_19] : memref<27x512xbf16, #tpu.memory_space<vmem>>, vector<1x512xbf16>
    %102 = vector.broadcast %101 : vector<1x512xbf16> to vector<16x512xbf16>
    %103 = arith.mulf %100, %102 : vector<16x512xbf16>
    %104 = vector.extract_strided_slice %1 {offsets = [0, 55], sizes = [16, 457], strides = [1, 1]} : vector<16x512xbf16> to vector<16x457xbf16>
    %105 = vector.extract_strided_slice %1 {offsets = [0, 0], sizes = [16, 55], strides = [1, 1]} : vector<16x512xbf16> to vector<16x55xbf16>
    %106 = tpu.concatenate %104, %105 in 1 : vector<16x457xbf16>, vector<16x55xbf16> -> vector<16x512xbf16>
    %c18 = arith.constant 18 : index
    %c0_20 = arith.constant 0 : index
    %107 = vector.load %arg3[%c18, %c0_20] : memref<27x512xbf16, #tpu.memory_space<vmem>>, vector<1x512xbf16>
    %108 = vector.broadcast %107 : vector<1x512xbf16> to vector<16x512xbf16>
    %109 = arith.mulf %106, %108 : vector<16x512xbf16>
    %110 = vector.extract_strided_slice %1 {offsets = [0, 56], sizes = [16, 456], strides = [1, 1]} : vector<16x512xbf16> to vector<16x456xbf16>
    %111 = vector.extract_strided_slice %1 {offsets = [0, 0], sizes = [16, 56], strides = [1, 1]} : vector<16x512xbf16> to vector<16x56xbf16>
    %112 = tpu.concatenate %110, %111 in 1 : vector<16x456xbf16>, vector<16x56xbf16> -> vector<16x512xbf16>
    %c19 = arith.constant 19 : index
    %c0_21 = arith.constant 0 : index
    %113 = vector.load %arg3[%c19, %c0_21] : memref<27x512xbf16, #tpu.memory_space<vmem>>, vector<1x512xbf16>
    %114 = vector.broadcast %113 : vector<1x512xbf16> to vector<16x512xbf16>
    %115 = arith.mulf %112, %114 : vector<16x512xbf16>
    %116 = vector.extract_strided_slice %1 {offsets = [0, 57], sizes = [16, 455], strides = [1, 1]} : vector<16x512xbf16> to vector<16x455xbf16>
    %117 = vector.extract_strided_slice %1 {offsets = [0, 0], sizes = [16, 57], strides = [1, 1]} : vector<16x512xbf16> to vector<16x57xbf16>
    %118 = tpu.concatenate %116, %117 in 1 : vector<16x455xbf16>, vector<16x57xbf16> -> vector<16x512xbf16>
    %c20 = arith.constant 20 : index
    %c0_22 = arith.constant 0 : index
    %119 = vector.load %arg3[%c20, %c0_22] : memref<27x512xbf16, #tpu.memory_space<vmem>>, vector<1x512xbf16>
    %120 = vector.broadcast %119 : vector<1x512xbf16> to vector<16x512xbf16>
    %121 = arith.mulf %118, %120 : vector<16x512xbf16>
    %122 = vector.extract_strided_slice %1 {offsets = [0, 63], sizes = [16, 449], strides = [1, 1]} : vector<16x512xbf16> to vector<16x449xbf16>
    %123 = vector.extract_strided_slice %1 {offsets = [0, 0], sizes = [16, 63], strides = [1, 1]} : vector<16x512xbf16> to vector<16x63xbf16>
    %124 = tpu.concatenate %122, %123 in 1 : vector<16x449xbf16>, vector<16x63xbf16> -> vector<16x512xbf16>
    %c21 = arith.constant 21 : index
    %c0_23 = arith.constant 0 : index
    %125 = vector.load %arg3[%c21, %c0_23] : memref<27x512xbf16, #tpu.memory_space<vmem>>, vector<1x512xbf16>
    %126 = vector.broadcast %125 : vector<1x512xbf16> to vector<16x512xbf16>
    %127 = arith.mulf %124, %126 : vector<16x512xbf16>
    %128 = vector.extract_strided_slice %1 {offsets = [0, 64], sizes = [16, 448], strides = [1, 1]} : vector<16x512xbf16> to vector<16x448xbf16>
    %129 = vector.extract_strided_slice %1 {offsets = [0, 0], sizes = [16, 64], strides = [1, 1]} : vector<16x512xbf16> to vector<16x64xbf16>
    %130 = tpu.concatenate %128, %129 in 1 : vector<16x448xbf16>, vector<16x64xbf16> -> vector<16x512xbf16>
    %c22 = arith.constant 22 : index
    %c0_24 = arith.constant 0 : index
    %131 = vector.load %arg3[%c22, %c0_24] : memref<27x512xbf16, #tpu.memory_space<vmem>>, vector<1x512xbf16>
    %132 = vector.broadcast %131 : vector<1x512xbf16> to vector<16x512xbf16>
    %133 = arith.mulf %130, %132 : vector<16x512xbf16>
    %134 = vector.extract_strided_slice %1 {offsets = [0, 65], sizes = [16, 447], strides = [1, 1]} : vector<16x512xbf16> to vector<16x447xbf16>
    %135 = vector.extract_strided_slice %1 {offsets = [0, 0], sizes = [16, 65], strides = [1, 1]} : vector<16x512xbf16> to vector<16x65xbf16>
    %136 = tpu.concatenate %134, %135 in 1 : vector<16x447xbf16>, vector<16x65xbf16> -> vector<16x512xbf16>
    %c23 = arith.constant 23 : index
    %c0_25 = arith.constant 0 : index
    %137 = vector.load %arg3[%c23, %c0_25] : memref<27x512xbf16, #tpu.memory_space<vmem>>, vector<1x512xbf16>
    %138 = vector.broadcast %137 : vector<1x512xbf16> to vector<16x512xbf16>
    %139 = arith.mulf %136, %138 : vector<16x512xbf16>
    %140 = vector.extract_strided_slice %1 {offsets = [0, 71], sizes = [16, 441], strides = [1, 1]} : vector<16x512xbf16> to vector<16x441xbf16>
    %141 = vector.extract_strided_slice %1 {offsets = [0, 0], sizes = [16, 71], strides = [1, 1]} : vector<16x512xbf16> to vector<16x71xbf16>
    %142 = tpu.concatenate %140, %141 in 1 : vector<16x441xbf16>, vector<16x71xbf16> -> vector<16x512xbf16>
    %c24 = arith.constant 24 : index
    %c0_26 = arith.constant 0 : index
    %143 = vector.load %arg3[%c24, %c0_26] : memref<27x512xbf16, #tpu.memory_space<vmem>>, vector<1x512xbf16>
    %144 = vector.broadcast %143 : vector<1x512xbf16> to vector<16x512xbf16>
    %145 = arith.mulf %142, %144 : vector<16x512xbf16>
    %146 = vector.extract_strided_slice %1 {offsets = [0, 72], sizes = [16, 440], strides = [1, 1]} : vector<16x512xbf16> to vector<16x440xbf16>
    %147 = vector.extract_strided_slice %1 {offsets = [0, 0], sizes = [16, 72], strides = [1, 1]} : vector<16x512xbf16> to vector<16x72xbf16>
    %148 = tpu.concatenate %146, %147 in 1 : vector<16x440xbf16>, vector<16x72xbf16> -> vector<16x512xbf16>
    %c25 = arith.constant 25 : index
    %c0_27 = arith.constant 0 : index
    %149 = vector.load %arg3[%c25, %c0_27] : memref<27x512xbf16, #tpu.memory_space<vmem>>, vector<1x512xbf16>
    %150 = vector.broadcast %149 : vector<1x512xbf16> to vector<16x512xbf16>
    %151 = arith.mulf %148, %150 : vector<16x512xbf16>
    %152 = vector.extract_strided_slice %1 {offsets = [0, 73], sizes = [16, 439], strides = [1, 1]} : vector<16x512xbf16> to vector<16x439xbf16>
    %153 = vector.extract_strided_slice %1 {offsets = [0, 0], sizes = [16, 73], strides = [1, 1]} : vector<16x512xbf16> to vector<16x73xbf16>
    %154 = tpu.concatenate %152, %153 in 1 : vector<16x439xbf16>, vector<16x73xbf16> -> vector<16x512xbf16>
    %c26 = arith.constant 26 : index
    %c0_28 = arith.constant 0 : index
    %155 = vector.load %arg3[%c26, %c0_28] : memref<27x512xbf16, #tpu.memory_space<vmem>>, vector<1x512xbf16>
    %156 = vector.broadcast %155 : vector<1x512xbf16> to vector<16x512xbf16>
    %157 = arith.mulf %154, %156 : vector<16x512xbf16>
    %cst = arith.constant 0.000000e+00 : bf16
    %158 = vector.broadcast %cst : bf16 to vector<80x512xbf16>
    %159 = tpu.concatenate %7, %13, %19, %25, %31, %37, %43, %49, %55, %61, %67, %73, %79, %1, %85, %91 in 0 : vector<16x512xbf16>, vector<16x512xbf16>, vector<16x512xbf16>, vector<16x512xbf16>, vector<16x512xbf16>, vector<16x512xbf16>, vector<16x512xbf16>, vector<16x512xbf16>, vector<16x512xbf16>, vector<16x512xbf16>, vector<16x512xbf16>, vector<16x512xbf16>, vector<16x512xbf16>, vector<16x512xbf16>, vector<16x512xbf16>, vector<16x512xbf16> -> vector<256x512xbf16>
    %160 = tpu.concatenate %97, %103, %109, %115, %121, %127, %133, %139, %145, %151, %157, %158 in 0 : vector<16x512xbf16>, vector<16x512xbf16>, vector<16x512xbf16>, vector<16x512xbf16>, vector<16x512xbf16>, vector<16x512xbf16>, vector<16x512xbf16>, vector<16x512xbf16>, vector<16x512xbf16>, vector<16x512xbf16>, vector<16x512xbf16>, vector<80x512xbf16> -> vector<256x512xbf16>
    %161 = tpu.concatenate %159, %160 in 0 : vector<256x512xbf16>, vector<256x512xbf16> -> vector<512x512xbf16>
    %c0_29 = arith.constant 0 : index
    %c0_30 = arith.constant 0 : index
    %162 = vector.load %arg2[%c0_29, %c0_30] : memref<32x512xbf16, #tpu.memory_space<vmem>>, vector<32x512xbf16>
    %cst_31 = arith.constant dense<0.000000e+00> : vector<32x512xf32>
    %163 = tpu.matmul %162, %161, %cst_31 {dimension_numbers = #tpu.dot_dimension_numbers<[1], [0], [0], [1], [0, 0, 1, 1], [], []>} : vector<32x512xbf16>, vector<512x512xbf16>, vector<32x512xf32> -> vector<32x512xf32>
    %c0_32 = arith.constant 0 : index
    %c0_33 = arith.constant 0 : index
    %164 = vector.load %arg4[%c0_32, %c0_33] : memref<32x1xf32, #tpu.memory_space<vmem>>, vector<32x1xf32>
    %165 = vector.broadcast %164 : vector<32x1xf32> to vector<32x512xf32>
    %166 = arith.mulf %163, %165 : vector<32x512xf32>
    %c0_34 = arith.constant 0 : index
    %c0_35 = arith.constant 0 : index
    %167 = vector.load %arg5[%c0_34, %c0_35] : memref<32x1xf32, #tpu.memory_space<vmem>>, vector<32x1xf32>
    %168 = vector.broadcast %167 : vector<32x1xf32> to vector<32x512xf32>
    %169 = arith.addf %166, %168 : vector<32x512xf32>
    %170 = vector.extract_strided_slice %169 {offsets = [0, 1], sizes = [32, 511], strides = [1, 1]} : vector<32x512xf32> to vector<32x511xf32>
    %171 = vector.extract_strided_slice %169 {offsets = [0, 0], sizes = [32, 1], strides = [1, 1]} : vector<32x512xf32> to vector<32x1xf32>
    %172 = tpu.concatenate %170, %171 in 1 : vector<32x511xf32>, vector<32x1xf32> -> vector<32x512xf32>
    %173 = arith.maximumf %169, %172 : vector<32x512xf32>
    %174 = vector.extract_strided_slice %173 {offsets = [0, 8], sizes = [32, 504], strides = [1, 1]} : vector<32x512xf32> to vector<32x504xf32>
    %175 = vector.extract_strided_slice %173 {offsets = [0, 0], sizes = [32, 8], strides = [1, 1]} : vector<32x512xf32> to vector<32x8xf32>
    %176 = tpu.concatenate %174, %175 in 1 : vector<32x504xf32>, vector<32x8xf32> -> vector<32x512xf32>
    %177 = arith.maximumf %173, %176 : vector<32x512xf32>
    %178 = vector.extract_strided_slice %177 {offsets = [0, 64], sizes = [32, 448], strides = [1, 1]} : vector<32x512xf32> to vector<32x448xf32>
    %179 = vector.extract_strided_slice %177 {offsets = [0, 0], sizes = [32, 64], strides = [1, 1]} : vector<32x512xf32> to vector<32x64xf32>
    %180 = tpu.concatenate %178, %179 in 1 : vector<32x448xf32>, vector<32x64xf32> -> vector<32x512xf32>
    %181 = arith.maximumf %177, %180 : vector<32x512xf32>
    %182 = arith.truncf %181 : vector<32x512xf32> to vector<32x512xbf16>
    %c0_36 = arith.constant 0 : index
    %c0_37 = arith.constant 0 : index
    %183 = vector.load %arg6[%c0_36, %c0_37] : memref<512x64xbf16, #tpu.memory_space<vmem>>, vector<512x64xbf16>
    %cst_38 = arith.constant dense<0.000000e+00> : vector<32x64xf32>
    %184 = tpu.matmul %182, %183, %cst_38 {dimension_numbers = #tpu.dot_dimension_numbers<[1], [0], [0], [1], [0, 0, 1, 1], [], []>} : vector<32x512xbf16>, vector<512x64xbf16>, vector<32x64xf32> -> vector<32x64xf32>
    %cst_39 = arith.constant 0.000000e+00 : f32
    %185 = vector.broadcast %cst_39 : f32 to vector<32x64xf32>
    %186 = arith.maximumf %184, %185 : vector<32x64xf32>
    %187 = arith.truncf %186 : vector<32x64xf32> to vector<32x64xbf16>
    %188 = vector.extract_strided_slice %187 {offsets = [0, 43], sizes = [32, 21], strides = [1, 1]} : vector<32x64xbf16> to vector<32x21xbf16>
    %189 = vector.extract_strided_slice %187 {offsets = [0, 0], sizes = [32, 43], strides = [1, 1]} : vector<32x64xbf16> to vector<32x43xbf16>
    %190 = tpu.concatenate %188, %189 in 1 : vector<32x21xbf16>, vector<32x43xbf16> -> vector<32x64xbf16>
    %c0_40 = arith.constant 0 : index
    %c0_41 = arith.constant 0 : index
    %191 = vector.load %arg8[%c0_40, %c0_41] : memref<27x64xbf16, #tpu.memory_space<vmem>>, vector<1x64xbf16>
    %192 = vector.broadcast %191 : vector<1x64xbf16> to vector<32x64xbf16>
    %193 = arith.mulf %190, %192 : vector<32x64xbf16>
    %194 = vector.extract_strided_slice %187 {offsets = [0, 44], sizes = [32, 20], strides = [1, 1]} : vector<32x64xbf16> to vector<32x20xbf16>
    %195 = vector.extract_strided_slice %187 {offsets = [0, 0], sizes = [32, 44], strides = [1, 1]} : vector<32x64xbf16> to vector<32x44xbf16>
    %196 = tpu.concatenate %194, %195 in 1 : vector<32x20xbf16>, vector<32x44xbf16> -> vector<32x64xbf16>
    %c1_42 = arith.constant 1 : index
    %c0_43 = arith.constant 0 : index
    %197 = vector.load %arg8[%c1_42, %c0_43] : memref<27x64xbf16, #tpu.memory_space<vmem>>, vector<1x64xbf16>
    %198 = vector.broadcast %197 : vector<1x64xbf16> to vector<32x64xbf16>
    %199 = arith.mulf %196, %198 : vector<32x64xbf16>
    %200 = vector.extract_strided_slice %187 {offsets = [0, 45], sizes = [32, 19], strides = [1, 1]} : vector<32x64xbf16> to vector<32x19xbf16>
    %201 = vector.extract_strided_slice %187 {offsets = [0, 0], sizes = [32, 45], strides = [1, 1]} : vector<32x64xbf16> to vector<32x45xbf16>
    %202 = tpu.concatenate %200, %201 in 1 : vector<32x19xbf16>, vector<32x45xbf16> -> vector<32x64xbf16>
    %c2_44 = arith.constant 2 : index
    %c0_45 = arith.constant 0 : index
    %203 = vector.load %arg8[%c2_44, %c0_45] : memref<27x64xbf16, #tpu.memory_space<vmem>>, vector<1x64xbf16>
    %204 = vector.broadcast %203 : vector<1x64xbf16> to vector<32x64xbf16>
    %205 = arith.mulf %202, %204 : vector<32x64xbf16>
    %206 = vector.extract_strided_slice %187 {offsets = [0, 47], sizes = [32, 17], strides = [1, 1]} : vector<32x64xbf16> to vector<32x17xbf16>
    %207 = vector.extract_strided_slice %187 {offsets = [0, 0], sizes = [32, 47], strides = [1, 1]} : vector<32x64xbf16> to vector<32x47xbf16>
    %208 = tpu.concatenate %206, %207 in 1 : vector<32x17xbf16>, vector<32x47xbf16> -> vector<32x64xbf16>
    %c3_46 = arith.constant 3 : index
    %c0_47 = arith.constant 0 : index
    %209 = vector.load %arg8[%c3_46, %c0_47] : memref<27x64xbf16, #tpu.memory_space<vmem>>, vector<1x64xbf16>
    %210 = vector.broadcast %209 : vector<1x64xbf16> to vector<32x64xbf16>
    %211 = arith.mulf %208, %210 : vector<32x64xbf16>
    %212 = vector.extract_strided_slice %187 {offsets = [0, 48], sizes = [32, 16], strides = [1, 1]} : vector<32x64xbf16> to vector<32x16xbf16>
    %213 = vector.extract_strided_slice %187 {offsets = [0, 0], sizes = [32, 48], strides = [1, 1]} : vector<32x64xbf16> to vector<32x48xbf16>
    %214 = tpu.concatenate %212, %213 in 1 : vector<32x16xbf16>, vector<32x48xbf16> -> vector<32x64xbf16>
    %c4_48 = arith.constant 4 : index
    %c0_49 = arith.constant 0 : index
    %215 = vector.load %arg8[%c4_48, %c0_49] : memref<27x64xbf16, #tpu.memory_space<vmem>>, vector<1x64xbf16>
    %216 = vector.broadcast %215 : vector<1x64xbf16> to vector<32x64xbf16>
    %217 = arith.mulf %214, %216 : vector<32x64xbf16>
    %218 = vector.extract_strided_slice %187 {offsets = [0, 49], sizes = [32, 15], strides = [1, 1]} : vector<32x64xbf16> to vector<32x15xbf16>
    %219 = vector.extract_strided_slice %187 {offsets = [0, 0], sizes = [32, 49], strides = [1, 1]} : vector<32x64xbf16> to vector<32x49xbf16>
    %220 = tpu.concatenate %218, %219 in 1 : vector<32x15xbf16>, vector<32x49xbf16> -> vector<32x64xbf16>
    %c5_50 = arith.constant 5 : index
    %c0_51 = arith.constant 0 : index
    %221 = vector.load %arg8[%c5_50, %c0_51] : memref<27x64xbf16, #tpu.memory_space<vmem>>, vector<1x64xbf16>
    %222 = vector.broadcast %221 : vector<1x64xbf16> to vector<32x64xbf16>
    %223 = arith.mulf %220, %222 : vector<32x64xbf16>
    %224 = vector.extract_strided_slice %187 {offsets = [0, 51], sizes = [32, 13], strides = [1, 1]} : vector<32x64xbf16> to vector<32x13xbf16>
    %225 = vector.extract_strided_slice %187 {offsets = [0, 0], sizes = [32, 51], strides = [1, 1]} : vector<32x64xbf16> to vector<32x51xbf16>
    %226 = tpu.concatenate %224, %225 in 1 : vector<32x13xbf16>, vector<32x51xbf16> -> vector<32x64xbf16>
    %c6_52 = arith.constant 6 : index
    %c0_53 = arith.constant 0 : index
    %227 = vector.load %arg8[%c6_52, %c0_53] : memref<27x64xbf16, #tpu.memory_space<vmem>>, vector<1x64xbf16>
    %228 = vector.broadcast %227 : vector<1x64xbf16> to vector<32x64xbf16>
    %229 = arith.mulf %226, %228 : vector<32x64xbf16>
    %230 = vector.extract_strided_slice %187 {offsets = [0, 52], sizes = [32, 12], strides = [1, 1]} : vector<32x64xbf16> to vector<32x12xbf16>
    %231 = vector.extract_strided_slice %187 {offsets = [0, 0], sizes = [32, 52], strides = [1, 1]} : vector<32x64xbf16> to vector<32x52xbf16>
    %232 = tpu.concatenate %230, %231 in 1 : vector<32x12xbf16>, vector<32x52xbf16> -> vector<32x64xbf16>
    %c7_54 = arith.constant 7 : index
    %c0_55 = arith.constant 0 : index
    %233 = vector.load %arg8[%c7_54, %c0_55] : memref<27x64xbf16, #tpu.memory_space<vmem>>, vector<1x64xbf16>
    %234 = vector.broadcast %233 : vector<1x64xbf16> to vector<32x64xbf16>
    %235 = arith.mulf %232, %234 : vector<32x64xbf16>
    %236 = vector.extract_strided_slice %187 {offsets = [0, 53], sizes = [32, 11], strides = [1, 1]} : vector<32x64xbf16> to vector<32x11xbf16>
    %237 = vector.extract_strided_slice %187 {offsets = [0, 0], sizes = [32, 53], strides = [1, 1]} : vector<32x64xbf16> to vector<32x53xbf16>
    %238 = tpu.concatenate %236, %237 in 1 : vector<32x11xbf16>, vector<32x53xbf16> -> vector<32x64xbf16>
    %c8_56 = arith.constant 8 : index
    %c0_57 = arith.constant 0 : index
    %239 = vector.load %arg8[%c8_56, %c0_57] : memref<27x64xbf16, #tpu.memory_space<vmem>>, vector<1x64xbf16>
    %240 = vector.broadcast %239 : vector<1x64xbf16> to vector<32x64xbf16>
    %241 = arith.mulf %238, %240 : vector<32x64xbf16>
    %242 = vector.extract_strided_slice %187 {offsets = [0, 59], sizes = [32, 5], strides = [1, 1]} : vector<32x64xbf16> to vector<32x5xbf16>
    %243 = vector.extract_strided_slice %187 {offsets = [0, 0], sizes = [32, 59], strides = [1, 1]} : vector<32x64xbf16> to vector<32x59xbf16>
    %244 = tpu.concatenate %242, %243 in 1 : vector<32x5xbf16>, vector<32x59xbf16> -> vector<32x64xbf16>
    %c9_58 = arith.constant 9 : index
    %c0_59 = arith.constant 0 : index
    %245 = vector.load %arg8[%c9_58, %c0_59] : memref<27x64xbf16, #tpu.memory_space<vmem>>, vector<1x64xbf16>
    %246 = vector.broadcast %245 : vector<1x64xbf16> to vector<32x64xbf16>
    %247 = arith.mulf %244, %246 : vector<32x64xbf16>
    %248 = vector.extract_strided_slice %187 {offsets = [0, 60], sizes = [32, 4], strides = [1, 1]} : vector<32x64xbf16> to vector<32x4xbf16>
    %249 = vector.extract_strided_slice %187 {offsets = [0, 0], sizes = [32, 60], strides = [1, 1]} : vector<32x64xbf16> to vector<32x60xbf16>
    %250 = tpu.concatenate %248, %249 in 1 : vector<32x4xbf16>, vector<32x60xbf16> -> vector<32x64xbf16>
    %c10_60 = arith.constant 10 : index
    %c0_61 = arith.constant 0 : index
    %251 = vector.load %arg8[%c10_60, %c0_61] : memref<27x64xbf16, #tpu.memory_space<vmem>>, vector<1x64xbf16>
    %252 = vector.broadcast %251 : vector<1x64xbf16> to vector<32x64xbf16>
    %253 = arith.mulf %250, %252 : vector<32x64xbf16>
    %254 = vector.extract_strided_slice %187 {offsets = [0, 61], sizes = [32, 3], strides = [1, 1]} : vector<32x64xbf16> to vector<32x3xbf16>
    %255 = vector.extract_strided_slice %187 {offsets = [0, 0], sizes = [32, 61], strides = [1, 1]} : vector<32x64xbf16> to vector<32x61xbf16>
    %256 = tpu.concatenate %254, %255 in 1 : vector<32x3xbf16>, vector<32x61xbf16> -> vector<32x64xbf16>
    %c11_62 = arith.constant 11 : index
    %c0_63 = arith.constant 0 : index
    %257 = vector.load %arg8[%c11_62, %c0_63] : memref<27x64xbf16, #tpu.memory_space<vmem>>, vector<1x64xbf16>
    %258 = vector.broadcast %257 : vector<1x64xbf16> to vector<32x64xbf16>
    %259 = arith.mulf %256, %258 : vector<32x64xbf16>
    %260 = vector.extract_strided_slice %187 {offsets = [0, 63], sizes = [32, 1], strides = [1, 1]} : vector<32x64xbf16> to vector<32x1xbf16>
    %261 = vector.extract_strided_slice %187 {offsets = [0, 0], sizes = [32, 63], strides = [1, 1]} : vector<32x64xbf16> to vector<32x63xbf16>
    %262 = tpu.concatenate %260, %261 in 1 : vector<32x1xbf16>, vector<32x63xbf16> -> vector<32x64xbf16>
    %c12_64 = arith.constant 12 : index
    %c0_65 = arith.constant 0 : index
    %263 = vector.load %arg8[%c12_64, %c0_65] : memref<27x64xbf16, #tpu.memory_space<vmem>>, vector<1x64xbf16>
    %264 = vector.broadcast %263 : vector<1x64xbf16> to vector<32x64xbf16>
    %265 = arith.mulf %262, %264 : vector<32x64xbf16>
    %266 = vector.extract_strided_slice %187 {offsets = [0, 1], sizes = [32, 63], strides = [1, 1]} : vector<32x64xbf16> to vector<32x63xbf16>
    %267 = vector.extract_strided_slice %187 {offsets = [0, 0], sizes = [32, 1], strides = [1, 1]} : vector<32x64xbf16> to vector<32x1xbf16>
    %268 = tpu.concatenate %266, %267 in 1 : vector<32x63xbf16>, vector<32x1xbf16> -> vector<32x64xbf16>
    %c14_66 = arith.constant 14 : index
    %c0_67 = arith.constant 0 : index
    %269 = vector.load %arg8[%c14_66, %c0_67] : memref<27x64xbf16, #tpu.memory_space<vmem>>, vector<1x64xbf16>
    %270 = vector.broadcast %269 : vector<1x64xbf16> to vector<32x64xbf16>
    %271 = arith.mulf %268, %270 : vector<32x64xbf16>
    %272 = vector.extract_strided_slice %187 {offsets = [0, 3], sizes = [32, 61], strides = [1, 1]} : vector<32x64xbf16> to vector<32x61xbf16>
    %273 = vector.extract_strided_slice %187 {offsets = [0, 0], sizes = [32, 3], strides = [1, 1]} : vector<32x64xbf16> to vector<32x3xbf16>
    %274 = tpu.concatenate %272, %273 in 1 : vector<32x61xbf16>, vector<32x3xbf16> -> vector<32x64xbf16>
    %c15_68 = arith.constant 15 : index
    %c0_69 = arith.constant 0 : index
    %275 = vector.load %arg8[%c15_68, %c0_69] : memref<27x64xbf16, #tpu.memory_space<vmem>>, vector<1x64xbf16>
    %276 = vector.broadcast %275 : vector<1x64xbf16> to vector<32x64xbf16>
    %277 = arith.mulf %274, %276 : vector<32x64xbf16>
    %278 = vector.extract_strided_slice %187 {offsets = [0, 4], sizes = [32, 60], strides = [1, 1]} : vector<32x64xbf16> to vector<32x60xbf16>
    %279 = vector.extract_strided_slice %187 {offsets = [0, 0], sizes = [32, 4], strides = [1, 1]} : vector<32x64xbf16> to vector<32x4xbf16>
    %280 = tpu.concatenate %278, %279 in 1 : vector<32x60xbf16>, vector<32x4xbf16> -> vector<32x64xbf16>
    %c16_70 = arith.constant 16 : index
    %c0_71 = arith.constant 0 : index
    %281 = vector.load %arg8[%c16_70, %c0_71] : memref<27x64xbf16, #tpu.memory_space<vmem>>, vector<1x64xbf16>
    %282 = vector.broadcast %281 : vector<1x64xbf16> to vector<32x64xbf16>
    %283 = arith.mulf %280, %282 : vector<32x64xbf16>
    %284 = vector.extract_strided_slice %187 {offsets = [0, 5], sizes = [32, 59], strides = [1, 1]} : vector<32x64xbf16> to vector<32x59xbf16>
    %285 = vector.extract_strided_slice %187 {offsets = [0, 0], sizes = [32, 5], strides = [1, 1]} : vector<32x64xbf16> to vector<32x5xbf16>
    %286 = tpu.concatenate %284, %285 in 1 : vector<32x59xbf16>, vector<32x5xbf16> -> vector<32x64xbf16>
    %c17_72 = arith.constant 17 : index
    %c0_73 = arith.constant 0 : index
    %287 = vector.load %arg8[%c17_72, %c0_73] : memref<27x64xbf16, #tpu.memory_space<vmem>>, vector<1x64xbf16>
    %288 = vector.broadcast %287 : vector<1x64xbf16> to vector<32x64xbf16>
    %289 = arith.mulf %286, %288 : vector<32x64xbf16>
    %290 = vector.extract_strided_slice %187 {offsets = [0, 11], sizes = [32, 53], strides = [1, 1]} : vector<32x64xbf16> to vector<32x53xbf16>
    %291 = vector.extract_strided_slice %187 {offsets = [0, 0], sizes = [32, 11], strides = [1, 1]} : vector<32x64xbf16> to vector<32x11xbf16>
    %292 = tpu.concatenate %290, %291 in 1 : vector<32x53xbf16>, vector<32x11xbf16> -> vector<32x64xbf16>
    %c18_74 = arith.constant 18 : index
    %c0_75 = arith.constant 0 : index
    %293 = vector.load %arg8[%c18_74, %c0_75] : memref<27x64xbf16, #tpu.memory_space<vmem>>, vector<1x64xbf16>
    %294 = vector.broadcast %293 : vector<1x64xbf16> to vector<32x64xbf16>
    %295 = arith.mulf %292, %294 : vector<32x64xbf16>
    %296 = vector.extract_strided_slice %187 {offsets = [0, 12], sizes = [32, 52], strides = [1, 1]} : vector<32x64xbf16> to vector<32x52xbf16>
    %297 = vector.extract_strided_slice %187 {offsets = [0, 0], sizes = [32, 12], strides = [1, 1]} : vector<32x64xbf16> to vector<32x12xbf16>
    %298 = tpu.concatenate %296, %297 in 1 : vector<32x52xbf16>, vector<32x12xbf16> -> vector<32x64xbf16>
    %c19_76 = arith.constant 19 : index
    %c0_77 = arith.constant 0 : index
    %299 = vector.load %arg8[%c19_76, %c0_77] : memref<27x64xbf16, #tpu.memory_space<vmem>>, vector<1x64xbf16>
    %300 = vector.broadcast %299 : vector<1x64xbf16> to vector<32x64xbf16>
    %301 = arith.mulf %298, %300 : vector<32x64xbf16>
    %302 = vector.extract_strided_slice %187 {offsets = [0, 13], sizes = [32, 51], strides = [1, 1]} : vector<32x64xbf16> to vector<32x51xbf16>
    %303 = vector.extract_strided_slice %187 {offsets = [0, 0], sizes = [32, 13], strides = [1, 1]} : vector<32x64xbf16> to vector<32x13xbf16>
    %304 = tpu.concatenate %302, %303 in 1 : vector<32x51xbf16>, vector<32x13xbf16> -> vector<32x64xbf16>
    %c20_78 = arith.constant 20 : index
    %c0_79 = arith.constant 0 : index
    %305 = vector.load %arg8[%c20_78, %c0_79] : memref<27x64xbf16, #tpu.memory_space<vmem>>, vector<1x64xbf16>
    %306 = vector.broadcast %305 : vector<1x64xbf16> to vector<32x64xbf16>
    %307 = arith.mulf %304, %306 : vector<32x64xbf16>
    %308 = vector.extract_strided_slice %187 {offsets = [0, 15], sizes = [32, 49], strides = [1, 1]} : vector<32x64xbf16> to vector<32x49xbf16>
    %309 = vector.extract_strided_slice %187 {offsets = [0, 0], sizes = [32, 15], strides = [1, 1]} : vector<32x64xbf16> to vector<32x15xbf16>
    %310 = tpu.concatenate %308, %309 in 1 : vector<32x49xbf16>, vector<32x15xbf16> -> vector<32x64xbf16>
    %c21_80 = arith.constant 21 : index
    %c0_81 = arith.constant 0 : index
    %311 = vector.load %arg8[%c21_80, %c0_81] : memref<27x64xbf16, #tpu.memory_space<vmem>>, vector<1x64xbf16>
    %312 = vector.broadcast %311 : vector<1x64xbf16> to vector<32x64xbf16>
    %313 = arith.mulf %310, %312 : vector<32x64xbf16>
    %314 = vector.extract_strided_slice %187 {offsets = [0, 16], sizes = [32, 48], strides = [1, 1]} : vector<32x64xbf16> to vector<32x48xbf16>
    %315 = vector.extract_strided_slice %187 {offsets = [0, 0], sizes = [32, 16], strides = [1, 1]} : vector<32x64xbf16> to vector<32x16xbf16>
    %316 = tpu.concatenate %314, %315 in 1 : vector<32x48xbf16>, vector<32x16xbf16> -> vector<32x64xbf16>
    %c22_82 = arith.constant 22 : index
    %c0_83 = arith.constant 0 : index
    %317 = vector.load %arg8[%c22_82, %c0_83] : memref<27x64xbf16, #tpu.memory_space<vmem>>, vector<1x64xbf16>
    %318 = vector.broadcast %317 : vector<1x64xbf16> to vector<32x64xbf16>
    %319 = arith.mulf %316, %318 : vector<32x64xbf16>
    %320 = vector.extract_strided_slice %187 {offsets = [0, 17], sizes = [32, 47], strides = [1, 1]} : vector<32x64xbf16> to vector<32x47xbf16>
    %321 = vector.extract_strided_slice %187 {offsets = [0, 0], sizes = [32, 17], strides = [1, 1]} : vector<32x64xbf16> to vector<32x17xbf16>
    %322 = tpu.concatenate %320, %321 in 1 : vector<32x47xbf16>, vector<32x17xbf16> -> vector<32x64xbf16>
    %c23_84 = arith.constant 23 : index
    %c0_85 = arith.constant 0 : index
    %323 = vector.load %arg8[%c23_84, %c0_85] : memref<27x64xbf16, #tpu.memory_space<vmem>>, vector<1x64xbf16>
    %324 = vector.broadcast %323 : vector<1x64xbf16> to vector<32x64xbf16>
    %325 = arith.mulf %322, %324 : vector<32x64xbf16>
    %326 = vector.extract_strided_slice %187 {offsets = [0, 19], sizes = [32, 45], strides = [1, 1]} : vector<32x64xbf16> to vector<32x45xbf16>
    %327 = vector.extract_strided_slice %187 {offsets = [0, 0], sizes = [32, 19], strides = [1, 1]} : vector<32x64xbf16> to vector<32x19xbf16>
    %328 = tpu.concatenate %326, %327 in 1 : vector<32x45xbf16>, vector<32x19xbf16> -> vector<32x64xbf16>
    %c24_86 = arith.constant 24 : index
    %c0_87 = arith.constant 0 : index
    %329 = vector.load %arg8[%c24_86, %c0_87] : memref<27x64xbf16, #tpu.memory_space<vmem>>, vector<1x64xbf16>
    %330 = vector.broadcast %329 : vector<1x64xbf16> to vector<32x64xbf16>
    %331 = arith.mulf %328, %330 : vector<32x64xbf16>
    %332 = vector.extract_strided_slice %187 {offsets = [0, 20], sizes = [32, 44], strides = [1, 1]} : vector<32x64xbf16> to vector<32x44xbf16>
    %333 = vector.extract_strided_slice %187 {offsets = [0, 0], sizes = [32, 20], strides = [1, 1]} : vector<32x64xbf16> to vector<32x20xbf16>
    %334 = tpu.concatenate %332, %333 in 1 : vector<32x44xbf16>, vector<32x20xbf16> -> vector<32x64xbf16>
    %c25_88 = arith.constant 25 : index
    %c0_89 = arith.constant 0 : index
    %335 = vector.load %arg8[%c25_88, %c0_89] : memref<27x64xbf16, #tpu.memory_space<vmem>>, vector<1x64xbf16>
    %336 = vector.broadcast %335 : vector<1x64xbf16> to vector<32x64xbf16>
    %337 = arith.mulf %334, %336 : vector<32x64xbf16>
    %338 = vector.extract_strided_slice %187 {offsets = [0, 21], sizes = [32, 43], strides = [1, 1]} : vector<32x64xbf16> to vector<32x43xbf16>
    %339 = vector.extract_strided_slice %187 {offsets = [0, 0], sizes = [32, 21], strides = [1, 1]} : vector<32x64xbf16> to vector<32x21xbf16>
    %340 = tpu.concatenate %338, %339 in 1 : vector<32x43xbf16>, vector<32x21xbf16> -> vector<32x64xbf16>
    %c26_90 = arith.constant 26 : index
    %c0_91 = arith.constant 0 : index
    %341 = vector.load %arg8[%c26_90, %c0_91] : memref<27x64xbf16, #tpu.memory_space<vmem>>, vector<1x64xbf16>
    %342 = vector.broadcast %341 : vector<1x64xbf16> to vector<32x64xbf16>
    %343 = arith.mulf %340, %342 : vector<32x64xbf16>
    %cst_92 = arith.constant 0.000000e+00 : bf16
    %344 = vector.broadcast %cst_92 : bf16 to vector<32x64xbf16>
    %345 = tpu.concatenate %193, %199, %205, %211, %217, %223, %229, %235, %241, %247, %253, %259, %265, %187, %271, %277 in 0 : vector<32x64xbf16>, vector<32x64xbf16>, vector<32x64xbf16>, vector<32x64xbf16>, vector<32x64xbf16>, vector<32x64xbf16>, vector<32x64xbf16>, vector<32x64xbf16>, vector<32x64xbf16>, vector<32x64xbf16>, vector<32x64xbf16>, vector<32x64xbf16>, vector<32x64xbf16>, vector<32x64xbf16>, vector<32x64xbf16>, vector<32x64xbf16> -> vector<512x64xbf16>
    %346 = tpu.concatenate %283, %289, %295, %301, %307, %313, %319, %325, %331, %337, %343, %344 in 0 : vector<32x64xbf16>, vector<32x64xbf16>, vector<32x64xbf16>, vector<32x64xbf16>, vector<32x64xbf16>, vector<32x64xbf16>, vector<32x64xbf16>, vector<32x64xbf16>, vector<32x64xbf16>, vector<32x64xbf16>, vector<32x64xbf16>, vector<32x64xbf16> -> vector<384x64xbf16>
    %347 = tpu.concatenate %345, %346 in 0 : vector<512x64xbf16>, vector<384x64xbf16> -> vector<896x64xbf16>
    %c0_93 = arith.constant 0 : index
    %c0_94 = arith.constant 0 : index
    %348 = vector.load %arg7[%c0_93, %c0_94] : memref<32x896xbf16, #tpu.memory_space<vmem>>, vector<32x896xbf16>
    %cst_95 = arith.constant dense<0.000000e+00> : vector<32x64xf32>
    %349 = tpu.matmul %348, %347, %cst_95 {dimension_numbers = #tpu.dot_dimension_numbers<[1], [0], [0], [1], [0, 0, 1, 1], [], []>} : vector<32x896xbf16>, vector<896x64xbf16>, vector<32x64xf32> -> vector<32x64xf32>
    %c0_96 = arith.constant 0 : index
    %c0_97 = arith.constant 0 : index
    %350 = vector.load %arg9[%c0_96, %c0_97] : memref<32x1xf32, #tpu.memory_space<vmem>>, vector<32x1xf32>
    %351 = vector.broadcast %350 : vector<32x1xf32> to vector<32x64xf32>
    %352 = arith.mulf %349, %351 : vector<32x64xf32>
    %c0_98 = arith.constant 0 : index
    %c0_99 = arith.constant 0 : index
    %353 = vector.load %arg10[%c0_98, %c0_99] : memref<32x1xf32, #tpu.memory_space<vmem>>, vector<32x1xf32>
    %354 = vector.broadcast %353 : vector<32x1xf32> to vector<32x64xf32>
    %355 = arith.addf %352, %354 : vector<32x64xf32>
    %356 = vector.extract_strided_slice %355 {offsets = [0, 1], sizes = [32, 63], strides = [1, 1]} : vector<32x64xf32> to vector<32x63xf32>
    %357 = vector.extract_strided_slice %355 {offsets = [0, 0], sizes = [32, 1], strides = [1, 1]} : vector<32x64xf32> to vector<32x1xf32>
    %358 = tpu.concatenate %356, %357 in 1 : vector<32x63xf32>, vector<32x1xf32> -> vector<32x64xf32>
    %359 = arith.maximumf %355, %358 : vector<32x64xf32>
    %360 = vector.extract_strided_slice %359 {offsets = [0, 4], sizes = [32, 60], strides = [1, 1]} : vector<32x64xf32> to vector<32x60xf32>
    %361 = vector.extract_strided_slice %359 {offsets = [0, 0], sizes = [32, 4], strides = [1, 1]} : vector<32x64xf32> to vector<32x4xf32>
    %362 = tpu.concatenate %360, %361 in 1 : vector<32x60xf32>, vector<32x4xf32> -> vector<32x64xf32>
    %363 = arith.maximumf %359, %362 : vector<32x64xf32>
    %364 = vector.extract_strided_slice %363 {offsets = [0, 16], sizes = [32, 48], strides = [1, 1]} : vector<32x64xf32> to vector<32x48xf32>
    %365 = vector.extract_strided_slice %363 {offsets = [0, 0], sizes = [32, 16], strides = [1, 1]} : vector<32x64xf32> to vector<32x16xf32>
    %366 = tpu.concatenate %364, %365 in 1 : vector<32x48xf32>, vector<32x16xf32> -> vector<32x64xf32>
    %367 = arith.maximumf %363, %366 : vector<32x64xf32>
    %368 = arith.truncf %367 : vector<32x64xf32> to vector<32x64xbf16>
    %c0_100 = arith.constant 0 : index
    %c0_101 = arith.constant 0 : index
    %369 = vector.load %arg11[%c0_100, %c0_101] : memref<64x8xbf16, #tpu.memory_space<vmem>>, vector<64x8xbf16>
    %cst_102 = arith.constant dense<0.000000e+00> : vector<32x8xf32>
    %370 = tpu.matmul %368, %369, %cst_102 {dimension_numbers = #tpu.dot_dimension_numbers<[1], [0], [0], [1], [0, 0, 1, 1], [], []>} : vector<32x64xbf16>, vector<64x8xbf16>, vector<32x8xf32> -> vector<32x8xf32>
    %cst_103 = arith.constant 0.000000e+00 : f32
    %371 = vector.broadcast %cst_103 : f32 to vector<32x8xf32>
    %372 = arith.maximumf %370, %371 : vector<32x8xf32>
    %c0_104 = arith.constant 0 : index
    %c0_105 = arith.constant 0 : index
    %c0_106 = arith.constant 0 : index
    %373 = vector.load %arg12[%c0_104, %c0_105, %c0_106] : memref<1x32x8xf32, #tpu.memory_space<vmem>>, vector<1x32x8xf32>
    %374 = vector.shape_cast %373 : vector<1x32x8xf32> to vector<32x8xf32>
    %375 = vector.shape_cast %372 : vector<32x8xf32> to vector<1x32x8xf32>
    tpu.vector_store %arg12[%c0_104, %c0_105, %c0_106], %375 {strides = array<i32>} : memref<1x32x8xf32, #tpu.memory_space<vmem>>, vector<1x32x8xf32>,
    return
  }
  func.func @transform_0(%arg0: i32) -> (i32, i32, i32) {
    %c0_i32 = arith.constant 0 : i32
    %c0_i32_0 = arith.constant 0 : i32
    %c0_i32_1 = arith.constant 0 : i32
    return %arg0, %c0_i32, %c0_i32_0 : i32, i32, i32
  }
  func.func @transform_1(%arg0: i32) -> (i32, i32) {
    %c0_i32 = arith.constant 0 : i32
    %c0_i32_0 = arith.constant 0 : i32
    %c0_i32_1 = arith.constant 0 : i32
    return %c0_i32, %c0_i32_0 : i32, i32
  }
  func.func @transform_2(%arg0: i32) -> (i32, i32) {
    %c0_i32 = arith.constant 0 : i32
    %c0_i32_0 = arith.constant 0 : i32
    %c0_i32_1 = arith.constant 0 : i32
    return %c0_i32, %c0_i32_0 : i32, i32
  }
  func.func @transform_3(%arg0: i32) -> (i32, i32) {
    %c0_i32 = arith.constant 0 : i32
    %c0_i32_0 = arith.constant 0 : i32
    %c0_i32_1 = arith.constant 0 : i32
    return %c0_i32, %c0_i32_0 : i32, i32
  }
  func.func @transform_4(%arg0: i32) -> (i32, i32) {
    %c0_i32 = arith.constant 0 : i32
    %c0_i32_0 = arith.constant 0 : i32
    %c0_i32_1 = arith.constant 0 : i32
    return %c0_i32, %c0_i32_0 : i32, i32
  }
  func.func @transform_5(%arg0: i32) -> (i32, i32) {
    %c0_i32 = arith.constant 0 : i32
    %c0_i32_0 = arith.constant 0 : i32
    %c0_i32_1 = arith.constant 0 : i32
    return %c0_i32, %c0_i32_0 : i32, i32
  }
  func.func @transform_6(%arg0: i32) -> (i32, i32) {
    %c0_i32 = arith.constant 0 : i32
    %c0_i32_0 = arith.constant 0 : i32
    %c0_i32_1 = arith.constant 0 : i32
    return %c0_i32, %c0_i32_0 : i32, i32
  }
  func.func @transform_7(%arg0: i32) -> (i32, i32) {
    %c0_i32 = arith.constant 0 : i32
    %c0_i32_0 = arith.constant 0 : i32
    %c0_i32_1 = arith.constant 0 : i32
    return %c0_i32, %c0_i32_0 : i32, i32
  }
  func.func @transform_8(%arg0: i32) -> (i32, i32) {
    %c0_i32 = arith.constant 0 : i32
    %c0_i32_0 = arith.constant 0 : i32
    %c0_i32_1 = arith.constant 0 : i32
    return %c0_i32, %c0_i32_0 : i32, i32
  }
  func.func @transform_9(%arg0: i32) -> (i32, i32) {
    %c0_i32 = arith.constant 0 : i32
    %c0_i32_0 = arith.constant 0 : i32
    %c0_i32_1 = arith.constant 0 : i32
    return %c0_i32, %c0_i32_0 : i32, i32
  }
  func.func @transform_10(%arg0: i32) -> (i32, i32) {
    %c0_i32 = arith.constant 0 : i32
    %c0_i32_0 = arith.constant 0 : i32
    %c0_i32_1 = arith.constant 0 : i32
    return %c0_i32, %c0_i32_0 : i32, i32
  }
  func.func @transform_11(%arg0: i32) -> (i32, i32, i32) {
    %c0_i32 = arith.constant 0 : i32
    %c0_i32_0 = arith.constant 0 : i32
    %c0_i32_1 = arith.constant 0 : i32
    return %arg0, %c0_i32, %c0_i32_0 : i32, i32, i32
  }
}

</mosaic_0001>

<llo_original>
// kernel: tpu_custom_call.1
$region0: #{tpu_custom_call.1}
  #allocation0 [shape = 'u32[]', space=smem, size = 0x4, offset = 0x4, fixed_abs, tag = 'smem constant byte address 0x4 - core index']
  #allocation1 [shape = 'u32[144,128]{1,0:T(1,128)}', space=vmem, size = 0x12000, scoped, tag = 'internal scratch']
  %s0 = inlined_call_operand.hbm [shape: f32[16,256], index: 0, kind: input, shape index: {}]
  %s1 = inlined_call_operand.hbm [shape: f32[16,256], index: 1, kind: output, shape index: {}]
  %s2 = sld [smem:[#allocation0]]
  $region18: #{tpu_custom_call.1} parent=0
    _
  %s4 = ssub.s32 1, %s2
  %s5 = scalar_select 0, %s4, %s2
  $region1: #{tpu_custom_call.1} parent=0
    #allocation2 [shape = 'u8[16384]{0}', space=vmem, size = 0x4000, scoped, tag = 'input window, operand 0, single buffered']
    #allocation3 [shape = 's32[1]{0}', space=sflag, size = 0x4, scoped, tag = 'scoped memory for tpu_custom_call.1']
    #allocation4 [shape = 's32[1]{0}', space=sflag, size = 0x4, scoped, tag = 'scoped memory for tpu_custom_call.1']
    #allocation5 [shape = 'u8[16384]{0}', space=vmem, size = 0x4000, scoped, tag = 'output window, operand 0, single buffered']
    %6 = vsyncpa [#allocation3], 0
    %7 = vsyncpa [#allocation4], 0
    // Predicated region
    $region2: #{tpu_custom_call.1} parent=1 // pred_check
      _
    $region3: #{tpu_custom_call.1} parent=1 // pred_check_branch
      %9 = sbr.rel (0) target = $region5
    $region4: #{tpu_custom_call.1} parent=1 // pred_region
      %s11 = ssub.s32 512, 512
      %12 = vsyncadd [#allocation3], %s11
      %s13 = sshll.u32 [#allocation2], 4
      %s14 = int_to_ptr.vmem [resolvable:$true] %s13
      %19 = dma.hbm_to_vmem [thread:$0]  %s0, 512, %s14, [#allocation3], 256, 256, 16
    $region5: #{tpu_custom_call.1} parent=1 // pred_fallthru
      _
    // Predicated region
    $region6: #{tpu_custom_call.1} parent=1 // pred_check
      _
    $region7: #{tpu_custom_call.1} parent=1 // pred_check_branch
      %21 = sbr.rel (0) target = $region9
    $region8: #{tpu_custom_call.1} parent=1 // pred_region
      %22 = dma.done [#allocation3], 512
    $region9: #{tpu_custom_call.1} parent=1 // pred_fallthru
      _
    %v23 = vld [vmem:[#allocation2] sm:$0xff]
    %v24 = vld [vmem:[#allocation2 + $0x8] sm:$0xff]
    %v25 = vld [vmem:[#allocation2 + $0x10] sm:$0xff]
    %v26 = vld [vmem:[#allocation2 + $0x18] sm:$0xff]
    %27 = vrot.lane.b32.xlu0 %v23, 5
    %v28 = vpop.permute.xlu0 %27
    %29 = vrot.lane.b32.xlu0 %v25, 5
    %v30 = vpop.permute.xlu0 %29
    %31 = vrot.lane.b32.xlu0 %v24, 5
    %v32 = vpop.permute.xlu0 %31
    %33 = vrot.lane.b32.xlu0 %v26, 5
    %v34 = vpop.permute.xlu0 %33
    %v35 = vlaneseq
    %v36 = vand.u32 %v35, 127
    %vm37 = vcmp.lt.s32.totalorder %v36, 5
    %v38 = vsel %vm37, %v28, %v32
    %v39 = vsel %vm37, %v30, %v34
    %v40 = vsel %vm37, %v32, %v28
    %v41 = vsel %vm37, %v34, %v30
    %42 = vst [vmem:[#allocation5] sm:$0xff] %v40
    %43 = vst [vmem:[#allocation5 + $0x8] sm:$0xff] %v38
    %44 = vst [vmem:[#allocation5 + $0x10] sm:$0xff] %v41
    %45 = vst [vmem:[#allocation5 + $0x18] sm:$0xff] %v39
    // Predicated region
    $region10: #{tpu_custom_call.1} parent=1 // pred_check
      _
    $region11: #{tpu_custom_call.1} parent=1 // pred_check_branch
      %47 = sbr.rel (0) target = $region13
    $region12: #{tpu_custom_call.1} parent=1 // pred_region
      %s49 = ssub.s32 512, 512
      %50 = vsyncadd [#allocation4], %s49
      %s51 = sshll.u32 [#allocation5], 4
      %s52 = int_to_ptr.vmem [resolvable:$true] %s51
      %57 = dma.vmem_to_hbm [thread:$0]  %s52, 512, %s1, [#allocation4], 256, 256, 16
    $region13: #{tpu_custom_call.1} parent=1 // pred_fallthru
      _
    // Predicated region
    $region14: #{tpu_custom_call.1} parent=1 // pred_check
      _
    $region15: #{tpu_custom_call.1} parent=1 // pred_check_branch
      %59 = sbr.rel (0) target = $region17
    $region16: #{tpu_custom_call.1} parent=1 // pred_region
      %60 = dma.done [#allocation4], 512
    $region17: #{tpu_custom_call.1} parent=1 // pred_fallthru
      _
    %61 = vsyncpa [#allocation3], 1
    %62 = vsyncpa [#allocation4], 1

// kernel: localizer_features.1
$region0: #{localizer_features.1}
  #allocation0 [shape = 'u32[]', space=smem, size = 0x4, offset = 0x4, fixed_abs, tag = 'smem constant byte address 0x4 - core index']
  #allocation1 [shape = 'u32[144,128]{1,0:T(1,128)}', space=vmem, size = 0x12000, scoped, tag = 'internal scratch']
  %s0 = inlined_call_operand.vmem [shape: bf16[2,16,512], index: 0, kind: input, shape index: {}]
  %s1 = inlined_call_operand.vmem [shape: bf16[32,512], index: 1, kind: input, shape index: {}]
  %s2 = inlined_call_operand.vmem [shape: bf16[27,512], index: 2, kind: input, shape index: {}]
  %s3 = inlined_call_operand.vmem [shape: f32[32,1], index: 3, kind: input, shape index: {}]
  %s4 = inlined_call_operand.vmem [shape: f32[32,1], index: 4, kind: input, shape index: {}]
  %s5 = inlined_call_operand.vmem [shape: bf16[512,64], index: 5, kind: input, shape index: {}]
  %s6 = inlined_call_operand.vmem [shape: bf16[32,896], index: 6, kind: input, shape index: {}]
  %s7 = inlined_call_operand.vmem [shape: bf16[27,64], index: 7, kind: input, shape index: {}]
  %s8 = inlined_call_operand.vmem [shape: f32[32,1], index: 8, kind: input, shape index: {}]
  %s9 = inlined_call_operand.vmem [shape: f32[32,1], index: 9, kind: input, shape index: {}]
  %s10 = inlined_call_operand.vmem [shape: bf16[64,8], index: 10, kind: input, shape index: {}]
  %s11 = inlined_call_operand.vmem [shape: f32[2,32,8], index: 11, kind: output, shape index: {}]
  %s12 = sld [smem:[#allocation0]]
  $region77: #{localizer_features.1} parent=0
    _
  %s14 = ssub.s32 1, %s12
  %s15 = scalar_select 0, %s14, %s12
  loop: start=0, step=1, limit=4
  $region2: #{localizer_features.1} parent=0 // loop_pre_header
    _
  $region3: #{localizer_features.1} parent=0 // loop_header
    %s17 = sphi 0, %s21
    %p18 = scmp.ge.s32.totalorder %s17, 4
    %s27 = sphi 0, %s29
    %s30 = sphi 0, %s27
    %s31 = sphi 0, %s30
    %s47 = sphi 0, %s31
    %s51 = sphi 0, %s51
    %s53 = sphi 0, %s51
    %s54 = sphi 0, %s53
    %s68 = sphi 0, %s54
    %s72 = sphi 0, %s72
    %s74 = sphi 0, %s72
    %s75 = sphi 0, %s74
    %s89 = sphi 0, %s75
    %s93 = sphi 0, %s93
    %s95 = sphi 0, %s93
    %s96 = sphi 0, %s95
    %s110 = sphi 0, %s96
    %s114 = sphi 0, %s114
    %s116 = sphi 0, %s114
    %s117 = sphi 0, %s116
    %s131 = sphi 0, %s117
    %s135 = sphi 0, %s135
    %s137 = sphi 0, %s135
    %s138 = sphi 0, %s137
    %s152 = sphi 0, %s138
    %s156 = sphi 0, %s156
    %s158 = sphi 0, %s156
    %s159 = sphi 0, %s158
    %s173 = sphi 0, %s159
    %s177 = sphi 0, %s177
    %s179 = sphi 0, %s177
    %s180 = sphi 0, %s179
    %s194 = sphi 0, %s180
    %s198 = sphi 0, %s198
    %s200 = sphi 0, %s198
    %s201 = sphi 0, %s200
    %s215 = sphi 0, %s201
    %s219 = sphi 0, %s219
    %s221 = sphi 0, %s219
    %s222 = sphi 0, %s221
    %s236 = sphi 0, %s222
    %s240 = sphi 0, %s240
    %s242 = sphi 0, %s240
    %s243 = sphi 0, %s242
    %s257 = sphi 0, %s243
    %s263 = sphi 0, %s265
    %s266 = sphi 0, %s263
    %s267 = sphi 0, %s266
    %s283 = sphi 0, %s267
  $region4: #{localizer_features.1} parent=0 // loop_header_branch
    %20 = sbr.rel (%p18) target = $region8
  $region5: #{localizer_features.1} parent=0 // loop_body
    %s22 = ssub.s32 %s17, 1
    %s23 = ssub.s32 %s17, 2
    %s24 = sadd.s32 %s17, 1
    %s25 = ssub.s32 %s17, %s24
    %p26 = scmp.eq.s32.totalorder %s25, 0
    %s28 = sadd.s32 %s27, 1
    %s29 = scalar_select %p26, %s27, %s28
    %p32 = pneg %p26
    %p33 = scmp.eq.s32.totalorder %s17, 1
    %p34 = por %p32, %p33
    %p35 = scmp.ne.s32.totalorder %s27, %s30
    %p36 = scmp.eq.s32.totalorder %s17, 0
    %p37 = por %p35, %p36
    %p38 = scmp.ne.s32.totalorder %s27, %s30
    %p39 = scmp.eq.s32.totalorder %s22, 1
    %p40 = por %p38, %p39
    %p41 = scmp.ne.s32.totalorder %s30, %s31
    %p42 = scmp.eq.s32.totalorder %s22, 0
    %p43 = por %p41, %p42
    %p44 = scmp.ne.s32.totalorder %s30, %s31
    %p45 = scmp.eq.s32.totalorder %s23, 1
    %p46 = por %p44, %p45
    %p48 = scmp.ne.s32.totalorder %s31, %s47
    %p49 = scmp.eq.s32.totalorder %s23, 0
    %p50 = por %p48, %p49
    %s52 = sadd.s32 %s51, 1
    %p55 = scmp.eq.s32.totalorder %s17, 1
    %p56 = scmp.ne.s32.totalorder %s51, %s53
    %p57 = scmp.eq.s32.totalorder %s17, 0
    %p58 = por %p56, %p57
    %p59 = scmp.ne.s32.totalorder %s51, %s53
    %p60 = scmp.eq.s32.totalorder %s22, 1
    %p61 = por %p59, %p60
    %p62 = scmp.ne.s32.totalorder %s53, %s54
    %p63 = scmp.eq.s32.totalorder %s22, 0
    %p64 = por %p62, %p63
    %p65 = scmp.ne.s32.totalorder %s53, %s54
    %p66 = scmp.eq.s32.totalorder %s23, 1
    %p67 = por %p65, %p66
    %p69 = scmp.ne.s32.totalorder %s54, %s68
    %p70 = scmp.eq.s32.totalorder %s23, 0
    %p71 = por %p69, %p70
    %s73 = sadd.s32 %s72, 1
    %p76 = scmp.eq.s32.totalorder %s17, 1
    %p77 = scmp.ne.s32.totalorder %s72, %s74
    %p78 = scmp.eq.s32.totalorder %s17, 0
    %p79 = por %p77, %p78
    %p80 = scmp.ne.s32.totalorder %s72, %s74
    %p81 = scmp.eq.s32.totalorder %s22, 1
    %p82 = por %p80, %p81
    %p83 = scmp.ne.s32.totalorder %s74, %s75
    %p84 = scmp.eq.s32.totalorder %s22, 0
    %p85 = por %p83, %p84
    %p86 = scmp.ne.s32.totalorder %s74, %s75
    %p87 = scmp.eq.s32.totalorder %s23, 1
    %p88 = por %p86, %p87
    %p90 = scmp.ne.s32.totalorder %s75, %s89
    %p91 = scmp.eq.s32.totalorder %s23, 0
    %p92 = por %p90, %p91
    %s94 = sadd.s32 %s93, 1
    %p97 = scmp.eq.s32.totalorder %s17, 1
    %p98 = scmp.ne.s32.totalorder %s93, %s95
    %p99 = scmp.eq.s32.totalorder %s17, 0
    %p100 = por %p98, %p99
    %p101 = scmp.ne.s32.totalorder %s93, %s95
    %p102 = scmp.eq.s32.totalorder %s22, 1
    %p103 = por %p101, %p102
    %p104 = scmp.ne.s32.totalorder %s95, %s96
    %p105 = scmp.eq.s32.totalorder %s22, 0
    %p106 = por %p104, %p105
    %p107 = scmp.ne.s32.totalorder %s95, %s96
    %p108 = scmp.eq.s32.totalorder %s23, 1
    %p109 = por %p107, %p108
    %p111 = scmp.ne.s32.totalorder %s96, %s110
    %p112 = scmp.eq.s32.totalorder %s23, 0
    %p113 = por %p111, %p112
    %s115 = sadd.s32 %s114, 1
    %p118 = scmp.eq.s32.totalorder %s17, 1
    %p119 = scmp.ne.s32.totalorder %s114, %s116
    %p120 = scmp.eq.s32.totalorder %s17, 0
    %p121 = por %p119, %p120
    %p122 = scmp.ne.s32.totalorder %s114, %s116
    %p123 = scmp.eq.s32.totalorder %s22, 1
    %p124 = por %p122, %p123
    %p125 = scmp.ne.s32.totalorder %s116, %s117
    %p126 = scmp.eq.s32.totalorder %s22, 0
    %p127 = por %p125, %p126
    %p128 = scmp.ne.s32.totalorder %s116, %s117
    %p129 = scmp.eq.s32.totalorder %s23, 1
    %p130 = por %p128, %p129
    %p132 = scmp.ne.s32.totalorder %s117, %s131
    %p133 = scmp.eq.s32.totalorder %s23, 0
    %p134 = por %p132, %p133
    %s136 = sadd.s32 %s135, 1
    %p139 = scmp.eq.s32.totalorder %s17, 1
    %p140 = scmp.ne.s32.totalorder %s135, %s137
    %p141 = scmp.eq.s32.totalorder %s17, 0
    %p142 = por %p140, %p141
    %p143 = scmp.ne.s32.totalorder %s135, %s137
    %p144 = scmp.eq.s32.totalorder %s22, 1
    %p145 = por %p143, %p144
    %p146 = scmp.ne.s32.totalorder %s137, %s138
    %p147 = scmp.eq.s32.totalorder %s22, 0
    %p148 = por %p146, %p147
    %p149 = scmp.ne.s32.totalorder %s137, %s138
    %p150 = scmp.eq.s32.totalorder %s23, 1
    %p151 = por %p149, %p150
    %p153 = scmp.ne.s32.totalorder %s138, %s152
    %p154 = scmp.eq.s32.totalorder %s23, 0
    %p155 = por %p153, %p154
    %s157 = sadd.s32 %s156, 1
    %p160 = scmp.eq.s32.totalorder %s17, 1
    %p161 = scmp.ne.s32.totalorder %s156, %s158
    %p162 = scmp.eq.s32.totalorder %s17, 0
    %p163 = por %p161, %p162
    %p164 = scmp.ne.s32.totalorder %s156, %s158
    %p165 = scmp.eq.s32.totalorder %s22, 1
    %p166 = por %p164, %p165
    %p167 = scmp.ne.s32.totalorder %s158, %s159
    %p168 = scmp.eq.s32.totalorder %s22, 0
    %p169 = por %p167, %p168
    %p170 = scmp.ne.s32.totalorder %s158, %s159
    %p171 = scmp.eq.s32.totalorder %s23, 1
    %p172 = por %p170, %p171
    %p174 = scmp.ne.s32.totalorder %s159, %s173
    %p175 = scmp.eq.s32.totalorder %s23, 0
    %p176 = por %p174, %p175
    %s178 = sadd.s32 %s177, 1
    %p181 = scmp.eq.s32.totalorder %s17, 1
    %p182 = scmp.ne.s32.totalorder %s177, %s179
    %p183 = scmp.eq.s32.totalorder %s17, 0
    %p184 = por %p182, %p183
    %p185 = scmp.ne.s32.totalorder %s177, %s179
    %p186 = scmp.eq.s32.totalorder %s22, 1
    %p187 = por %p185, %p186
    %p188 = scmp.ne.s32.totalorder %s179, %s180
    %p189 = scmp.eq.s32.totalorder %s22, 0
    %p190 = por %p188, %p189
    %p191 = scmp.ne.s32.totalorder %s179, %s180
    %p192 = scmp.eq.s32.totalorder %s23, 1
    %p193 = por %p191, %p192
    %p195 = scmp.ne.s32.totalorder %s180, %s194
    %p196 = scmp.eq.s32.totalorder %s23, 0
    %p197 = por %p195, %p196
    %s199 = sadd.s32 %s198, 1
    %p202 = scmp.eq.s32.totalorder %s17, 1
    %p203 = scmp.ne.s32.totalorder %s198, %s200
    %p204 = scmp.eq.s32.totalorder %s17, 0
    %p205 = por %p203, %p204
    %p206 = scmp.ne.s32.totalorder %s198, %s200
    %p207 = scmp.eq.s32.totalorder %s22, 1
    %p208 = por %p206, %p207
    %p209 = scmp.ne.s32.totalorder %s200, %s201
    %p210 = scmp.eq.s32.totalorder %s22, 0
    %p211 = por %p209, %p210
    %p212 = scmp.ne.s32.totalorder %s200, %s201
    %p213 = scmp.eq.s32.totalorder %s23, 1
    %p214 = por %p212, %p213
    %p216 = scmp.ne.s32.totalorder %s201, %s215
    %p217 = scmp.eq.s32.totalorder %s23, 0
    %p218 = por %p216, %p217
    %s220 = sadd.s32 %s219, 1
    %p223 = scmp.eq.s32.totalorder %s17, 1
    %p224 = scmp.ne.s32.totalorder %s219, %s221
    %p225 = scmp.eq.s32.totalorder %s17, 0
    %p226 = por %p224, %p225
    %p227 = scmp.ne.s32.totalorder %s219, %s221
    %p228 = scmp.eq.s32.totalorder %s22, 1
    %p229 = por %p227, %p228
    %p230 = scmp.ne.s32.totalorder %s221, %s222
    %p231 = scmp.eq.s32.totalorder %s22, 0
    %p232 = por %p230, %p231
    %p233 = scmp.ne.s32.totalorder %s221, %s222
    %p234 = scmp.eq.s32.totalorder %s23, 1
    %p235 = por %p233, %p234
    %p237 = scmp.ne.s32.totalorder %s222, %s236
    %p238 = scmp.eq.s32.totalorder %s23, 0
    %p239 = por %p237, %p238
    %s241 = sadd.s32 %s240, 1
    %p244 = scmp.eq.s32.totalorder %s17, 1
    %p245 = scmp.ne.s32.totalorder %s240, %s242
    %p246 = scmp.eq.s32.totalorder %s17, 0
    %p247 = por %p245, %p246
    %p248 = scmp.ne.s32.totalorder %s240, %s242
    %p249 = scmp.eq.s32.totalorder %s22, 1
    %p250 = por %p248, %p249
    %p251 = scmp.ne.s32.totalorder %s242, %s243
    %p252 = scmp.eq.s32.totalorder %s22, 0
    %p253 = por %p251, %p252
    %p254 = scmp.ne.s32.totalorder %s242, %s243
    %p255 = scmp.eq.s32.totalorder %s23, 1
    %p256 = por %p254, %p255
    %p258 = scmp.ne.s32.totalorder %s243, %s257
    %p259 = scmp.eq.s32.totalorder %s23, 0
    %p260 = por %p258, %p259
    %s261 = ssub.s32 %s17, %s24
    %p262 = scmp.eq.s32.totalorder %s261, 0
    %s264 = sadd.s32 %s263, 1
    %s265 = scalar_select %p262, %s263, %s264
    %p268 = pneg %p262
    %p269 = scmp.eq.s32.totalorder %s17, 1
    %p270 = por %p268, %p269
    %p271 = scmp.ne.s32.totalorder %s263, %s266
    %p272 = scmp.eq.s32.totalorder %s17, 0
    %p273 = por %p271, %p272
    %p274 = scmp.ne.s32.totalorder %s263, %s266
    %p275 = scmp.eq.s32.totalorder %s22, 1
    %p276 = por %p274, %p275
    %p277 = scmp.ne.s32.totalorder %s266, %s267
    %p278 = scmp.eq.s32.totalorder %s22, 0
    %p279 = por %p277, %p278
    %p280 = scmp.ne.s32.totalorder %s266, %s267
    %p281 = scmp.eq.s32.totalorder %s23, 1
    %p282 = por %p280, %p281
    %p284 = scmp.ne.s32.totalorder %s267, %s283
    %p285 = scmp.eq.s32.totalorder %s23, 0
    %p286 = por %p284, %p285
    %p287 = scmp.le.s32.totalorder 1, %s17
    %p288 = scmp.lt.s32.totalorder %s17, 3
    %p289 = pnand %p287, %p288
    %p290 = pneg %p289
    // Predicated region
    $region9: #{localizer_features.1} parent=5 // pred_check
      _
    $region10: #{localizer_features.1} parent=5 // pred_check_branch
      %292 = sbr.rel (%p289) target = $region12
    $region11: #{localizer_features.1} parent=5 // pred_region
      %s293 = ssub.s32 %s17, 1
      // Predicated region
      $region13: #{localizer_features.1} parent=11 // pred_check
        %p294 = pneg %p64
      $region14: #{localizer_features.1} parent=11 // pred_check_branch
        %296 = sbr.rel (%p294) target = $region16
      $region15: #{localizer_features.1} parent=11 // pred_region
        _
      $region16: #{localizer_features.1} parent=11 // pred_fallthru
        _
      // Predicated region
      $region17: #{localizer_features.1} parent=11 // pred_check
        %p297 = pneg %p85
      $region18: #{localizer_features.1} parent=11 // pred_check_branch
        %299 = sbr.rel (%p297) target = $region20
      $region19: #{localizer_features.1} parent=11 // pred_region
        _
      $region20: #{localizer_features.1} parent=11 // pred_fallthru
        _
      // Predicated region
      $region21: #{localizer_features.1} parent=11 // pred_check
        %p300 = pneg %p106
      $region22: #{localizer_features.1} parent=11 // pred_check_branch
        %302 = sbr.rel (%p300) target = $region24
      $region23: #{localizer_features.1} parent=11 // pred_region
        _
      $region24: #{localizer_features.1} parent=11 // pred_fallthru
        _
      // Predicated region
      $region25: #{localizer_features.1} parent=11 // pred_check
        %p303 = pneg %p127
      $region26: #{localizer_features.1} parent=11 // pred_check_branch
        %305 = sbr.rel (%p303) target = $region28
      $region27: #{localizer_features.1} parent=11 // pred_region
        _
      $region28: #{localizer_features.1} parent=11 // pred_fallthru
        _
      // Predicated region
      $region29: #{localizer_features.1} parent=11 // pred_check
        %p306 = pneg %p148
      $region30: #{localizer_features.1} parent=11 // pred_check_branch
        %308 = sbr.rel (%p306) target = $region32
      $region31: #{localizer_features.1} parent=11 // pred_region
        _
      $region32: #{localizer_features.1} parent=11 // pred_fallthru
        _
      // Predicated region
      $region33: #{localizer_features.1} parent=11 // pred_check
        %p309 = pneg %p169
      $region34: #{localizer_features.1} parent=11 // pred_check_branch
        %311 = sbr.rel (%p309) target = $region36
      $region35: #{localizer_features.1} parent=11 // pred_region
        _
      $region36: #{localizer_features.1} parent=11 // pred_fallthru
        _
      // Predicated region
      $region37: #{localizer_features.1} parent=11 // pred_check
        %p312 = pneg %p190
      $region38: #{localizer_features.1} parent=11 // pred_check_branch
        %314 = sbr.rel (%p312) target = $region40
      $region39: #{localizer_features.1} parent=11 // pred_region
        _
      $region40: #{localizer_features.1} parent=11 // pred_fallthru
        _
      // Predicated region
      $region41: #{localizer_features.1} parent=11 // pred_check
        %p315 = pneg %p211
      $region42: #{localizer_features.1} parent=11 // pred_check_branch
        %317 = sbr.rel (%p315) target = $region44
      $region43: #{localizer_features.1} parent=11 // pred_region
        _
      $region44: #{localizer_features.1} parent=11 // pred_fallthru
        _
      // Predicated region
      $region45: #{localizer_features.1} parent=11 // pred_check
        %p318 = pneg %p232
      $region46: #{localizer_features.1} parent=11 // pred_check_branch
        %320 = sbr.rel (%p318) target = $region48
      $region47: #{localizer_features.1} parent=11 // pred_region
        _
      $region48: #{localizer_features.1} parent=11 // pred_fallthru
        _
      // Predicated region
      $region49: #{localizer_features.1} parent=11 // pred_check
        %p321 = pneg %p253
      $region50: #{localizer_features.1} parent=11 // pred_check_branch
        %323 = sbr.rel (%p321) target = $region52
      $region51: #{localizer_features.1} parent=11 // pred_region
        _
      $region52: #{localizer_features.1} parent=11 // pred_fallthru
        _
    $region12: #{localizer_features.1} parent=5 // pred_fallthru
      _
    %p324 = scmp.lt.s32.totalorder %s17, 2
    // Predicated region
    $region53: #{localizer_features.1} parent=5 // pred_check
      %p325 = pneg %p324
    $region54: #{localizer_features.1} parent=5 // pred_check_branch
      %327 = sbr.rel (%p325) target = $region56
    $region55: #{localizer_features.1} parent=5 // pred_region
      // Predicated region
      $region57: #{localizer_features.1} parent=55 // pred_check
        %p328 = pneg %p37
      $region58: #{localizer_features.1} parent=55 // pred_check_branch
        %330 = sbr.rel (%p328) target = $region60
      $region59: #{localizer_features.1} parent=55 // pred_region
        %p331 = scmp.lt.s32.totalorder %s17, 1
        %s332 = scalar_select %p331, %s17, 1
        %s333 = smul.addr %s332, 8
        %s334 = smul.addr %s333, 4
        %s335 = scalar_lea.vmem %s0, %s334
      $region60: #{localizer_features.1} parent=55 // pred_fallthru
        _
    $region56: #{localizer_features.1} parent=5 // pred_fallthru
      _
    %p336 = scmp.le.s32.totalorder 1, %s17
    %p337 = scmp.lt.s32.totalorder %s17, 3
    %p338 = pnand %p336, %p337
    %p339 = pneg %p338
    // Predicated region
    $region61: #{localizer_features.1} parent=5 // pred_check
      _
    $region62: #{localizer_features.1} parent=5 // pred_check_branch
      %341 = sbr.rel (%p338) target = $region64
    $region63: #{localizer_features.1} parent=5 // pred_region
      %s342 = ssub.s32 %s17, 1
      %p343 = scmp.lt.s32.totalorder %s22, 1
      %s344 = scalar_select %p343, %s22, 1
      %s345 = smul.addr %s344, 8
      %s346 = smul.addr %s345, 4
      %s347 = scalar_lea.vmem %s0, %s346
      %p348 = pneg %p43
      %p349 = pneg %p40
      %p350 = pneg %p64
      %p351 = pneg %p61
      %p352 = pneg %p85
      %p353 = pneg %p82
      %p354 = pneg %p106
      %p355 = pneg %p103
      %p356 = pneg %p127
      %p357 = pneg %p124
      %p358 = pneg %p148
      %p359 = pneg %p145
      %p360 = pneg %p169
      %p361 = pneg %p166
      %p362 = pneg %p190
      %p363 = pneg %p187
      %p364 = pneg %p211
      %p365 = pneg %p208
      %p366 = pneg %p232
      %p367 = pneg %p229
      %p368 = pneg %p253
      %p369 = pneg %p250
      %p370 = pneg %p279
      %p371 = pneg %p276
      %p372 = scmp.lt.s32.totalorder %s22, 1
      %s373 = scalar_select %p372, %s22, 1
      %s374 = smul.addr %s373, 4
      %s375 = smul.addr %s374, 8
      %s376 = scalar_lea.vmem %s11, %s375
      %p377 = scmp.lt.s32.totalorder %s22, 1
      %s378 = scalar_select %p377, %s22, 1
      %s379 = smul.addr %s378, 8
      %s380 = smul.addr %s379, 4
      %s381 = scalar_lea.vmem %s0, %s380
      %p382 = scmp.lt.s32.totalorder %s22, 1
      %s383 = scalar_select %p382, %s22, 1
      %s384 = smul.addr %s383, 4
      %s385 = smul.addr %s384, 8
      %s386 = scalar_lea.vmem %s11, %s385
      %v388 = vld [vmem:[%s381] sm:$0xff]
      %v389 = vld [vmem:[%s381 + $0x8] sm:$0xff]
      %v390 = vld [vmem:[%s381 + $0x10] sm:$0xff]
      %v391 = vld [vmem:[%s381 + $0x18] sm:$0xff]
      %v394 = vunpack.c.h.b16 %v389
      %v395 = vunpack.c.h.b16 %v391
      %v396 = vpack.c.b16 %v395, %v394
      %397 = vrot.lane.b32.xlu0 %v396, 73
      %v398 = vpop.permute.xlu0 %397
      %v401 = vunpack.c.l.b16 %v388
      %v402 = vunpack.c.h.b16 %v388
      %v403 = vunpack.c.l.b16 %v389
      %v404 = vunpack.c.l.b16 %v390
      %v405 = vunpack.c.h.b16 %v390
      %v406 = vunpack.c.l.b16 %v391
      %v407 = vpack.c.b16 %v404, %v401
      %v408 = vpack.c.b16 %v405, %v402
      %v409 = vpack.c.b16 %v406, %v403
      %410 = vrot.lane.b32.xlu0 %v407, 73
      %v411 = vpop.permute.xlu0 %410
      %412 = vrot.lane.b32.xlu0 %v408, 73
      %v413 = vpop.permute.xlu0 %412
      %414 = vrot.lane.b32.xlu0 %v409, 73
      %v415 = vpop.permute.xlu0 %414
      %vm416 = vcmask 596992
      %v417 = vsel %vm416, %v411, %v413
      %v418 = vsel %vm416, %v413, %v415
      %v419 = vsel %vm416, %v415, %v398
      %vm423 = vcmask 596992
      %v426 = vsel %vm423, %v398, %v411
      %v428 = vld [vmem:[%s2] sm:$0x11]
      %v429 = vld [vmem:[%s2 + $0x8] sm:$0x11]
      %v432 = vunpack.c.l.b16 %v428
      %v433 = vunpack.c.h.b16 %v428
      %v434 = vunpack.c.l.b16 %v429
      %v435 = vunpack.c.h.b16 %v429
      %v436 = vpack.c.b16 %v432, %v432
      %v437 = vpack.c.b16 %v433, %v433
      %v438 = vpack.c.b16 %v434, %v434
      %v439 = vpack.c.b16 %v435, %v435
      %v441 = vpack.i.b16 %v436, %v436
      %v443 = vlaneseq
      %v444 = vshrl.u32 %v443, 7
      %v445 = vsub.s32 0, %v444
      %v446 = vrot.slane %v441, %v445
      %v448 = vpack.i.b16 %v437, %v437
      %v450 = vlaneseq
      %v451 = vshrl.u32 %v450, 7
      %v452 = vsub.s32 0, %v451
      %v453 = vrot.slane %v448, %v452
      %v455 = vpack.i.b16 %v438, %v438
      %v457 = vlaneseq
      %v458 = vshrl.u32 %v457, 7
      %v459 = vsub.s32 0, %v458
      %v460 = vrot.slane %v455, %v459
      %v462 = vpack.i.b16 %v439, %v439
      %v464 = vlaneseq
      %v465 = vshrl.u32 %v464, 7
      %v466 = vsub.s32 0, %v465
      %v467 = vrot.slane %v462, %v466
      %v468 = vmul.bf16 %v426, %v446
      %v469 = vmul.bf16 %v417, %v453
      %v470 = vmul.bf16 %v418, %v460
      %v471 = vmul.bf16 %v419, %v467
      %472 = vrot.lane.b32.xlu0 %v396, 72
      %v473 = vpop.permute.xlu0 %472
      %474 = vrot.lane.b32.xlu0 %v407, 72
      %v475 = vpop.permute.xlu0 %474
      %476 = vrot.lane.b32.xlu0 %v408, 72
      %v477 = vpop.permute.xlu0 %476
      %478 = vrot.lane.b32.xlu0 %v409, 72
      %v479 = vpop.permute.xlu0 %478
      %vm480 = vcmask 588800
      %v481 = vsel %vm480, %v475, %v477
      %v482 = vsel %vm480, %v477, %v479
      %v483 = vsel %vm480, %v479, %v473
      %vm487 = vcmask 588800
      %v490 = vsel %vm487, %v473, %v475
      %v492 = vshrl.u32 %v436, 16
      %v493 = vpack.i.b16 %v492, %v492
      %v495 = vlaneseq
      %v496 = vshrl.u32 %v495, 7
      %v497 = vsub.s32 0, %v496
      %v498 = vrot.slane %v493, %v497
      %v499 = vshrl.u32 %v437, 16
      %v500 = vpack.i.b16 %v499, %v499
      %v502 = vlaneseq
      %v503 = vshrl.u32 %v502, 7
      %v504 = vsub.s32 0, %v503
      %v505 = vrot.slane %v500, %v504
      %v506 = vshrl.u32 %v438, 16
      %v507 = vpack.i.b16 %v506, %v506
      %v509 = vlaneseq
      %v510 = vshrl.u32 %v509, 7
      %v511 = vsub.s32 0, %v510
      %v512 = vrot.slane %v507, %v511
      %v513 = vshrl.u32 %v439, 16
      %v514 = vpack.i.b16 %v513, %v513
      %v516 = vlaneseq
      %v517 = vshrl.u32 %v516, 7
      %v518 = vsub.s32 0, %v517
      %v519 = vrot.slane %v514, %v518
      %v520 = vmul.bf16 %v490, %v498
      %v521 = vmul.bf16 %v481, %v505
      %v522 = vmul.bf16 %v482, %v512
      %v523 = vmul.bf16 %v483, %v519
      %524 = vrot.lane.b32.xlu0 %v396, 71
      %v525 = vpop.permute.xlu0 %524
      %526 = vrot.lane.b32.xlu0 %v407, 71
      %v527 = vpop.permute.xlu0 %526
      %528 = vrot.lane.b32.xlu0 %v408, 71
      %v529 = vpop.permute.xlu0 %528
      %530 = vrot.lane.b32.xlu0 %v409, 71
      %v531 = vpop.permute.xlu0 %530
      %vm532 = vcmask 580608
      %v533 = vsel %vm532, %v527, %v529
      %v534 = vsel %vm532, %v529, %v531
      %v535 = vsel %vm532, %v531, %v525
      %vm539 = vcmask 580608
      %v542 = vsel %vm539, %v525, %v527
      %v544 = vld [vmem:[%s2] sm:$0x22]
      %v545 = vld [vmem:[%s2 + $0x8] sm:$0x22]
      %v548 = vunpack.c.l.b16 %v544
      %v549 = vunpack.c.h.b16 %v544
      %v550 = vunpack.c.l.b16 %v545
      %v551 = vunpack.c.h.b16 %v545
      %v552 = vpack.c.b16 %v548, %v548
      %v553 = vpack.c.b16 %v549, %v549
      %v554 = vpack.c.b16 %v550, %v550
      %v555 = vpack.c.b16 %v551, %v551
      %v557 = vpack.i.b16 %v552, %v552
      %v559 = vlaneseq
      %v560 = vshrl.u32 %v559, 7
      %v561 = vsub.s32 1, %v560
      %v562 = vrot.slane %v557, %v561
      %v564 = vpack.i.b16 %v553, %v553
      %v566 = vlaneseq
      %v567 = vshrl.u32 %v566, 7
      %v568 = vsub.s32 1, %v567
      %v569 = vrot.slane %v564, %v568
      %v571 = vpack.i.b16 %v554, %v554
      %v573 = vlaneseq
      %v574 = vshrl.u32 %v573, 7
      %v575 = vsub.s32 1, %v574
      %v576 = vrot.slane %v571, %v575
      %v578 = vpack.i.b16 %v555, %v555
      %v580 = vlaneseq
      %v581 = vshrl.u32 %v580, 7
      %v582 = vsub.s32 1, %v581
      %v583 = vrot.slane %v578, %v582
      %v584 = vmul.bf16 %v542, %v562
      %v585 = vmul.bf16 %v533, %v569
      %v586 = vmul.bf16 %v534, %v576
      %v587 = vmul.bf16 %v535, %v583
      %588 = vrot.lane.b32.xlu0 %v396, 65
      %v589 = vpop.permute.xlu0 %588
      %590 = vrot.lane.b32.xlu0 %v407, 65
      %v591 = vpop.permute.xlu0 %590
      %592 = vrot.lane.b32.xlu0 %v408, 65
      %v593 = vpop.permute.xlu0 %592
      %594 = vrot.lane.b32.xlu0 %v409, 65
      %v595 = vpop.permute.xlu0 %594
      %vm596 = vcmask 531456
      %v597 = vsel %vm596, %v591, %v593
      %v598 = vsel %vm596, %v593, %v595
      %v599 = vsel %vm596, %v595, %v589
      %vm603 = vcmask 531456
      %v606 = vsel %vm603, %v589, %v591
      %v608 = vshrl.u32 %v552, 16
      %v609 = vpack.i.b16 %v608, %v608
      %v611 = vlaneseq
      %v612 = vshrl.u32 %v611, 7
      %v613 = vsub.s32 1, %v612
      %v614 = vrot.slane %v609, %v613
      %v615 = vshrl.u32 %v553, 16
      %v616 = vpack.i.b16 %v615, %v615
      %v618 = vlaneseq
      %v619 = vshrl.u32 %v618, 7
      %v620 = vsub.s32 1, %v619
      %v621 = vrot.slane %v616, %v620
      %v622 = vshrl.u32 %v554, 16
      %v623 = vpack.i.b16 %v622, %v622
      %v625 = vlaneseq
      %v626 = vshrl.u32 %v625, 7
      %v627 = vsub.s32 1, %v626
      %v628 = vrot.slane %v623, %v627
      %v629 = vshrl.u32 %v555, 16
      %v630 = vpack.i.b16 %v629, %v629
      %v632 = vlaneseq
      %v633 = vshrl.u32 %v632, 7
      %v634 = vsub.s32 1, %v633
      %v635 = vrot.slane %v630, %v634
      %v636 = vmul.bf16 %v606, %v614
      %v637 = vmul.bf16 %v597, %v621
      %v638 = vmul.bf16 %v598, %v628
      %v639 = vmul.bf16 %v599, %v635
      %640 = vrot.lane.b32.xlu0 %v396, 64
      %v641 = vpop.permute.xlu0 %640
      %642 = vrot.lane.b32.xlu0 %v407, 64
      %v643 = vpop.permute.xlu0 %642
      %644 = vrot.lane.b32.xlu0 %v408, 64
      %v645 = vpop.permute.xlu0 %644
      %646 = vrot.lane.b32.xlu0 %v409, 64
      %v647 = vpop.permute.xlu0 %646
      %vm648 = vcmask 523264
      %v649 = vsel %vm648, %v643, %v645
      %v650 = vsel %vm648, %v645, %v647
      %v651 = vsel %vm648, %v647, %v641
      %vm655 = vcmask 523264
      %v658 = vsel %vm655, %v641, %v643
      %v660 = vld [vmem:[%s2] sm:$0x44]
      %v661 = vld [vmem:[%s2 + $0x8] sm:$0x44]
      %v664 = vunpack.c.l.b16 %v660
      %v665 = vunpack.c.h.b16 %v660
      %v666 = vunpack.c.l.b16 %v661
      %v667 = vunpack.c.h.b16 %v661
      %v668 = vpack.c.b16 %v664, %v664
      %v669 = vpack.c.b16 %v665, %v665
      %v670 = vpack.c.b16 %v666, %v666
      %v671 = vpack.c.b16 %v667, %v667
      %v673 = vpack.i.b16 %v668, %v668
      %v675 = vlaneseq
      %v676 = vshrl.u32 %v675, 7
      %v677 = vsub.s32 2, %v676
      %v678 = vrot.slane %v673, %v677
      %v680 = vpack.i.b16 %v669, %v669
      %v682 = vlaneseq
      %v683 = vshrl.u32 %v682, 7
      %v684 = vsub.s32 2, %v683
      %v685 = vrot.slane %v680, %v684
      %v687 = vpack.i.b16 %v670, %v670
      %v689 = vlaneseq
      %v690 = vshrl.u32 %v689, 7
      %v691 = vsub.s32 2, %v690
      %v692 = vrot.slane %v687, %v691
      %v694 = vpack.i.b16 %v671, %v671
      %v696 = vlaneseq
      %v697 = vshrl.u32 %v696, 7
      %v698 = vsub.s32 2, %v697
      %v699 = vrot.slane %v694, %v698
      %v700 = vmul.bf16 %v658, %v678
      %v701 = vmul.bf16 %v649, %v685
      %v702 = vmul.bf16 %v650, %v692
      %v703 = vmul.bf16 %v651, %v699
      %704 = vrot.lane.b32.xlu0 %v396, 63
      %v705 = vpop.permute.xlu0 %704
      %706 = vrot.lane.b32.xlu0 %v407, 63
      %v707 = vpop.permute.xlu0 %706
      %708 = vrot.lane.b32.xlu0 %v408, 63
      %v709 = vpop.permute.xlu0 %708
      %710 = vrot.lane.b32.xlu0 %v409, 63
      %v711 = vpop.permute.xlu0 %710
      %vm712 = vcmask 515072
      %v713 = vsel %vm712, %v707, %v709
      %v714 = vsel %vm712, %v709, %v711
      %v715 = vsel %vm712, %v711, %v705
      %vm719 = vcmask 515072
      %v722 = vsel %vm719, %v705, %v707
      %v724 = vshrl.u32 %v668, 16
      %v725 = vpack.i.b16 %v724, %v724
      %v727 = vlaneseq
      %v728 = vshrl.u32 %v727, 7
      %v729 = vsub.s32 2, %v728
      %v730 = vrot.slane %v725, %v729
      %v731 = vshrl.u32 %v669, 16
      %v732 = vpack.i.b16 %v731, %v731
      %v734 = vlaneseq
      %v735 = vshrl.u32 %v734, 7
      %v736 = vsub.s32 2, %v735
      %v737 = vrot.slane %v732, %v736
      %v738 = vshrl.u32 %v670, 16
      %v739 = vpack.i.b16 %v738, %v738
      %v741 = vlaneseq
      %v742 = vshrl.u32 %v741, 7
      %v743 = vsub.s32 2, %v742
      %v744 = vrot.slane %v739, %v743
      %v745 = vshrl.u32 %v671, 16
      %v746 = vpack.i.b16 %v745, %v745
      %v748 = vlaneseq
      %v749 = vshrl.u32 %v748, 7
      %v750 = vsub.s32 2, %v749
      %v751 = vrot.slane %v746, %v750
      %v752 = vmul.bf16 %v722, %v730
      %v753 = vmul.bf16 %v713, %v737
      %v754 = vmul.bf16 %v714, %v744
      %v755 = vmul.bf16 %v715, %v751
      %756 = vrot.lane.b32.xlu0 %v396, 57
      %v757 = vpop.permute.xlu0 %756
      %758 = vrot.lane.b32.xlu0 %v407, 57
      %v759 = vpop.permute.xlu0 %758
      %760 = vrot.lane.b32.xlu0 %v408, 57
      %v761 = vpop.permute.xlu0 %760
      %762 = vrot.lane.b32.xlu0 %v409, 57
      %v763 = vpop.permute.xlu0 %762
      %vm764 = vcmask 465920
      %v765 = vsel %vm764, %v759, %v761
      %v766 = vsel %vm764, %v761, %v763
      %v767 = vsel %vm764, %v763, %v757
      %vm771 = vcmask 465920
      %v774 = vsel %vm771, %v757, %v759
      %v776 = vld [vmem:[%s2] sm:$0x88]
      %v777 = vld [vmem:[%s2 + $0x8] sm:$0x88]
      %v780 = vunpack.c.l.b16 %v776
      %v781 = vunpack.c.h.b16 %v776
      %v782 = vunpack.c.l.b16 %v777
      %v783 = vunpack.c.h.b16 %v777
      %v784 = vpack.c.b16 %v780, %v780
      %v785 = vpack.c.b16 %v781, %v781
      %v786 = vpack.c.b16 %v782, %v782
      %v787 = vpack.c.b16 %v783, %v783
      %v789 = vpack.i.b16 %v784, %v784
      %v791 = vlaneseq
      %v792 = vshrl.u32 %v791, 7
      %v793 = vsub.s32 3, %v792
      %v794 = vrot.slane %v789, %v793
      %v796 = vpack.i.b16 %v785, %v785
      %v798 = vlaneseq
      %v799 = vshrl.u32 %v798, 7
      %v800 = vsub.s32 3, %v799
      %v801 = vrot.slane %v796, %v800
      %v803 = vpack.i.b16 %v786, %v786
      %v805 = vlaneseq
      %v806 = vshrl.u32 %v805, 7
      %v807 = vsub.s32 3, %v806
      %v808 = vrot.slane %v803, %v807
      %v810 = vpack.i.b16 %v787, %v787
      %v812 = vlaneseq
      %v813 = vshrl.u32 %v812, 7
      %v814 = vsub.s32 3, %v813
      %v815 = vrot.slane %v810, %v814
      %v816 = vmul.bf16 %v774, %v794
      %v817 = vmul.bf16 %v765, %v801
      %v818 = vmul.bf16 %v766, %v808
      %v819 = vmul.bf16 %v767, %v815
      %820 = vrot.lane.b32.xlu0 %v396, 56
      %v821 = vpop.permute.xlu0 %820
      %822 = vrot.lane.b32.xlu0 %v407, 56
      %v823 = vpop.permute.xlu0 %822
      %824 = vrot.lane.b32.xlu0 %v408, 56
      %v825 = vpop.permute.xlu0 %824
      %826 = vrot.lane.b32.xlu0 %v409, 56
      %v827 = vpop.permute.xlu0 %826
      %vm828 = vcmask 457728
      %v829 = vsel %vm828, %v823, %v825
      %v830 = vsel %vm828, %v825, %v827
      %v831 = vsel %vm828, %v827, %v821
      %vm835 = vcmask 457728
      %v838 = vsel %vm835, %v821, %v823
      %v840 = vshrl.u32 %v784, 16
      %v841 = vpack.i.b16 %v840, %v840
      %v843 = vlaneseq
      %v844 = vshrl.u32 %v843, 7
      %v845 = vsub.s32 3, %v844
      %v846 = vrot.slane %v841, %v845
      %v847 = vshrl.u32 %v785, 16
      %v848 = vpack.i.b16 %v847, %v847
      %v850 = vlaneseq
      %v851 = vshrl.u32 %v850, 7
      %v852 = vsub.s32 3, %v851
      %v853 = vrot.slane %v848, %v852
      %v854 = vshrl.u32 %v786, 16
      %v855 = vpack.i.b16 %v854, %v854
      %v857 = vlaneseq
      %v858 = vshrl.u32 %v857, 7
      %v859 = vsub.s32 3, %v858
      %v860 = vrot.slane %v855, %v859
      %v861 = vshrl.u32 %v787, 16
      %v862 = vpack.i.b16 %v861, %v861
      %v864 = vlaneseq
      %v865 = vshrl.u32 %v864, 7
      %v866 = vsub.s32 3, %v865
      %v867 = vrot.slane %v862, %v866
      %v868 = vmul.bf16 %v838, %v846
      %v869 = vmul.bf16 %v829, %v853
      %v870 = vmul.bf16 %v830, %v860
      %v871 = vmul.bf16 %v831, %v867
      %872 = vrot.lane.b32.xlu0 %v396, 55
      %v873 = vpop.permute.xlu0 %872
      %874 = vrot.lane.b32.xlu0 %v407, 55
      %v875 = vpop.permute.xlu0 %874
      %876 = vrot.lane.b32.xlu0 %v408, 55
      %v877 = vpop.permute.xlu0 %876
      %878 = vrot.lane.b32.xlu0 %v409, 55
      %v879 = vpop.permute.xlu0 %878
      %vm880 = vcmask 449536
      %v881 = vsel %vm880, %v875, %v877
      %v882 = vsel %vm880, %v877, %v879
      %v883 = vsel %vm880, %v879, %v873
      %vm887 = vcmask 449536
      %v890 = vsel %vm887, %v873, %v875
      %v892 = vld [vmem:[%s2 + $0x10] sm:$0x11]
      %v893 = vld [vmem:[%s2 + $0x18] sm:$0x11]
      %v896 = vunpack.c.l.b16 %v892
      %v897 = vunpack.c.h.b16 %v892
      %v898 = vunpack.c.l.b16 %v893
      %v899 = vunpack.c.h.b16 %v893
      %v900 = vpack.c.b16 %v896, %v896
      %v901 = vpack.c.b16 %v897, %v897
      %v902 = vpack.c.b16 %v898, %v898
      %v903 = vpack.c.b16 %v899, %v899
      %v905 = vpack.i.b16 %v900, %v900
      %v907 = vlaneseq
      %v908 = vshrl.u32 %v907, 7
      %v909 = vsub.s32 0, %v908
      %v910 = vrot.slane %v905, %v909
      %v912 = vpack.i.b16 %v901, %v901
      %v914 = vlaneseq
      %v915 = vshrl.u32 %v914, 7
      %v916 = vsub.s32 0, %v915
      %v917 = vrot.slane %v912, %v916
      %v919 = vpack.i.b16 %v902, %v902
      %v921 = vlaneseq
      %v922 = vshrl.u32 %v921, 7
      %v923 = vsub.s32 0, %v922
      %v924 = vrot.slane %v919, %v923
      %v926 = vpack.i.b16 %v903, %v903
      %v928 = vlaneseq
      %v929 = vshrl.u32 %v928, 7
      %v930 = vsub.s32 0, %v929
      %v931 = vrot.slane %v926, %v930
      %v932 = vmul.bf16 %v890, %v910
      %v933 = vmul.bf16 %v881, %v917
      %v934 = vmul.bf16 %v882, %v924
      %v935 = vmul.bf16 %v883, %v931
      %936 = vrot.lane.b32.xlu0 %v396, 9
      %v937 = vpop.permute.xlu0 %936
      %938 = vrot.lane.b32.xlu0 %v407, 9
      %v939 = vpop.permute.xlu0 %938
      %940 = vrot.lane.b32.xlu0 %v408, 9
      %v941 = vpop.permute.xlu0 %940
      %942 = vrot.lane.b32.xlu0 %v409, 9
      %v943 = vpop.permute.xlu0 %942
      %vm944 = vcmask 72704
      %v945 = vsel %vm944, %v939, %v941
      %v946 = vsel %vm944, %v941, %v943
      %v947 = vsel %vm944, %v943, %v937
      %vm951 = vcmask 72704
      %v954 = vsel %vm951, %v937, %v939
      %v956 = vshrl.u32 %v900, 16
      %v957 = vpack.i.b16 %v956, %v956
      %v959 = vlaneseq
      %v960 = vshrl.u32 %v959, 7
      %v961 = vsub.s32 0, %v960
      %v962 = vrot.slane %v957, %v961
      %v963 = vshrl.u32 %v901, 16
      %v964 = vpack.i.b16 %v963, %v963
      %v966 = vlaneseq
      %v967 = vshrl.u32 %v966, 7
      %v968 = vsub.s32 0, %v967
      %v969 = vrot.slane %v964, %v968
      %v970 = vshrl.u32 %v902, 16
      %v971 = vpack.i.b16 %v970, %v970
      %v973 = vlaneseq
      %v974 = vshrl.u32 %v973, 7
      %v975 = vsub.s32 0, %v974
      %v976 = vrot.slane %v971, %v975
      %v977 = vshrl.u32 %v903, 16
      %v978 = vpack.i.b16 %v977, %v977
      %v980 = vlaneseq
      %v981 = vshrl.u32 %v980, 7
      %v982 = vsub.s32 0, %v981
      %v983 = vrot.slane %v978, %v982
      %v984 = vmul.bf16 %v954, %v962
      %v985 = vmul.bf16 %v945, %v969
      %v986 = vmul.bf16 %v946, %v976
      %v987 = vmul.bf16 %v947, %v983
      %988 = vrot.lane.b32.xlu0 %v396, 8
      %v989 = vpop.permute.xlu0 %988
      %990 = vrot.lane.b32.xlu0 %v407, 8
      %v991 = vpop.permute.xlu0 %990
      %992 = vrot.lane.b32.xlu0 %v408, 8
      %v993 = vpop.permute.xlu0 %992
      %994 = vrot.lane.b32.xlu0 %v409, 8
      %v995 = vpop.permute.xlu0 %994
      %vm996 = vcmask 64512
      %v997 = vsel %vm996, %v991, %v993
      %v998 = vsel %vm996, %v993, %v995
      %v999 = vsel %vm996, %v995, %v989
      %vm1003 = vcmask 64512
      %v1006 = vsel %vm1003, %v989, %v991
      %v1008 = vld [vmem:[%s2 + $0x10] sm:$0x22]
      %v1009 = vld [vmem:[%s2 + $0x18] sm:$0x22]
      %v1012 = vunpack.c.l.b16 %v1008
      %v1013 = vunpack.c.h.b16 %v1008
      %v1014 = vunpack.c.l.b16 %v1009
      %v1015 = vunpack.c.h.b16 %v1009
      %v1016 = vpack.c.b16 %v1012, %v1012
      %v1017 = vpack.c.b16 %v1013, %v1013
      %v1018 = vpack.c.b16 %v1014, %v1014
      %v1019 = vpack.c.b16 %v1015, %v1015
      %v1021 = vpack.i.b16 %v1016, %v1016
      %v1023 = vlaneseq
      %v1024 = vshrl.u32 %v1023, 7
      %v1025 = vsub.s32 1, %v1024
      %v1026 = vrot.slane %v1021, %v1025
      %v1028 = vpack.i.b16 %v1017, %v1017
      %v1030 = vlaneseq
      %v1031 = vshrl.u32 %v1030, 7
      %v1032 = vsub.s32 1, %v1031
      %v1033 = vrot.slane %v1028, %v1032
      %v1035 = vpack.i.b16 %v1018, %v1018
      %v1037 = vlaneseq
      %v1038 = vshrl.u32 %v1037, 7
      %v1039 = vsub.s32 1, %v1038
      %v1040 = vrot.slane %v1035, %v1039
      %v1042 = vpack.i.b16 %v1019, %v1019
      %v1044 = vlaneseq
      %v1045 = vshrl.u32 %v1044, 7
      %v1046 = vsub.s32 1, %v1045
      %v1047 = vrot.slane %v1042, %v1046
      %v1048 = vmul.bf16 %v1006, %v1026
      %v1049 = vmul.bf16 %v997, %v1033
      %v1050 = vmul.bf16 %v998, %v1040
      %v1051 = vmul.bf16 %v999, %v1047
      %1052 = vrot.lane.b32.xlu0 %v396, 7
      %v1053 = vpop.permute.xlu0 %1052
      %1054 = vrot.lane.b32.xlu0 %v407, 7
      %v1055 = vpop.permute.xlu0 %1054
      %1056 = vrot.lane.b32.xlu0 %v408, 7
      %v1057 = vpop.permute.xlu0 %1056
      %1058 = vrot.lane.b32.xlu0 %v409, 7
      %v1059 = vpop.permute.xlu0 %1058
      %vm1060 = vcmask 56320
      %v1061 = vsel %vm1060, %v1055, %v1057
      %v1062 = vsel %vm1060, %v1057, %v1059
      %v1063 = vsel %vm1060, %v1059, %v1053
      %vm1067 = vcmask 56320
      %v1070 = vsel %vm1067, %v1053, %v1055
      %v1072 = vshrl.u32 %v1016, 16
      %v1073 = vpack.i.b16 %v1072, %v1072
      %v1075 = vlaneseq
      %v1076 = vshrl.u32 %v1075, 7
      %v1077 = vsub.s32 1, %v1076
      %v1078 = vrot.slane %v1073, %v1077
      %v1079 = vshrl.u32 %v1017, 16
      %v1080 = vpack.i.b16 %v1079, %v1079
      %v1082 = vlaneseq
      %v1083 = vshrl.u32 %v1082, 7
      %v1084 = vsub.s32 1, %v1083
      %v1085 = vrot.slane %v1080, %v1084
      %v1086 = vshrl.u32 %v1018, 16
      %v1087 = vpack.i.b16 %v1086, %v1086
      %v1089 = vlaneseq
      %v1090 = vshrl.u32 %v1089, 7
      %v1091 = vsub.s32 1, %v1090
      %v1092 = vrot.slane %v1087, %v1091
      %v1093 = vshrl.u32 %v1019, 16
      %v1094 = vpack.i.b16 %v1093, %v1093
      %v1096 = vlaneseq
      %v1097 = vshrl.u32 %v1096, 7
      %v1098 = vsub.s32 1, %v1097
      %v1099 = vrot.slane %v1094, %v1098
      %v1100 = vmul.bf16 %v1070, %v1078
      %v1101 = vmul.bf16 %v1061, %v1085
      %v1102 = vmul.bf16 %v1062, %v1092
      %v1103 = vmul.bf16 %v1063, %v1099
      %1104 = vrot.lane.b32.xlu0 %v396, 1
      %v1105 = vpop.permute.xlu0 %1104
      %1106 = vrot.lane.b32.xlu0 %v407, 1
      %v1107 = vpop.permute.xlu0 %1106
      %1108 = vrot.lane.b32.xlu0 %v408, 1
      %v1109 = vpop.permute.xlu0 %1108
      %1110 = vrot.lane.b32.xlu0 %v409, 1
      %v1111 = vpop.permute.xlu0 %1110
      %vm1112 = vcmask 7168
      %v1113 = vsel %vm1112, %v1107, %v1109
      %v1114 = vsel %vm1112, %v1109, %v1111
      %v1115 = vsel %vm1112, %v1111, %v1105
      %vm1119 = vcmask 7168
      %v1122 = vsel %vm1119, %v1105, %v1107
      %v1124 = vld [vmem:[%s2 + $0x10] sm:$0x44]
      %v1125 = vld [vmem:[%s2 + $0x18] sm:$0x44]
      %v1128 = vunpack.c.l.b16 %v1124
      %v1129 = vunpack.c.h.b16 %v1124
      %v1130 = vunpack.c.l.b16 %v1125
      %v1131 = vunpack.c.h.b16 %v1125
      %v1132 = vpack.c.b16 %v1128, %v1128
      %v1133 = vpack.c.b16 %v1129, %v1129
      %v1134 = vpack.c.b16 %v1130, %v1130
      %v1135 = vpack.c.b16 %v1131, %v1131
      %v1137 = vpack.i.b16 %v1132, %v1132
      %v1139 = vlaneseq
      %v1140 = vshrl.u32 %v1139, 7
      %v1141 = vsub.s32 2, %v1140
      %v1142 = vrot.slane %v1137, %v1141
      %v1144 = vpack.i.b16 %v1133, %v1133
      %v1146 = vlaneseq
      %v1147 = vshrl.u32 %v1146, 7
      %v1148 = vsub.s32 2, %v1147
      %v1149 = vrot.slane %v1144, %v1148
      %v1151 = vpack.i.b16 %v1134, %v1134
      %v1153 = vlaneseq
      %v1154 = vshrl.u32 %v1153, 7
      %v1155 = vsub.s32 2, %v1154
      %v1156 = vrot.slane %v1151, %v1155
      %v1158 = vpack.i.b16 %v1135, %v1135
      %v1160 = vlaneseq
      %v1161 = vshrl.u32 %v1160, 7
      %v1162 = vsub.s32 2, %v1161
      %v1163 = vrot.slane %v1158, %v1162
      %v1164 = vmul.bf16 %v1122, %v1142
      %v1165 = vmul.bf16 %v1113, %v1149
      %v1166 = vmul.bf16 %v1114, %v1156
      %v1167 = vmul.bf16 %v1115, %v1163
      %1168 = vrot.lane.b32.xlu0 %v407, 127
      %v1169 = vpop.permute.xlu0 %1168
      %1170 = vrot.lane.b32.xlu0 %v408, 127
      %v1171 = vpop.permute.xlu0 %1170
      %1172 = vrot.lane.b32.xlu0 %v409, 127
      %v1173 = vpop.permute.xlu0 %1172
      %1174 = vrot.lane.b32.xlu0 %v396, 127
      %v1175 = vpop.permute.xlu0 %1174
      %vm1176 = vcmask 1039360
      %v1177 = vsel %vm1176, %v1169, %v1171
      %v1178 = vsel %vm1176, %v1171, %v1173
      %v1179 = vsel %vm1176, %v1173, %v1175
      %vm1183 = vcmask 1039360
      %v1186 = vsel %vm1183, %v1175, %v1169
      %v1188 = vld [vmem:[%s2 + $0x10] sm:$0x88]
      %v1189 = vld [vmem:[%s2 + $0x18] sm:$0x88]
      %v1192 = vunpack.c.l.b16 %v1188
      %v1193 = vunpack.c.h.b16 %v1188
      %v1194 = vunpack.c.l.b16 %v1189
      %v1195 = vunpack.c.h.b16 %v1189
      %v1196 = vpack.c.b16 %v1192, %v1192
      %v1197 = vpack.c.b16 %v1193, %v1193
      %v1198 = vpack.c.b16 %v1194, %v1194
      %v1199 = vpack.c.b16 %v1195, %v1195
      %v1201 = vpack.i.b16 %v1196, %v1196
      %v1203 = vlaneseq
      %v1204 = vshrl.u32 %v1203, 7
      %v1205 = vsub.s32 3, %v1204
      %v1206 = vrot.slane %v1201, %v1205
      %v1208 = vpack.i.b16 %v1197, %v1197
      %v1210 = vlaneseq
      %v1211 = vshrl.u32 %v1210, 7
      %v1212 = vsub.s32 3, %v1211
      %v1213 = vrot.slane %v1208, %v1212
      %v1215 = vpack.i.b16 %v1198, %v1198
      %v1217 = vlaneseq
      %v1218 = vshrl.u32 %v1217, 7
      %v1219 = vsub.s32 3, %v1218
      %v1220 = vrot.slane %v1215, %v1219
      %v1222 = vpack.i.b16 %v1199, %v1199
      %v1224 = vlaneseq
      %v1225 = vshrl.u32 %v1224, 7
      %v1226 = vsub.s32 3, %v1225
      %v1227 = vrot.slane %v1222, %v1226
      %v1228 = vmul.bf16 %v1177, %v1206
      %v1229 = vmul.bf16 %v1178, %v1213
      %v1230 = vmul.bf16 %v1179, %v1220
      %v1231 = vmul.bf16 %v1186, %v1227
      %1232 = vrot.lane.b32.xlu0 %v407, 121
      %v1233 = vpop.permute.xlu0 %1232
      %1234 = vrot.lane.b32.xlu0 %v408, 121
      %v1235 = vpop.permute.xlu0 %1234
      %1236 = vrot.lane.b32.xlu0 %v409, 121
      %v1237 = vpop.permute.xlu0 %1236
      %1238 = vrot.lane.b32.xlu0 %v396, 121
      %v1239 = vpop.permute.xlu0 %1238
      %vm1240 = vcmask 990208
      %v1241 = vsel %vm1240, %v1233, %v1235
      %v1242 = vsel %vm1240, %v1235, %v1237
      %v1243 = vsel %vm1240, %v1237, %v1239
      %vm1247 = vcmask 990208
      %v1250 = vsel %vm1247, %v1239, %v1233
      %v1252 = vshrl.u32 %v1196, 16
      %v1253 = vpack.i.b16 %v1252, %v1252
      %v1255 = vlaneseq
      %v1256 = vshrl.u32 %v1255, 7
      %v1257 = vsub.s32 3, %v1256
      %v1258 = vrot.slane %v1253, %v1257
      %v1259 = vshrl.u32 %v1197, 16
      %v1260 = vpack.i.b16 %v1259, %v1259
      %v1262 = vlaneseq
      %v1263 = vshrl.u32 %v1262, 7
      %v1264 = vsub.s32 3, %v1263
      %v1265 = vrot.slane %v1260, %v1264
      %v1266 = vshrl.u32 %v1198, 16
      %v1267 = vpack.i.b16 %v1266, %v1266
      %v1269 = vlaneseq
      %v1270 = vshrl.u32 %v1269, 7
      %v1271 = vsub.s32 3, %v1270
      %v1272 = vrot.slane %v1267, %v1271
      %v1273 = vshrl.u32 %v1199, 16
      %v1274 = vpack.i.b16 %v1273, %v1273
      %v1276 = vlaneseq
      %v1277 = vshrl.u32 %v1276, 7
      %v1278 = vsub.s32 3, %v1277
      %v1279 = vrot.slane %v1274, %v1278
      %v1280 = vmul.bf16 %v1241, %v1258
      %v1281 = vmul.bf16 %v1242, %v1265
      %v1282 = vmul.bf16 %v1243, %v1272
      %v1283 = vmul.bf16 %v1250, %v1279
      %1284 = vrot.lane.b32.xlu0 %v407, 120
      %v1285 = vpop.permute.xlu0 %1284
      %1286 = vrot.lane.b32.xlu0 %v408, 120
      %v1287 = vpop.permute.xlu0 %1286
      %1288 = vrot.lane.b32.xlu0 %v409, 120
      %v1289 = vpop.permute.xlu0 %1288
      %1290 = vrot.lane.b32.xlu0 %v396, 120
      %v1291 = vpop.permute.xlu0 %1290
      %vm1292 = vcmask 982016
      %v1293 = vsel %vm1292, %v1285, %v1287
      %v1294 = vsel %vm1292, %v1287, %v1289
      %v1295 = vsel %vm1292, %v1289, %v1291
      %vm1299 = vcmask 982016
      %v1302 = vsel %vm1299, %v1291, %v1285
      %v1304 = vld [vmem:[%s2 + $0x20] sm:$0x11]
      %v1305 = vld [vmem:[%s2 + $0x28] sm:$0x11]
      %v1308 = vunpack.c.l.b16 %v1304
      %v1309 = vunpack.c.h.b16 %v1304
      %v1310 = vunpack.c.l.b16 %v1305
      %v1311 = vunpack.c.h.b16 %v1305
      %v1312 = vpack.c.b16 %v1308, %v1308
      %v1313 = vpack.c.b16 %v1309, %v1309
      %v1314 = vpack.c.b16 %v1310, %v1310
      %v1315 = vpack.c.b16 %v1311, %v1311
      %v1317 = vpack.i.b16 %v1312, %v1312
      %v1319 = vlaneseq
      %v1320 = vshrl.u32 %v1319, 7
      %v1321 = vsub.s32 0, %v1320
      %v1322 = vrot.slane %v1317, %v1321
      %v1324 = vpack.i.b16 %v1313, %v1313
      %v1326 = vlaneseq
      %v1327 = vshrl.u32 %v1326, 7
      %v1328 = vsub.s32 0, %v1327
      %v1329 = vrot.slane %v1324, %v1328
      %v1331 = vpack.i.b16 %v1314, %v1314
      %v1333 = vlaneseq
      %v1334 = vshrl.u32 %v1333, 7
      %v1335 = vsub.s32 0, %v1334
      %v1336 = vrot.slane %v1331, %v1335
      %v1338 = vpack.i.b16 %v1315, %v1315
      %v1340 = vlaneseq
      %v1341 = vshrl.u32 %v1340, 7
      %v1342 = vsub.s32 0, %v1341
      %v1343 = vrot.slane %v1338, %v1342
      %v1344 = vmul.bf16 %v1293, %v1322
      %v1345 = vmul.bf16 %v1294, %v1329
      %v1346 = vmul.bf16 %v1295, %v1336
      %v1347 = vmul.bf16 %v1302, %v1343
      %1348 = vrot.lane.b32.xlu0 %v407, 119
      %v1349 = vpop.permute.xlu0 %1348
      %1350 = vrot.lane.b32.xlu0 %v408, 119
      %v1351 = vpop.permute.xlu0 %1350
      %1352 = vrot.lane.b32.xlu0 %v409, 119
      %v1353 = vpop.permute.xlu0 %1352
      %1354 = vrot.lane.b32.xlu0 %v396, 119
      %v1355 = vpop.permute.xlu0 %1354
      %vm1356 = vcmask 973824
      %v1357 = vsel %vm1356, %v1349, %v1351
      %v1358 = vsel %vm1356, %v1351, %v1353
      %v1359 = vsel %vm1356, %v1353, %v1355
      %vm1363 = vcmask 973824
      %v1366 = vsel %vm1363, %v1355, %v1349
      %v1368 = vshrl.u32 %v1312, 16
      %v1369 = vpack.i.b16 %v1368, %v1368
      %v1371 = vlaneseq
      %v1372 = vshrl.u32 %v1371, 7
      %v1373 = vsub.s32 0, %v1372
      %v1374 = vrot.slane %v1369, %v1373
      %v1375 = vshrl.u32 %v1313, 16
      %v1376 = vpack.i.b16 %v1375, %v1375
      %v1378 = vlaneseq
      %v1379 = vshrl.u32 %v1378, 7
      %v1380 = vsub.s32 0, %v1379
      %v1381 = vrot.slane %v1376, %v1380
      %v1382 = vshrl.u32 %v1314, 16
      %v1383 = vpack.i.b16 %v1382, %v1382
      %v1385 = vlaneseq
      %v1386 = vshrl.u32 %v1385, 7
      %v1387 = vsub.s32 0, %v1386
      %v1388 = vrot.slane %v1383, %v1387
      %v1389 = vshrl.u32 %v1315, 16
      %v1390 = vpack.i.b16 %v1389, %v1389
      %v1392 = vlaneseq
      %v1393 = vshrl.u32 %v1392, 7
      %v1394 = vsub.s32 0, %v1393
      %v1395 = vrot.slane %v1390, %v1394
      %v1396 = vmul.bf16 %v1357, %v1374
      %v1397 = vmul.bf16 %v1358, %v1381
      %v1398 = vmul.bf16 %v1359, %v1388
      %v1399 = vmul.bf16 %v1366, %v1395
      %v1400 = vld [vmem:[%s2 + $0x20] sm:$0x22]
      %v1401 = vld [vmem:[%s2 + $0x28] sm:$0x22]
      %v1404 = vunpack.c.l.b16 %v1400
      %v1405 = vunpack.c.h.b16 %v1400
      %v1406 = vunpack.c.l.b16 %v1401
      %v1407 = vunpack.c.h.b16 %v1401
      %v1408 = vpack.c.b16 %v1404, %v1404
      %v1409 = vpack.c.b16 %v1405, %v1405
      %v1410 = vpack.c.b16 %v1406, %v1406
      %v1411 = vpack.c.b16 %v1407, %v1407
      %v1413 = vpack.i.b16 %v1408, %v1408
      %v1415 = vlaneseq
      %v1416 = vshrl.u32 %v1415, 7
      %v1417 = vsub.s32 1, %v1416
      %v1418 = vrot.slane %v1413, %v1417
      %v1420 = vpack.i.b16 %v1409, %v1409
      %v1422 = vlaneseq
      %v1423 = vshrl.u32 %v1422, 7
      %v1424 = vsub.s32 1, %v1423
      %v1425 = vrot.slane %v1420, %v1424
      %v1427 = vpack.i.b16 %v1410, %v1410
      %v1429 = vlaneseq
      %v1430 = vshrl.u32 %v1429, 7
      %v1431 = vsub.s32 1, %v1430
      %v1432 = vrot.slane %v1427, %v1431
      %v1434 = vpack.i.b16 %v1411, %v1411
      %v1436 = vlaneseq
      %v1437 = vshrl.u32 %v1436, 7
      %v1438 = vsub.s32 1, %v1437
      %v1439 = vrot.slane %v1434, %v1438
      %v1440 = vmul.bf16 %v417, %v1418
      %v1441 = vmul.bf16 %v418, %v1425
      %v1442 = vmul.bf16 %v419, %v1432
      %v1443 = vmul.bf16 %v426, %v1439
      %v1444 = vshrl.u32 %v1408, 16
      %v1445 = vpack.i.b16 %v1444, %v1444
      %v1447 = vlaneseq
      %v1448 = vshrl.u32 %v1447, 7
      %v1449 = vsub.s32 1, %v1448
      %v1450 = vrot.slane %v1445, %v1449
      %v1451 = vshrl.u32 %v1409, 16
      %v1452 = vpack.i.b16 %v1451, %v1451
      %v1454 = vlaneseq
      %v1455 = vshrl.u32 %v1454, 7
      %v1456 = vsub.s32 1, %v1455
      %v1457 = vrot.slane %v1452, %v1456
      %v1458 = vshrl.u32 %v1410, 16
      %v1459 = vpack.i.b16 %v1458, %v1458
      %v1461 = vlaneseq
      %v1462 = vshrl.u32 %v1461, 7
      %v1463 = vsub.s32 1, %v1462
      %v1464 = vrot.slane %v1459, %v1463
      %v1465 = vshrl.u32 %v1411, 16
      %v1466 = vpack.i.b16 %v1465, %v1465
      %v1468 = vlaneseq
      %v1469 = vshrl.u32 %v1468, 7
      %v1470 = vsub.s32 1, %v1469
      %v1471 = vrot.slane %v1466, %v1470
      %v1472 = vmul.bf16 %v481, %v1450
      %v1473 = vmul.bf16 %v482, %v1457
      %v1474 = vmul.bf16 %v483, %v1464
      %v1475 = vmul.bf16 %v490, %v1471
      %v1476 = vld [vmem:[%s2 + $0x20] sm:$0x44]
      %v1477 = vld [vmem:[%s2 + $0x28] sm:$0x44]
      %v1480 = vunpack.c.l.b16 %v1476
      %v1481 = vunpack.c.h.b16 %v1476
      %v1482 = vunpack.c.l.b16 %v1477
      %v1483 = vunpack.c.h.b16 %v1477
      %v1484 = vpack.c.b16 %v1480, %v1480
      %v1485 = vpack.c.b16 %v1481, %v1481
      %v1486 = vpack.c.b16 %v1482, %v1482
      %v1487 = vpack.c.b16 %v1483, %v1483
      %v1489 = vpack.i.b16 %v1484, %v1484
      %v1491 = vlaneseq
      %v1492 = vshrl.u32 %v1491, 7
      %v1493 = vsub.s32 2, %v1492
      %v1494 = vrot.slane %v1489, %v1493
      %v1496 = vpack.i.b16 %v1485, %v1485
      %v1498 = vlaneseq
      %v1499 = vshrl.u32 %v1498, 7
      %v1500 = vsub.s32 2, %v1499
      %v1501 = vrot.slane %v1496, %v1500
      %v1503 = vpack.i.b16 %v1486, %v1486
      %v1505 = vlaneseq
      %v1506 = vshrl.u32 %v1505, 7
      %v1507 = vsub.s32 2, %v1506
      %v1508 = vrot.slane %v1503, %v1507
      %v1510 = vpack.i.b16 %v1487, %v1487
      %v1512 = vlaneseq
      %v1513 = vshrl.u32 %v1512, 7
      %v1514 = vsub.s32 2, %v1513
      %v1515 = vrot.slane %v1510, %v1514
      %v1516 = vmul.bf16 %v533, %v1494
      %v1517 = vmul.bf16 %v534, %v1501
      %v1518 = vmul.bf16 %v535, %v1508
      %v1519 = vmul.bf16 %v542, %v1515
      %v1520 = vshrl.u32 %v1484, 16
      %v1521 = vpack.i.b16 %v1520, %v1520
      %v1523 = vlaneseq
      %v1524 = vshrl.u32 %v1523, 7
      %v1525 = vsub.s32 2, %v1524
      %v1526 = vrot.slane %v1521, %v1525
      %v1527 = vshrl.u32 %v1485, 16
      %v1528 = vpack.i.b16 %v1527, %v1527
      %v1530 = vlaneseq
      %v1531 = vshrl.u32 %v1530, 7
      %v1532 = vsub.s32 2, %v1531
      %v1533 = vrot.slane %v1528, %v1532
      %v1534 = vshrl.u32 %v1486, 16
      %v1535 = vpack.i.b16 %v1534, %v1534
      %v1537 = vlaneseq
      %v1538 = vshrl.u32 %v1537, 7
      %v1539 = vsub.s32 2, %v1538
      %v1540 = vrot.slane %v1535, %v1539
      %v1541 = vshrl.u32 %v1487, 16
      %v1542 = vpack.i.b16 %v1541, %v1541
      %v1544 = vlaneseq
      %v1545 = vshrl.u32 %v1544, 7
      %v1546 = vsub.s32 2, %v1545
      %v1547 = vrot.slane %v1542, %v1546
      %v1548 = vmul.bf16 %v597, %v1526
      %v1549 = vmul.bf16 %v598, %v1533
      %v1550 = vmul.bf16 %v599, %v1540
      %v1551 = vmul.bf16 %v606, %v1547
      %v1552 = vld [vmem:[%s2 + $0x20] sm:$0x88]
      %v1553 = vld [vmem:[%s2 + $0x28] sm:$0x88]
      %v1556 = vunpack.c.l.b16 %v1552
      %v1557 = vunpack.c.h.b16 %v1552
      %v1558 = vunpack.c.l.b16 %v1553
      %v1559 = vunpack.c.h.b16 %v1553
      %v1560 = vpack.c.b16 %v1556, %v1556
      %v1561 = vpack.c.b16 %v1557, %v1557
      %v1562 = vpack.c.b16 %v1558, %v1558
      %v1563 = vpack.c.b16 %v1559, %v1559
      %v1565 = vpack.i.b16 %v1560, %v1560
      %v1567 = vlaneseq
      %v1568 = vshrl.u32 %v1567, 7
      %v1569 = vsub.s32 3, %v1568
      %v1570 = vrot.slane %v1565, %v1569
      %v1572 = vpack.i.b16 %v1561, %v1561
      %v1574 = vlaneseq
      %v1575 = vshrl.u32 %v1574, 7
      %v1576 = vsub.s32 3, %v1575
      %v1577 = vrot.slane %v1572, %v1576
      %v1579 = vpack.i.b16 %v1562, %v1562
      %v1581 = vlaneseq
      %v1582 = vshrl.u32 %v1581, 7
      %v1583 = vsub.s32 3, %v1582
      %v1584 = vrot.slane %v1579, %v1583
      %v1586 = vpack.i.b16 %v1563, %v1563
      %v1588 = vlaneseq
      %v1589 = vshrl.u32 %v1588, 7
      %v1590 = vsub.s32 3, %v1589
      %v1591 = vrot.slane %v1586, %v1590
      %v1592 = vmul.bf16 %v649, %v1570
      %v1593 = vmul.bf16 %v650, %v1577
      %v1594 = vmul.bf16 %v651, %v1584
      %v1595 = vmul.bf16 %v658, %v1591
      %v1596 = vshrl.u32 %v1560, 16
      %v1597 = vpack.i.b16 %v1596, %v1596
      %v1599 = vlaneseq
      %v1600 = vshrl.u32 %v1599, 7
      %v1601 = vsub.s32 3, %v1600
      %v1602 = vrot.slane %v1597, %v1601
      %v1603 = vshrl.u32 %v1561, 16
      %v1604 = vpack.i.b16 %v1603, %v1603
      %v1606 = vlaneseq
      %v1607 = vshrl.u32 %v1606, 7
      %v1608 = vsub.s32 3, %v1607
      %v1609 = vrot.slane %v1604, %v1608
      %v1610 = vshrl.u32 %v1562, 16
      %v1611 = vpack.i.b16 %v1610, %v1610
      %v1613 = vlaneseq
      %v1614 = vshrl.u32 %v1613, 7
      %v1615 = vsub.s32 3, %v1614
      %v1616 = vrot.slane %v1611, %v1615
      %v1617 = vshrl.u32 %v1563, 16
      %v1618 = vpack.i.b16 %v1617, %v1617
      %v1620 = vlaneseq
      %v1621 = vshrl.u32 %v1620, 7
      %v1622 = vsub.s32 3, %v1621
      %v1623 = vrot.slane %v1618, %v1622
      %v1624 = vmul.bf16 %v713, %v1602
      %v1625 = vmul.bf16 %v714, %v1609
      %v1626 = vmul.bf16 %v715, %v1616
      %v1627 = vmul.bf16 %v722, %v1623
      %v1628 = vld [vmem:[%s2 + $0x30] sm:$0x11]
      %v1629 = vld [vmem:[%s2 + $0x38] sm:$0x11]
      %v1632 = vunpack.c.l.b16 %v1628
      %v1633 = vunpack.c.h.b16 %v1628
      %v1634 = vunpack.c.l.b16 %v1629
      %v1635 = vunpack.c.h.b16 %v1629
      %v1636 = vpack.c.b16 %v1632, %v1632
      %v1637 = vpack.c.b16 %v1633, %v1633
      %v1638 = vpack.c.b16 %v1634, %v1634
      %v1639 = vpack.c.b16 %v1635, %v1635
      %v1641 = vpack.i.b16 %v1636, %v1636
      %v1643 = vlaneseq
      %v1644 = vshrl.u32 %v1643, 7
      %v1645 = vsub.s32 0, %v1644
      %v1646 = vrot.slane %v1641, %v1645
      %v1648 = vpack.i.b16 %v1637, %v1637
      %v1650 = vlaneseq
      %v1651 = vshrl.u32 %v1650, 7
      %v1652 = vsub.s32 0, %v1651
      %v1653 = vrot.slane %v1648, %v1652
      %v1655 = vpack.i.b16 %v1638, %v1638
      %v1657 = vlaneseq
      %v1658 = vshrl.u32 %v1657, 7
      %v1659 = vsub.s32 0, %v1658
      %v1660 = vrot.slane %v1655, %v1659
      %v1662 = vpack.i.b16 %v1639, %v1639
      %v1664 = vlaneseq
      %v1665 = vshrl.u32 %v1664, 7
      %v1666 = vsub.s32 0, %v1665
      %v1667 = vrot.slane %v1662, %v1666
      %v1668 = vmul.bf16 %v765, %v1646
      %v1669 = vmul.bf16 %v766, %v1653
      %v1670 = vmul.bf16 %v767, %v1660
      %v1671 = vmul.bf16 %v774, %v1667
      %v1672 = vshrl.u32 %v1636, 16
      %v1673 = vpack.i.b16 %v1672, %v1672
      %v1675 = vlaneseq
      %v1676 = vshrl.u32 %v1675, 7
      %v1677 = vsub.s32 0, %v1676
      %v1678 = vrot.slane %v1673, %v1677
      %v1679 = vshrl.u32 %v1637, 16
      %v1680 = vpack.i.b16 %v1679, %v1679
      %v1682 = vlaneseq
      %v1683 = vshrl.u32 %v1682, 7
      %v1684 = vsub.s32 0, %v1683
      %v1685 = vrot.slane %v1680, %v1684
      %v1686 = vshrl.u32 %v1638, 16
      %v1687 = vpack.i.b16 %v1686, %v1686
      %v1689 = vlaneseq
      %v1690 = vshrl.u32 %v1689, 7
      %v1691 = vsub.s32 0, %v1690
      %v1692 = vrot.slane %v1687, %v1691
      %v1693 = vshrl.u32 %v1639, 16
      %v1694 = vpack.i.b16 %v1693, %v1693
      %v1696 = vlaneseq
      %v1697 = vshrl.u32 %v1696, 7
      %v1698 = vsub.s32 0, %v1697
      %v1699 = vrot.slane %v1694, %v1698
      %v1700 = vmul.bf16 %v829, %v1678
      %v1701 = vmul.bf16 %v830, %v1685
      %v1702 = vmul.bf16 %v831, %v1692
      %v1703 = vmul.bf16 %v838, %v1699
      %v1704 = vld [vmem:[%s2 + $0x30] sm:$0x22]
      %v1705 = vld [vmem:[%s2 + $0x38] sm:$0x22]
      %v1708 = vunpack.c.l.b16 %v1704
      %v1709 = vunpack.c.h.b16 %v1704
      %v1710 = vunpack.c.l.b16 %v1705
      %v1711 = vunpack.c.h.b16 %v1705
      %v1712 = vpack.c.b16 %v1708, %v1708
      %v1713 = vpack.c.b16 %v1709, %v1709
      %v1714 = vpack.c.b16 %v1710, %v1710
      %v1715 = vpack.c.b16 %v1711, %v1711
      %v1717 = vpack.i.b16 %v1712, %v1712
      %v1719 = vlaneseq
      %v1720 = vshrl.u32 %v1719, 7
      %v1721 = vsub.s32 1, %v1720
      %v1722 = vrot.slane %v1717, %v1721
      %v1724 = vpack.i.b16 %v1713, %v1713
      %v1726 = vlaneseq
      %v1727 = vshrl.u32 %v1726, 7
      %v1728 = vsub.s32 1, %v1727
      %v1729 = vrot.slane %v1724, %v1728
      %v1731 = vpack.i.b16 %v1714, %v1714
      %v1733 = vlaneseq
      %v1734 = vshrl.u32 %v1733, 7
      %v1735 = vsub.s32 1, %v1734
      %v1736 = vrot.slane %v1731, %v1735
      %v1738 = vpack.i.b16 %v1715, %v1715
      %v1740 = vlaneseq
      %v1741 = vshrl.u32 %v1740, 7
      %v1742 = vsub.s32 1, %v1741
      %v1743 = vrot.slane %v1738, %v1742
      %v1744 = vmul.bf16 %v881, %v1722
      %v1745 = vmul.bf16 %v882, %v1729
      %v1746 = vmul.bf16 %v883, %v1736
      %v1747 = vmul.bf16 %v890, %v1743
      %v1752 = vld [vmem:[%s1] sm:$0xff]
      %v1753 = vld [vmem:[%s1 + $0x8] sm:$0xff]
      %v1754 = vld [vmem:[%s1 + $0x10] sm:$0xff]
      %v1755 = vld [vmem:[%s1 + $0x18] sm:$0xff]
      %v1756 = vld [vmem:[%s1 + $0x20] sm:$0xff]
      %v1757 = vld [vmem:[%s1 + $0x28] sm:$0xff]
      %v1758 = vld [vmem:[%s1 + $0x30] sm:$0xff]
      %v1759 = vld [vmem:[%s1 + $0x38] sm:$0xff]
      %v1768 = vunpack.c.l.b16 %v1752
      %v1769 = vunpack.c.h.b16 %v1752
      %v1770 = vunpack.c.l.b16 %v1753
      %v1771 = vunpack.c.h.b16 %v1753
      %v1772 = vunpack.c.l.b16 %v1754
      %v1773 = vunpack.c.h.b16 %v1754
      %v1774 = vunpack.c.l.b16 %v1755
      %v1775 = vunpack.c.h.b16 %v1755
      %v1776 = vunpack.c.l.b16 %v1756
      %v1777 = vunpack.c.h.b16 %v1756
      %v1778 = vunpack.c.l.b16 %v1757
      %v1779 = vunpack.c.h.b16 %v1757
      %v1780 = vunpack.c.l.b16 %v1758
      %v1781 = vunpack.c.h.b16 %v1758
      %v1782 = vunpack.c.l.b16 %v1759
      %v1783 = vunpack.c.h.b16 %v1759
      %v1784 = vpack.c.b16 %v1772, %v1768
      %v1785 = vpack.c.b16 %v1773, %v1769
      %v1786 = vpack.c.b16 %v1774, %v1770
      %v1787 = vpack.c.b16 %v1775, %v1771
      %v1788 = vpack.c.b16 %v1780, %v1776
      %v1789 = vpack.c.b16 %v1781, %v1777
      %v1790 = vpack.c.b16 %v1782, %v1778
      %v1791 = vpack.c.b16 %v1783, %v1779
      %1800 = vmatprep.subr.bf16.mxu0 %v469
      %1801 = vmatpush1.bf16.msra.mxu0 %v468
      %1802 = vmatprep.subr.bf16.mxu0 %v521
      %1803 = vmatpush1.bf16.msra.mxu0 %v520
      %1804 = vmatprep.subr.bf16.mxu0 %v585
      %1805 = vmatpush1.bf16.msra.mxu0 %v584
      %1806 = vmatprep.subr.bf16.mxu0 %v637
      %1807 = vmatpush1.bf16.msra.mxu0 %v636
      %1808 = vmatprep.subr.bf16.mxu0 %v701
      %1809 = vmatpush1.bf16.msra.mxu0 %v700
      %1810 = vmatprep.subr.bf16.mxu0 %v753
      %1811 = vmatpush1.bf16.msra.mxu0 %v752
      %1812 = vmatprep.subr.bf16.mxu0 %v817
      %1813 = vmatpush1.bf16.msra.mxu0 %v816
      %1814 = vmatprep.subr.bf16.mxu0 %v869
      %1815 = vmatpush1.bf16.msra.mxu0 %v868
      %1816 = vmatprep.subr.bf16.mxu0 %v933
      %1817 = vmatpush1.bf16.msra.mxu0 %v932
      %1818 = vmatprep.subr.bf16.mxu0 %v985
      %1819 = vmatpush1.bf16.msra.mxu0 %v984
      %1820 = vmatprep.subr.bf16.mxu0 %v1049
      %1821 = vmatpush1.bf16.msra.mxu0 %v1048
      %1822 = vmatprep.subr.bf16.mxu0 %v1101
      %1823 = vmatpush1.bf16.msra.mxu0 %v1100
      %1824 = vmatprep.subr.bf16.mxu0 %v1165
      %1825 = vmatpush1.bf16.msra.mxu0 %v1164
      %1826 = vmatprep.subr.bf16.mxu0 %v408
      %1827 = vmatpush1.bf16.msra.mxu0 %v407
      %1828 = vmatprep.subr.bf16.mxu0 %v1229
      %1829 = vmatpush1.bf16.msra.mxu0 %v1228
      %1830 = vmatprep.subr.bf16.mxu0 %v1281
      %1831 = vmatpush1.bf16.msra.mxu0 %v1280
      %1832 = vmatprep.mubr.bf16.mxu0 %v1785
      %1833 = vmatmul.mubr.bf16.gmra.mrb[0].mxu0 %v1784
      %v1834 = vpop.f32.mrb[0].mxu0
      %v1835 = vadd.f32 0.0, %v1834
      %v1836 = vpop.f32.mrb[0].mxu0
      %v1837 = vadd.f32 0.0, %v1836
      %v1838 = vpop.f32.mrb[0].mxu0
      %v1839 = vadd.f32 0.0, %v1838
      %v1840 = vpop.f32.mrb[0].mxu0
      %v1841 = vadd.f32 0.0, %v1840
      %1842 = vmatprep.mubr.bf16.mxu0 %v1789
      %1843 = vmatmul.mubr.bf16.gmra.mrb[0].mxu0 %v1788
      %v1844 = vpop.f32.mrb[0].mxu0
      %v1845 = vadd.f32 0.0, %v1844
      %v1846 = vpop.f32.mrb[0].mxu0
      %v1847 = vadd.f32 0.0, %v1846
      %v1848 = vpop.f32.mrb[0].mxu0
      %v1849 = vadd.f32 0.0, %v1848
      %v1850 = vpop.f32.mrb[0].mxu0
      %v1851 = vadd.f32 0.0, %v1850
      %1852 = vdwg.mxu0
      %1853 = vmatprep.subr.bf16.mxu0 %v1345
      %1854 = vmatpush1.bf16.msra.mxu0 %v1344
      %1855 = vmatprep.subr.bf16.mxu0 %v1397
      %1856 = vmatpush1.bf16.msra.mxu0 %v1396
      %1857 = vmatprep.subr.bf16.mxu0 %v1441
      %1858 = vmatpush1.bf16.msra.mxu0 %v1440
      %1859 = vmatprep.subr.bf16.mxu0 %v1473
      %1860 = vmatpush1.bf16.msra.mxu0 %v1472
      %1861 = vmatprep.subr.bf16.mxu0 %v1517
      %1862 = vmatpush1.bf16.msra.mxu0 %v1516
      %1863 = vmatprep.subr.bf16.mxu0 %v1549
      %1864 = vmatpush1.bf16.msra.mxu0 %v1548
      %1865 = vmatprep.subr.bf16.mxu0 %v1593
      %1866 = vmatpush1.bf16.msra.mxu0 %v1592
      %1867 = vmatprep.subr.bf16.mxu0 %v1625
      %1868 = vmatpush1.bf16.msra.mxu0 %v1624
      %1869 = vmatprep.subr.bf16.mxu0 %v1669
      %1870 = vmatpush1.bf16.msra.mxu0 %v1668
      %1871 = vmatprep.subr.bf16.mxu0 %v1701
      %1872 = vmatpush1.bf16.msra.mxu0 %v1700
      %1873 = vmatprep.subr.bf16.mxu0 %v1745
      %1874 = vmatpush1.bf16.msra.mxu0 %v1744
      %1875 = vmatprep.subr.bf16.mxu0 0
      %1876 = vmatpush1.bf16.msra.mxu0 0
      %1877 = vmatprep.subr.bf16.mxu0 0
      %1878 = vmatpush1.bf16.msra.mxu0 0
      %1879 = vmatprep.subr.bf16.mxu0 0
      %1880 = vmatpush1.bf16.msra.mxu0 0
      %1881 = vmatprep.subr.bf16.mxu0 0
      %1882 = vmatpush1.bf16.msra.mxu0 0
      %1883 = vmatprep.subr.bf16.mxu0 0
      %1884 = vmatpush1.bf16.msra.mxu0 0
      %1885 = vmatprep.mubr.bf16.mxu0 %v1787
      %1886 = vmatmul.mubr.bf16.gmra.mrb[0].mxu0 %v1786
      %v1887 = vpop.f32.mrb[0].mxu0
      %v1888 = vadd.f32 %v1835, %v1887
      %v1889 = vpop.f32.mrb[0].mxu0
      %v1890 = vadd.f32 %v1837, %v1889
      %v1891 = vpop.f32.mrb[0].mxu0
      %v1892 = vadd.f32 %v1839, %v1891
      %v1893 = vpop.f32.mrb[0].mxu0
      %v1894 = vadd.f32 %v1841, %v1893
      %1895 = vmatprep.mubr.bf16.mxu0 %v1791
      %1896 = vmatmul.mubr.bf16.gmra.mrb[0].mxu0 %v1790
      %v1897 = vpop.f32.mrb[0].mxu0
      %v1898 = vadd.f32 %v1845, %v1897
      %v1899 = vpop.f32.mrb[0].mxu0
      %v1900 = vadd.f32 %v1847, %v1899
      %v1901 = vpop.f32.mrb[0].mxu0
      %v1902 = vadd.f32 %v1849, %v1901
      %v1903 = vpop.f32.mrb[0].mxu0
      %v1904 = vadd.f32 %v1851, %v1903
      %1905 = vdwg.mxu0
      %1906 = vmatprep.subr.bf16.mxu0 %v471
      %1907 = vmatpush1.bf16.msra.mxu0 %v470
      %1908 = vmatprep.subr.bf16.mxu0 %v523
      %1909 = vmatpush1.bf16.msra.mxu0 %v522
      %1910 = vmatprep.subr.bf16.mxu0 %v587
      %1911 = vmatpush1.bf16.msra.mxu0 %v586
      %1912 = vmatprep.subr.bf16.mxu0 %v639
      %1913 = vmatpush1.bf16.msra.mxu0 %v638
      %1914 = vmatprep.subr.bf16.mxu0 %v703
      %1915 = vmatpush1.bf16.msra.mxu0 %v702
      %1916 = vmatprep.subr.bf16.mxu0 %v755
      %1917 = vmatpush1.bf16.msra.mxu0 %v754
      %1918 = vmatprep.subr.bf16.mxu0 %v819
      %1919 = vmatpush1.bf16.msra.mxu0 %v818
      %1920 = vmatprep.subr.bf16.mxu0 %v871
      %1921 = vmatpush1.bf16.msra.mxu0 %v870
      %1922 = vmatprep.subr.bf16.mxu0 %v935
      %1923 = vmatpush1.bf16.msra.mxu0 %v934
      %1924 = vmatprep.subr.bf16.mxu0 %v987
      %1925 = vmatpush1.bf16.msra.mxu0 %v986
      %1926 = vmatprep.subr.bf16.mxu0 %v1051
      %1927 = vmatpush1.bf16.msra.mxu0 %v1050
      %1928 = vmatprep.subr.bf16.mxu0 %v1103
      %1929 = vmatpush1.bf16.msra.mxu0 %v1102
      %1930 = vmatprep.subr.bf16.mxu0 %v1167
      %1931 = vmatpush1.bf16.msra.mxu0 %v1166
      %1932 = vmatprep.subr.bf16.mxu0 %v396
      %1933 = vmatpush1.bf16.msra.mxu0 %v409
      %1934 = vmatprep.subr.bf16.mxu0 %v1231
      %1935 = vmatpush1.bf16.msra.mxu0 %v1230
      %1936 = vmatprep.subr.bf16.mxu0 %v1283
      %1937 = vmatpush1.bf16.msra.mxu0 %v1282
      %1938 = vmatprep.mubr.bf16.mxu0 %v1785
      %1939 = vmatmul.mubr.bf16.gmra.mrb[0].mxu0 %v1784
      %v1940 = vpop.f32.mrb[0].mxu0
      %v1941 = vadd.f32 0.0, %v1940
      %v1942 = vpop.f32.mrb[0].mxu0
      %v1943 = vadd.f32 0.0, %v1942
      %v1944 = vpop.f32.mrb[0].mxu0
      %v1945 = vadd.f32 0.0, %v1944
      %v1946 = vpop.f32.mrb[0].mxu0
      %v1947 = vadd.f32 0.0, %v1946
      %1948 = vmatprep.mubr.bf16.mxu0 %v1789
      %1949 = vmatmul.mubr.bf16.gmra.mrb[0].mxu0 %v1788
      %v1950 = vpop.f32.mrb[0].mxu0
      %v1951 = vadd.f32 0.0, %v1950
      %v1952 = vpop.f32.mrb[0].mxu0
      %v1953 = vadd.f32 0.0, %v1952
      %v1954 = vpop.f32.mrb[0].mxu0
      %v1955 = vadd.f32 0.0, %v1954
      %v1956 = vpop.f32.mrb[0].mxu0
      %v1957 = vadd.f32 0.0, %v1956
      %1958 = vdwg.mxu0
      %1959 = vmatprep.subr.bf16.mxu0 %v1347
      %1960 = vmatpush1.bf16.msra.mxu0 %v1346
      %1961 = vmatprep.subr.bf16.mxu0 %v1399
      %1962 = vmatpush1.bf16.msra.mxu0 %v1398
      %1963 = vmatprep.subr.bf16.mxu0 %v1443
      %1964 = vmatpush1.bf16.msra.mxu0 %v1442
      %1965 = vmatprep.subr.bf16.mxu0 %v1475
      %1966 = vmatpush1.bf16.msra.mxu0 %v1474
      %1967 = vmatprep.subr.bf16.mxu0 %v1519
      %1968 = vmatpush1.bf16.msra.mxu0 %v1518
      %1969 = vmatprep.subr.bf16.mxu0 %v1551
      %1970 = vmatpush1.bf16.msra.mxu0 %v1550
      %1971 = vmatprep.subr.bf16.mxu0 %v1595
      %1972 = vmatpush1.bf16.msra.mxu0 %v1594
      %1973 = vmatprep.subr.bf16.mxu0 %v1627
      %1974 = vmatpush1.bf16.msra.mxu0 %v1626
      %1975 = vmatprep.subr.bf16.mxu0 %v1671
      %1976 = vmatpush1.bf16.msra.mxu0 %v1670
      %1977 = vmatprep.subr.bf16.mxu0 %v1703
      %1978 = vmatpush1.bf16.msra.mxu0 %v1702
      %1979 = vmatprep.subr.bf16.mxu0 %v1747
      %1980 = vmatpush1.bf16.msra.mxu0 %v1746
      %1981 = vmatprep.subr.bf16.mxu0 0
      %1982 = vmatpush1.bf16.msra.mxu0 0
      %1983 = vmatprep.subr.bf16.mxu0 0
      %1984 = vmatpush1.bf16.msra.mxu0 0
      %1985 = vmatprep.subr.bf16.mxu0 0
      %1986 = vmatpush1.bf16.msra.mxu0 0
      %1987 = vmatprep.subr.bf16.mxu0 0
      %1988 = vmatpush1.bf16.msra.mxu0 0
      %1989 = vmatprep.subr.bf16.mxu0 0
      %1990 = vmatpush1.bf16.msra.mxu0 0
      %1991 = vmatprep.mubr.bf16.mxu0 %v1787
      %1992 = vmatmul.mubr.bf16.gmra.mrb[0].mxu0 %v1786
      %v1993 = vpop.f32.mrb[0].mxu0
      %v1994 = vadd.f32 %v1941, %v1993
      %v1995 = vpop.f32.mrb[0].mxu0
      %v1996 = vadd.f32 %v1943, %v1995
      %v1997 = vpop.f32.mrb[0].mxu0
      %v1998 = vadd.f32 %v1945, %v1997
      %v1999 = vpop.f32.mrb[0].mxu0
      %v2000 = vadd.f32 %v1947, %v1999
      %2001 = vmatprep.mubr.bf16.mxu0 %v1791
      %2002 = vmatmul.mubr.bf16.gmra.mrb[0].mxu0 %v1790
      %v2003 = vpop.f32.mrb[0].mxu0
      %v2004 = vadd.f32 %v1951, %v2003
      %v2005 = vpop.f32.mrb[0].mxu0
      %v2006 = vadd.f32 %v1953, %v2005
      %v2007 = vpop.f32.mrb[0].mxu0
      %v2008 = vadd.f32 %v1955, %v2007
      %v2009 = vpop.f32.mrb[0].mxu0
      %v2010 = vadd.f32 %v1957, %v2009
      %2011 = vdwg.mxu0
      %v2012 = vld [vmem:[%s3] sm:$0xff]
      %v2013 = vld [vmem:[%s3 + $0x8] sm:$0xff]
      %v2014 = vld [vmem:[%s3 + $0x10] sm:$0xff]
      %v2015 = vld [vmem:[%s3 + $0x18] sm:$0xff]
      %2017 = vset.pattern.permute.xlu0 0
      %2018 = vperm.xlu0 %2017, %v2012
      %v2019 = vpop.permute.xlu0 %2018
      %2022 = vset.pattern.permute.xlu0 0
      %2023 = vperm.xlu0 %2022, %v2013
      %v2024 = vpop.permute.xlu0 %2023
      %2027 = vset.pattern.permute.xlu0 0
      %2028 = vperm.xlu0 %2027, %v2014
      %v2029 = vpop.permute.xlu0 %2028
      %2032 = vset.pattern.permute.xlu0 0
      %2033 = vperm.xlu0 %2032, %v2015
      %v2034 = vpop.permute.xlu0 %2033
      %v2036 = vmul.f32 %v1888, %v2019
      %v2037 = vmul.f32 %v1890, %v2019
      %v2038 = vmul.f32 %v1994, %v2019
      %v2039 = vmul.f32 %v1996, %v2019
      %v2040 = vmul.f32 %v1892, %v2024
      %v2041 = vmul.f32 %v1894, %v2024
      %v2042 = vmul.f32 %v1998, %v2024
      %v2043 = vmul.f32 %v2000, %v2024
      %v2044 = vmul.f32 %v1898, %v2029
      %v2045 = vmul.f32 %v1900, %v2029
      %v2046 = vmul.f32 %v2004, %v2029
      %v2047 = vmul.f32 %v2006, %v2029
      %v2048 = vmul.f32 %v1902, %v2034
      %v2049 = vmul.f32 %v1904, %v2034
      %v2050 = vmul.f32 %v2008, %v2034
      %v2051 = vmul.f32 %v2010, %v2034
      %v2052 = vld [vmem:[%s4] sm:$0xff]
      %v2053 = vld [vmem:[%s4 + $0x8] sm:$0xff]
      %v2054 = vld [vmem:[%s4 + $0x10] sm:$0xff]
      %v2055 = vld [vmem:[%s4 + $0x18] sm:$0xff]
      %2057 = vset.pattern.permute.xlu0 0
      %2058 = vperm.xlu0 %2057, %v2052
      %v2059 = vpop.permute.xlu0 %2058
      %2062 = vset.pattern.permute.xlu0 0
      %2063 = vperm.xlu0 %2062, %v2053
      %v2064 = vpop.permute.xlu0 %2063
      %2067 = vset.pattern.permute.xlu0 0
      %2068 = vperm.xlu0 %2067, %v2054
      %v2069 = vpop.permute.xlu0 %2068
      %2072 = vset.pattern.permute.xlu0 0
      %2073 = vperm.xlu0 %2072, %v2055
      %v2074 = vpop.permute.xlu0 %2073
      %v2076 = vadd.f32 %v2036, %v2059
      %v2077 = vadd.f32 %v2037, %v2059
      %v2078 = vadd.f32 %v2038, %v2059
      %v2079 = vadd.f32 %v2039, %v2059
      %v2080 = vadd.f32 %v2040, %v2064
      %v2081 = vadd.f32 %v2041, %v2064
      %v2082 = vadd.f32 %v2042, %v2064
      %v2083 = vadd.f32 %v2043, %v2064
      %v2084 = vadd.f32 %v2044, %v2069
      %v2085 = vadd.f32 %v2045, %v2069
      %v2086 = vadd.f32 %v2046, %v2069
      %v2087 = vadd.f32 %v2047, %v2069
      %v2088 = vadd.f32 %v2048, %v2074
      %v2089 = vadd.f32 %v2049, %v2074
      %v2090 = vadd.f32 %v2050, %v2074
      %v2091 = vadd.f32 %v2051, %v2074
      %2108 = vrot.lane.b32.xlu0 %v2076, 127
      %v2109 = vpop.permute.xlu0 %2108
      %2110 = vrot.lane.b32.xlu0 %v2077, 127
      %v2111 = vpop.permute.xlu0 %2110
      %2112 = vrot.lane.b32.xlu0 %v2078, 127
      %v2113 = vpop.permute.xlu0 %2112
      %2114 = vrot.lane.b32.xlu0 %v2079, 127
      %v2115 = vpop.permute.xlu0 %2114
      %2116 = vrot.lane.b32.xlu0 %v2080, 127
      %v2117 = vpop.permute.xlu0 %2116
      %2118 = vrot.lane.b32.xlu0 %v2081, 127
      %v2119 = vpop.permute.xlu0 %2118
      %2120 = vrot.lane.b32.xlu0 %v2082, 127
      %v2121 = vpop.permute.xlu0 %2120
      %2122 = vrot.lane.b32.xlu0 %v2083, 127
      %v2123 = vpop.permute.xlu0 %2122
      %2124 = vrot.lane.b32.xlu0 %v2084, 127
      %v2125 = vpop.permute.xlu0 %2124
      %2126 = vrot.lane.b32.xlu0 %v2085, 127
      %v2127 = vpop.permute.xlu0 %2126
      %2128 = vrot.lane.b32.xlu0 %v2086, 127
      %v2129 = vpop.permute.xlu0 %2128
      %2130 = vrot.lane.b32.xlu0 %v2087, 127
      %v2131 = vpop.permute.xlu0 %2130
      %2132 = vrot.lane.b32.xlu0 %v2088, 127
      %v2133 = vpop.permute.xlu0 %2132
      %2134 = vrot.lane.b32.xlu0 %v2089, 127
      %v2135 = vpop.permute.xlu0 %2134
      %2136 = vrot.lane.b32.xlu0 %v2090, 127
      %v2137 = vpop.permute.xlu0 %2136
      %2138 = vrot.lane.b32.xlu0 %v2091, 127
      %v2139 = vpop.permute.xlu0 %2138
      %v2140 = vsel %vm1183, %v2109, %v2111
      %v2141 = vsel %vm1183, %v2111, %v2113
      %v2142 = vsel %vm1183, %v2113, %v2115
      %v2143 = vsel %vm1183, %v2117, %v2119
      %v2144 = vsel %vm1183, %v2119, %v2121
      %v2145 = vsel %vm1183, %v2121, %v2123
      %v2146 = vsel %vm1183, %v2125, %v2127
      %v2147 = vsel %vm1183, %v2127, %v2129
      %v2148 = vsel %vm1183, %v2129, %v2131
      %v2149 = vsel %vm1183, %v2133, %v2135
      %v2150 = vsel %vm1183, %v2135, %v2137
      %v2151 = vsel %vm1183, %v2137, %v2139
      %v2172 = vsel %vm1183, %v2115, %v2109
      %v2173 = vsel %vm1183, %v2123, %v2117
      %v2174 = vsel %vm1183, %v2131, %v2125
      %v2175 = vsel %vm1183, %v2139, %v2133
      %v2176 = vmax.f32 %v2076, %v2140
      %v2177 = vmax.f32 %v2077, %v2141
      %v2178 = vmax.f32 %v2078, %v2142
      %v2179 = vmax.f32 %v2079, %v2172
      %v2180 = vmax.f32 %v2080, %v2143
      %v2181 = vmax.f32 %v2081, %v2144
      %v2182 = vmax.f32 %v2082, %v2145
      %v2183 = vmax.f32 %v2083, %v2173
      %v2184 = vmax.f32 %v2084, %v2146
      %v2185 = vmax.f32 %v2085, %v2147
      %v2186 = vmax.f32 %v2086, %v2148
      %v2187 = vmax.f32 %v2087, %v2174
      %v2188 = vmax.f32 %v2088, %v2149
      %v2189 = vmax.f32 %v2089, %v2150
      %v2190 = vmax.f32 %v2090, %v2151
      %v2191 = vmax.f32 %v2091, %v2175
      %2208 = vrot.lane.b32.xlu0 %v2176, 120
      %v2209 = vpop.permute.xlu0 %2208
      %2210 = vrot.lane.b32.xlu0 %v2177, 120
      %v2211 = vpop.permute.xlu0 %2210
      %2212 = vrot.lane.b32.xlu0 %v2178, 120
      %v2213 = vpop.permute.xlu0 %2212
      %2214 = vrot.lane.b32.xlu0 %v2179, 120
      %v2215 = vpop.permute.xlu0 %2214
      %2216 = vrot.lane.b32.xlu0 %v2180, 120
      %v2217 = vpop.permute.xlu0 %2216
      %2218 = vrot.lane.b32.xlu0 %v2181, 120
      %v2219 = vpop.permute.xlu0 %2218
      %2220 = vrot.lane.b32.xlu0 %v2182, 120
      %v2221 = vpop.permute.xlu0 %2220
      %2222 = vrot.lane.b32.xlu0 %v2183, 120
      %v2223 = vpop.permute.xlu0 %2222
      %2224 = vrot.lane.b32.xlu0 %v2184, 120
      %v2225 = vpop.permute.xlu0 %2224
      %2226 = vrot.lane.b32.xlu0 %v2185, 120
      %v2227 = vpop.permute.xlu0 %2226
      %2228 = vrot.lane.b32.xlu0 %v2186, 120
      %v2229 = vpop.permute.xlu0 %2228
      %2230 = vrot.lane.b32.xlu0 %v2187, 120
      %v2231 = vpop.permute.xlu0 %2230
      %2232 = vrot.lane.b32.xlu0 %v2188, 120
      %v2233 = vpop.permute.xlu0 %2232
      %2234 = vrot.lane.b32.xlu0 %v2189, 120
      %v2235 = vpop.permute.xlu0 %2234
      %2236 = vrot.lane.b32.xlu0 %v2190, 120
      %v2237 = vpop.permute.xlu0 %2236
      %2238 = vrot.lane.b32.xlu0 %v2191, 120
      %v2239 = vpop.permute.xlu0 %2238
      %v2240 = vsel %vm1299, %v2209, %v2211
      %v2241 = vsel %vm1299, %v2211, %v2213
      %v2242 = vsel %vm1299, %v2213, %v2215
      %v2243 = vsel %vm1299, %v2217, %v2219
      %v2244 = vsel %vm1299, %v2219, %v2221
      %v2245 = vsel %vm1299, %v2221, %v2223
      %v2246 = vsel %vm1299, %v2225, %v2227
      %v2247 = vsel %vm1299, %v2227, %v2229
      %v2248 = vsel %vm1299, %v2229, %v2231
      %v2249 = vsel %vm1299, %v2233, %v2235
      %v2250 = vsel %vm1299, %v2235, %v2237
      %v2251 = vsel %vm1299, %v2237, %v2239
      %v2272 = vsel %vm1299, %v2215, %v2209
      %v2273 = vsel %vm1299, %v2223, %v2217
      %v2274 = vsel %vm1299, %v2231, %v2225
      %v2275 = vsel %vm1299, %v2239, %v2233
      %v2276 = vmax.f32 %v2176, %v2240
      %v2277 = vmax.f32 %v2177, %v2241
      %v2278 = vmax.f32 %v2178, %v2242
      %v2279 = vmax.f32 %v2179, %v2272
      %v2280 = vmax.f32 %v2180, %v2243
      %v2281 = vmax.f32 %v2181, %v2244
      %v2282 = vmax.f32 %v2182, %v2245
      %v2283 = vmax.f32 %v2183, %v2273
      %v2284 = vmax.f32 %v2184, %v2246
      %v2285 = vmax.f32 %v2185, %v2247
      %v2286 = vmax.f32 %v2186, %v2248
      %v2287 = vmax.f32 %v2187, %v2274
      %v2288 = vmax.f32 %v2188, %v2249
      %v2289 = vmax.f32 %v2189, %v2250
      %v2290 = vmax.f32 %v2190, %v2251
      %v2291 = vmax.f32 %v2191, %v2275
      %2308 = vrot.lane.b32.xlu0 %v2276, 64
      %v2309 = vpop.permute.xlu0 %2308
      %2310 = vrot.lane.b32.xlu0 %v2277, 64
      %v2311 = vpop.permute.xlu0 %2310
      %2312 = vrot.lane.b32.xlu0 %v2278, 64
      %v2313 = vpop.permute.xlu0 %2312
      %2314 = vrot.lane.b32.xlu0 %v2279, 64
      %v2315 = vpop.permute.xlu0 %2314
      %2316 = vrot.lane.b32.xlu0 %v2280, 64
      %v2317 = vpop.permute.xlu0 %2316
      %2318 = vrot.lane.b32.xlu0 %v2281, 64
      %v2319 = vpop.permute.xlu0 %2318
      %2320 = vrot.lane.b32.xlu0 %v2282, 64
      %v2321 = vpop.permute.xlu0 %2320
      %2322 = vrot.lane.b32.xlu0 %v2283, 64
      %v2323 = vpop.permute.xlu0 %2322
      %2324 = vrot.lane.b32.xlu0 %v2284, 64
      %v2325 = vpop.permute.xlu0 %2324
      %2326 = vrot.lane.b32.xlu0 %v2285, 64
      %v2327 = vpop.permute.xlu0 %2326
      %2328 = vrot.lane.b32.xlu0 %v2286, 64
      %v2329 = vpop.permute.xlu0 %2328
      %2330 = vrot.lane.b32.xlu0 %v2287, 64
      %v2331 = vpop.permute.xlu0 %2330
      %2332 = vrot.lane.b32.xlu0 %v2288, 64
      %v2333 = vpop.permute.xlu0 %2332
      %2334 = vrot.lane.b32.xlu0 %v2289, 64
      %v2335 = vpop.permute.xlu0 %2334
      %2336 = vrot.lane.b32.xlu0 %v2290, 64
      %v2337 = vpop.permute.xlu0 %2336
      %2338 = vrot.lane.b32.xlu0 %v2291, 64
      %v2339 = vpop.permute.xlu0 %2338
      %v2340 = vsel %vm655, %v2309, %v2311
      %v2341 = vsel %vm655, %v2311, %v2313
      %v2342 = vsel %vm655, %v2313, %v2315
      %v2343 = vsel %vm655, %v2317, %v2319
      %v2344 = vsel %vm655, %v2319, %v2321
      %v2345 = vsel %vm655, %v2321, %v2323
      %v2346 = vsel %vm655, %v2325, %v2327
      %v2347 = vsel %vm655, %v2327, %v2329
      %v2348 = vsel %vm655, %v2329, %v2331
      %v2349 = vsel %vm655, %v2333, %v2335
      %v2350 = vsel %vm655, %v2335, %v2337
      %v2351 = vsel %vm655, %v2337, %v2339
      %v2372 = vsel %vm655, %v2315, %v2309
      %v2373 = vsel %vm655, %v2323, %v2317
      %v2374 = vsel %vm655, %v2331, %v2325
      %v2375 = vsel %vm655, %v2339, %v2333
      %v2376 = vmax.f32 %v2276, %v2340
      %v2377 = vmax.f32 %v2277, %v2341
      %v2378 = vmax.f32 %v2278, %v2342
      %v2379 = vmax.f32 %v2279, %v2372
      %v2380 = vmax.f32 %v2280, %v2343
      %v2381 = vmax.f32 %v2281, %v2344
      %v2382 = vmax.f32 %v2282, %v2345
      %v2383 = vmax.f32 %v2283, %v2373
      %v2384 = vmax.f32 %v2284, %v2346
      %v2385 = vmax.f32 %v2285, %v2347
      %v2386 = vmax.f32 %v2286, %v2348
      %v2387 = vmax.f32 %v2287, %v2374
      %v2388 = vmax.f32 %v2288, %v2349
      %v2389 = vmax.f32 %v2289, %v2350
      %v2390 = vmax.f32 %v2290, %v2351
      %v2391 = vmax.f32 %v2291, %v2375
      %v2392 = vpack.c.bf16 %v2380, %v2376
      %v2393 = vpack.c.bf16 %v2381, %v2377
      %v2394 = vpack.c.bf16 %v2382, %v2378
      %v2395 = vpack.c.bf16 %v2383, %v2379
      %v2396 = vpack.c.bf16 %v2388, %v2384
      %v2397 = vpack.c.bf16 %v2389, %v2385
      %v2398 = vpack.c.bf16 %v2390, %v2386
      %v2399 = vpack.c.bf16 %v2391, %v2387
      %v2400 = vld [vmem:[%s5] sm:$0xf]
      %v2401 = vld [vmem:[%s5 + $0x4] sm:$0xf]
      %v2402 = vld [vmem:[%s5 + $0x8] sm:$0xf]
      %v2403 = vld [vmem:[%s5 + $0xc] sm:$0xf]
      %v2404 = vld [vmem:[%s5 + $0x10] sm:$0xf]
      %v2405 = vld [vmem:[%s5 + $0x14] sm:$0xf]
      %v2406 = vld [vmem:[%s5 + $0x18] sm:$0xf]
      %v2407 = vld [vmem:[%s5 + $0x1c] sm:$0xf]
      %v2408 = vld [vmem:[%s5 + $0x20] sm:$0xf]
      %v2409 = vld [vmem:[%s5 + $0x24] sm:$0xf]
      %v2410 = vld [vmem:[%s5 + $0x28] sm:$0xf]
      %v2411 = vld [vmem:[%s5 + $0x2c] sm:$0xf]
      %v2412 = vld [vmem:[%s5 + $0x30] sm:$0xf]
      %v2413 = vld [vmem:[%s5 + $0x34] sm:$0xf]
      %v2414 = vld [vmem:[%s5 + $0x38] sm:$0xf]
      %v2415 = vld [vmem:[%s5 + $0x3c] sm:$0xf]
      %v2416 = vld [vmem:[%s5 + $0x40] sm:$0xf]
      %v2417 = vld [vmem:[%s5 + $0x44] sm:$0xf]
      %v2418 = vld [vmem:[%s5 + $0x48] sm:$0xf]
      %v2419 = vld [vmem:[%s5 + $0x4c] sm:$0xf]
      %v2420 = vld [vmem:[%s5 + $0x50] sm:$0xf]
      %v2421 = vld [vmem:[%s5 + $0x54] sm:$0xf]
      %v2422 = vld [vmem:[%s5 + $0x58] sm:$0xf]
      %v2423 = vld [vmem:[%s5 + $0x5c] sm:$0xf]
      %v2424 = vld [vmem:[%s5 + $0x60] sm:$0xf]
      %v2425 = vld [vmem:[%s5 + $0x64] sm:$0xf]
      %v2426 = vld [vmem:[%s5 + $0x68] sm:$0xf]
      %v2427 = vld [vmem:[%s5 + $0x6c] sm:$0xf]
      %v2428 = vld [vmem:[%s5 + $0x70] sm:$0xf]
      %v2429 = vld [vmem:[%s5 + $0x74] sm:$0xf]
      %v2430 = vld [vmem:[%s5 + $0x78] sm:$0xf]
      %v2431 = vld [vmem:[%s5 + $0x7c] sm:$0xf]
      %v2432 = vld [vmem:[%s5 + $0x80] sm:$0xf]
      %v2433 = vld [vmem:[%s5 + $0x84] sm:$0xf]
      %v2434 = vld [vmem:[%s5 + $0x88] sm:$0xf]
      %v2435 = vld [vmem:[%s5 + $0x8c] sm:$0xf]
      %v2436 = vld [vmem:[%s5 + $0x90] sm:$0xf]
      %v2437 = vld [vmem:[%s5 + $0x94] sm:$0xf]
      %v2438 = vld [vmem:[%s5 + $0x98] sm:$0xf]
      %v2439 = vld [vmem:[%s5 + $0x9c] sm:$0xf]
      %v2440 = vld [vmem:[%s5 + $0xa0] sm:$0xf]
      %v2441 = vld [vmem:[%s5 + $0xa4] sm:$0xf]
      %v2442 = vld [vmem:[%s5 + $0xa8] sm:$0xf]
      %v2443 = vld [vmem:[%s5 + $0xac] sm:$0xf]
      %v2444 = vld [vmem:[%s5 + $0xb0] sm:$0xf]
      %v2445 = vld [vmem:[%s5 + $0xb4] sm:$0xf]
      %v2446 = vld [vmem:[%s5 + $0xb8] sm:$0xf]
      %v2447 = vld [vmem:[%s5 + $0xbc] sm:$0xf]
      %v2448 = vld [vmem:[%s5 + $0xc0] sm:$0xf]
      %v2449 = vld [vmem:[%s5 + $0xc4] sm:$0xf]
      %v2450 = vld [vmem:[%s5 + $0xc8] sm:$0xf]
      %v2451 = vld [vmem:[%s5 + $0xcc] sm:$0xf]
      %v2452 = vld [vmem:[%s5 + $0xd0] sm:$0xf]
      %v2453 = vld [vmem:[%s5 + $0xd4] sm:$0xf]
      %v2454 = vld [vmem:[%s5 + $0xd8] sm:$0xf]
      %v2455 = vld [vmem:[%s5 + $0xdc] sm:$0xf]
      %v2456 = vld [vmem:[%s5 + $0xe0] sm:$0xf]
      %v2457 = vld [vmem:[%s5 + $0xe4] sm:$0xf]
      %v2458 = vld [vmem:[%s5 + $0xe8] sm:$0xf]
      %v2459 = vld [vmem:[%s5 + $0xec] sm:$0xf]
      %v2460 = vld [vmem:[%s5 + $0xf0] sm:$0xf]
      %v2461 = vld [vmem:[%s5 + $0xf4] sm:$0xf]
      %v2462 = vld [vmem:[%s5 + $0xf8] sm:$0xf]
      %v2463 = vld [vmem:[%s5 + $0xfc] sm:$0xf]
      %v2528 = vunpack.c.l.b16 %v2400
      %v2529 = vunpack.c.l.b16 %v2401
      %v2530 = vunpack.c.l.b16 %v2402
      %v2531 = vunpack.c.l.b16 %v2403
      %v2532 = vunpack.c.l.b16 %v2404
      %v2533 = vunpack.c.l.b16 %v2405
      %v2534 = vunpack.c.l.b16 %v2406
      %v2535 = vunpack.c.l.b16 %v2407
      %v2536 = vunpack.c.l.b16 %v2408
      %v2537 = vunpack.c.l.b16 %v2409
      %v2538 = vunpack.c.l.b16 %v2410
      %v2539 = vunpack.c.l.b16 %v2411
      %v2540 = vunpack.c.l.b16 %v2412
      %v2541 = vunpack.c.l.b16 %v2413
      %v2542 = vunpack.c.l.b16 %v2414
      %v2543 = vunpack.c.l.b16 %v2415
      %v2544 = vunpack.c.l.b16 %v2416
      %v2545 = vunpack.c.l.b16 %v2417
      %v2546 = vunpack.c.l.b16 %v2418
      %v2547 = vunpack.c.l.b16 %v2419
      %v2548 = vunpack.c.l.b16 %v2420
      %v2549 = vunpack.c.l.b16 %v2421
      %v2550 = vunpack.c.l.b16 %v2422
      %v2551 = vunpack.c.l.b16 %v2423
      %v2552 = vunpack.c.l.b16 %v2424
      %v2553 = vunpack.c.l.b16 %v2425
      %v2554 = vunpack.c.l.b16 %v2426
      %v2555 = vunpack.c.l.b16 %v2427
      %v2556 = vunpack.c.l.b16 %v2428
      %v2557 = vunpack.c.l.b16 %v2429
      %v2558 = vunpack.c.l.b16 %v2430
      %v2559 = vunpack.c.l.b16 %v2431
      %v2560 = vunpack.c.l.b16 %v2432
      %v2561 = vunpack.c.l.b16 %v2433
      %v2562 = vunpack.c.l.b16 %v2434
      %v2563 = vunpack.c.l.b16 %v2435
      %v2564 = vunpack.c.l.b16 %v2436
      %v2565 = vunpack.c.l.b16 %v2437
      %v2566 = vunpack.c.l.b16 %v2438
      %v2567 = vunpack.c.l.b16 %v2439
      %v2568 = vunpack.c.l.b16 %v2440
      %v2569 = vunpack.c.l.b16 %v2441
      %v2570 = vunpack.c.l.b16 %v2442
      %v2571 = vunpack.c.l.b16 %v2443
      %v2572 = vunpack.c.l.b16 %v2444
      %v2573 = vunpack.c.l.b16 %v2445
      %v2574 = vunpack.c.l.b16 %v2446
      %v2575 = vunpack.c.l.b16 %v2447
      %v2576 = vunpack.c.l.b16 %v2448
      %v2577 = vunpack.c.l.b16 %v2449
      %v2578 = vunpack.c.l.b16 %v2450
      %v2579 = vunpack.c.l.b16 %v2451
      %v2580 = vunpack.c.l.b16 %v2452
      %v2581 = vunpack.c.l.b16 %v2453
      %v2582 = vunpack.c.l.b16 %v2454
      %v2583 = vunpack.c.l.b16 %v2455
      %v2584 = vunpack.c.l.b16 %v2456
      %v2585 = vunpack.c.l.b16 %v2457
      %v2586 = vunpack.c.l.b16 %v2458
      %v2587 = vunpack.c.l.b16 %v2459
      %v2588 = vunpack.c.l.b16 %v2460
      %v2589 = vunpack.c.l.b16 %v2461
      %v2590 = vunpack.c.l.b16 %v2462
      %v2591 = vunpack.c.l.b16 %v2463
      %v2592 = vpack.c.b16 %v2529, %v2528
      %v2593 = vpack.c.b16 %v2531, %v2530
      %v2594 = vpack.c.b16 %v2533, %v2532
      %v2595 = vpack.c.b16 %v2535, %v2534
      %v2596 = vpack.c.b16 %v2537, %v2536
      %v2597 = vpack.c.b16 %v2539, %v2538
      %v2598 = vpack.c.b16 %v2541, %v2540
      %v2599 = vpack.c.b16 %v2543, %v2542
      %v2600 = vpack.c.b16 %v2545, %v2544
      %v2601 = vpack.c.b16 %v2547, %v2546
      %v2602 = vpack.c.b16 %v2549, %v2548
      %v2603 = vpack.c.b16 %v2551, %v2550
      %v2604 = vpack.c.b16 %v2553, %v2552
      %v2605 = vpack.c.b16 %v2555, %v2554
      %v2606 = vpack.c.b16 %v2557, %v2556
      %v2607 = vpack.c.b16 %v2559, %v2558
      %v2608 = vpack.c.b16 %v2561, %v2560
      %v2609 = vpack.c.b16 %v2563, %v2562
      %v2610 = vpack.c.b16 %v2565, %v2564
      %v2611 = vpack.c.b16 %v2567, %v2566
      %v2612 = vpack.c.b16 %v2569, %v2568
      %v2613 = vpack.c.b16 %v2571, %v2570
      %v2614 = vpack.c.b16 %v2573, %v2572
      %v2615 = vpack.c.b16 %v2575, %v2574
      %v2616 = vpack.c.b16 %v2577, %v2576
      %v2617 = vpack.c.b16 %v2579, %v2578
      %v2618 = vpack.c.b16 %v2581, %v2580
      %v2619 = vpack.c.b16 %v2583, %v2582
      %v2620 = vpack.c.b16 %v2585, %v2584
      %v2621 = vpack.c.b16 %v2587, %v2586
      %v2622 = vpack.c.b16 %v2589, %v2588
      %v2623 = vpack.c.b16 %v2591, %v2590
      %2656 = vmatprep.subr.bf16.mxu0 0
      %2657 = vmatpush1.bf16.msra.mxu0 %v2592
      %2658 = vmatprep.subr.bf16.mxu0 0
      %2659 = vmatpush1.bf16.msra.mxu0 %v2593
      %2660 = vmatprep.subr.bf16.mxu0 0
      %2661 = vmatpush1.bf16.msra.mxu0 %v2594
      %2662 = vmatprep.subr.bf16.mxu0 0
      %2663 = vmatpush1.bf16.msra.mxu0 %v2595
      %2664 = vmatprep.subr.bf16.mxu0 0
      %2665 = vmatpush1.bf16.msra.mxu0 %v2596
      %2666 = vmatprep.subr.bf16.mxu0 0
      %2667 = vmatpush1.bf16.msra.mxu0 %v2597
      %2668 = vmatprep.subr.bf16.mxu0 0
      %2669 = vmatpush1.bf16.msra.mxu0 %v2598
      %2670 = vmatprep.subr.bf16.mxu0 0
      %2671 = vmatpush1.bf16.msra.mxu0 %v2599
      %2672 = vmatprep.subr.bf16.mxu0 0
      %2673 = vmatpush1.bf16.msra.mxu0 %v2600
      %2674 = vmatprep.subr.bf16.mxu0 0
      %2675 = vmatpush1.bf16.msra.mxu0 %v2601
      %2676 = vmatprep.subr.bf16.mxu0 0
      %2677 = vmatpush1.bf16.msra.mxu0 %v2602
      %2678 = vmatprep.subr.bf16.mxu0 0
      %2679 = vmatpush1.bf16.msra.mxu0 %v2603
      %2680 = vmatprep.subr.bf16.mxu0 0
      %2681 = vmatpush1.bf16.msra.mxu0 %v2604
      %2682 = vmatprep.subr.bf16.mxu0 0
      %2683 = vmatpush1.bf16.msra.mxu0 %v2605
      %2684 = vmatprep.subr.bf16.mxu0 0
      %2685 = vmatpush1.bf16.msra.mxu0 %v2606
      %2686 = vmatprep.subr.bf16.mxu0 0
      %2687 = vmatpush1.bf16.msra.mxu0 %v2607
      %2688 = vmatprep.mubr.bf16.mxu0 %v2393
      %2689 = vmatmul.mubr.bf16.gmra.mrb[0].mxu0 %v2392
      %v2690 = vpop.f32.mrb[0].mxu0
      %v2691 = vadd.f32 0.0, %v2690
      %v2692 = vpop.f32.mrb[0].mxu0
      %v2693 = vpop.f32.mrb[0].mxu0
      %v2694 = vadd.f32 0.0, %v2693
      %v2695 = vpop.f32.mrb[0].mxu0
      %2696 = vmatprep.mubr.bf16.mxu0 %v2397
      %2697 = vmatmul.mubr.bf16.gmra.mrb[0].mxu0 %v2396
      %v2698 = vpop.f32.mrb[0].mxu0
      %v2699 = vadd.f32 0.0, %v2698
      %v2700 = vpop.f32.mrb[0].mxu0
      %v2701 = vpop.f32.mrb[0].mxu0
      %v2702 = vadd.f32 0.0, %v2701
      %v2703 = vpop.f32.mrb[0].mxu0
      %2704 = vdwg.mxu0
      %2705 = vmatprep.subr.bf16.mxu0 0
      %2706 = vmatpush1.bf16.msra.mxu0 %v2608
      %2707 = vmatprep.subr.bf16.mxu0 0
      %2708 = vmatpush1.bf16.msra.mxu0 %v2609
      %2709 = vmatprep.subr.bf16.mxu0 0
      %2710 = vmatpush1.bf16.msra.mxu0 %v2610
      %2711 = vmatprep.subr.bf16.mxu0 0
      %2712 = vmatpush1.bf16.msra.mxu0 %v2611
      %2713 = vmatprep.subr.bf16.mxu0 0
      %2714 = vmatpush1.bf16.msra.mxu0 %v2612
      %2715 = vmatprep.subr.bf16.mxu0 0
      %2716 = vmatpush1.bf16.msra.mxu0 %v2613
      %2717 = vmatprep.subr.bf16.mxu0 0
      %2718 = vmatpush1.bf16.msra.mxu0 %v2614
      %2719 = vmatprep.subr.bf16.mxu0 0
      %2720 = vmatpush1.bf16.msra.mxu0 %v2615
      %2721 = vmatprep.subr.bf16.mxu0 0
      %2722 = vmatpush1.bf16.msra.mxu0 %v2616
      %2723 = vmatprep.subr.bf16.mxu0 0
      %2724 = vmatpush1.bf16.msra.mxu0 %v2617
      %2725 = vmatprep.subr.bf16.mxu0 0
      %2726 = vmatpush1.bf16.msra.mxu0 %v2618
      %2727 = vmatprep.subr.bf16.mxu0 0
      %2728 = vmatpush1.bf16.msra.mxu0 %v2619
      %2729 = vmatprep.subr.bf16.mxu0 0
      %2730 = vmatpush1.bf16.msra.mxu0 %v2620
      %2731 = vmatprep.subr.bf16.mxu0 0
      %2732 = vmatpush1.bf16.msra.mxu0 %v2621
      %2733 = vmatprep.subr.bf16.mxu0 0
      %2734 = vmatpush1.bf16.msra.mxu0 %v2622
      %2735 = vmatprep.subr.bf16.mxu0 0
      %2736 = vmatpush1.bf16.msra.mxu0 %v2623
      %2737 = vmatprep.mubr.bf16.mxu0 %v2395
      %2738 = vmatmul.mubr.bf16.gmra.mrb[0].mxu0 %v2394
      %v2739 = vpop.f32.mrb[0].mxu0
      %v2740 = vadd.f32 %v2691, %v2739
      %v2741 = vpop.f32.mrb[0].mxu0
      %v2742 = vpop.f32.mrb[0].mxu0
      %v2743 = vadd.f32 %v2694, %v2742
      %v2744 = vpop.f32.mrb[0].mxu0
      %2745 = vmatprep.mubr.bf16.mxu0 %v2399
      %2746 = vmatmul.mubr.bf16.gmra.mrb[0].mxu0 %v2398
      %v2747 = vpop.f32.mrb[0].mxu0
      %v2748 = vadd.f32 %v2699, %v2747
      %v2749 = vpop.f32.mrb[0].mxu0
      %v2750 = vpop.f32.mrb[0].mxu0
      %v2751 = vadd.f32 %v2702, %v2750
      %v2752 = vpop.f32.mrb[0].mxu0
      %2753 = vdwg.mxu0
      %v2754 = vmax.f32 %v2740, 0.0
      %v2755 = vmax.f32 %v2743, 0.0
      %v2756 = vmax.f32 %v2748, 0.0
      %v2757 = vmax.f32 %v2751, 0.0
      %v2758 = vpack.c.bf16 %v2755, %v2754
      %v2759 = vpack.c.bf16 %v2757, %v2756
      %2762 = vrot.lane.b32.xlu0 %v2758, 85
      %v2763 = vpop.permute.xlu0 %2762
      %2764 = vrot.lane.b32.xlu0 %v2759, 85
      %v2765 = vpop.permute.xlu0 %2764
      %2766 = vrot.lane.b32.xlu0 %v2758, 21
      %v2767 = vpop.permute.xlu0 %2766
      %2768 = vrot.lane.b32.xlu0 %v2759, 21
      %v2769 = vpop.permute.xlu0 %2768
      %vm2770 = vcmask 171008
      %v2773 = vsel %vm2770, %v2763, %v2767
      %v2777 = vsel %vm2770, %v2765, %v2769
      %v2779 = vld [vmem:[%s7] sm:$0x1]
      %v2781 = vpack.i.b16 %v2779, %v2779
      %v2783 = vlaneseq
      %v2784 = vshrl.u32 %v2783, 7
      %v2785 = vsub.s32 0, %v2784
      %v2786 = vrot.slane %v2781, %v2785
      %v2787 = vmul.bf16 %v2773, %v2786
      %v2788 = vmul.bf16 %v2777, %v2786
      %2789 = vrot.lane.b32.xlu0 %v2758, 84
      %v2790 = vpop.permute.xlu0 %2789
      %2791 = vrot.lane.b32.xlu0 %v2759, 84
      %v2792 = vpop.permute.xlu0 %2791
      %2793 = vrot.lane.b32.xlu0 %v2758, 20
      %v2794 = vpop.permute.xlu0 %2793
      %2795 = vrot.lane.b32.xlu0 %v2759, 20
      %v2796 = vpop.permute.xlu0 %2795
      %vm2797 = vcmask 162816
      %v2800 = vsel %vm2797, %v2790, %v2794
      %v2804 = vsel %vm2797, %v2792, %v2796
      %v2806 = vshrl.u32 %v2779, 16
      %v2807 = vpack.i.b16 %v2806, %v2806
      %v2809 = vlaneseq
      %v2810 = vshrl.u32 %v2809, 7
      %v2811 = vsub.s32 0, %v2810
      %v2812 = vrot.slane %v2807, %v2811
      %v2813 = vmul.bf16 %v2800, %v2812
      %v2814 = vmul.bf16 %v2804, %v2812
      %2815 = vrot.lane.b32.xlu0 %v2758, 83
      %v2816 = vpop.permute.xlu0 %2815
      %2817 = vrot.lane.b32.xlu0 %v2759, 83
      %v2818 = vpop.permute.xlu0 %2817
      %2819 = vrot.lane.b32.xlu0 %v2758, 19
      %v2820 = vpop.permute.xlu0 %2819
      %2821 = vrot.lane.b32.xlu0 %v2759, 19
      %v2822 = vpop.permute.xlu0 %2821
      %vm2823 = vcmask 154624
      %v2826 = vsel %vm2823, %v2816, %v2820
      %v2830 = vsel %vm2823, %v2818, %v2822
      %v2832 = vld [vmem:[%s7] sm:$0x2]
      %v2834 = vpack.i.b16 %v2832, %v2832
      %v2836 = vlaneseq
      %v2837 = vshrl.u32 %v2836, 7
      %v2838 = vsub.s32 1, %v2837
      %v2839 = vrot.slane %v2834, %v2838
      %v2840 = vmul.bf16 %v2826, %v2839
      %v2841 = vmul.bf16 %v2830, %v2839
      %2842 = vrot.lane.b32.xlu0 %v2758, 81
      %v2843 = vpop.permute.xlu0 %2842
      %2844 = vrot.lane.b32.xlu0 %v2759, 81
      %v2845 = vpop.permute.xlu0 %2844
      %2846 = vrot.lane.b32.xlu0 %v2758, 17
      %v2847 = vpop.permute.xlu0 %2846
      %2848 = vrot.lane.b32.xlu0 %v2759, 17
      %v2849 = vpop.permute.xlu0 %2848
      %vm2850 = vcmask 138240
      %v2853 = vsel %vm2850, %v2843, %v2847
      %v2857 = vsel %vm2850, %v2845, %v2849
      %v2859 = vshrl.u32 %v2832, 16
      %v2860 = vpack.i.b16 %v2859, %v2859
      %v2862 = vlaneseq
      %v2863 = vshrl.u32 %v2862, 7
      %v2864 = vsub.s32 1, %v2863
      %v2865 = vrot.slane %v2860, %v2864
      %v2866 = vmul.bf16 %v2853, %v2865
      %v2867 = vmul.bf16 %v2857, %v2865
      %2868 = vrot.lane.b32.xlu0 %v2758, 80
      %v2869 = vpop.permute.xlu0 %2868
      %2870 = vrot.lane.b32.xlu0 %v2759, 80
      %v2871 = vpop.permute.xlu0 %2870
      %2872 = vrot.lane.b32.xlu0 %v2758, 16
      %v2873 = vpop.permute.xlu0 %2872
      %2874 = vrot.lane.b32.xlu0 %v2759, 16
      %v2875 = vpop.permute.xlu0 %2874
      %vm2876 = vcmask 130048
      %v2879 = vsel %vm2876, %v2869, %v2873
      %v2883 = vsel %vm2876, %v2871, %v2875
      %v2885 = vld [vmem:[%s7] sm:$0x4]
      %v2887 = vpack.i.b16 %v2885, %v2885
      %v2889 = vlaneseq
      %v2890 = vshrl.u32 %v2889, 7
      %v2891 = vsub.s32 2, %v2890
      %v2892 = vrot.slane %v2887, %v2891
      %v2893 = vmul.bf16 %v2879, %v2892
      %v2894 = vmul.bf16 %v2883, %v2892
      %2895 = vrot.lane.b32.xlu0 %v2758, 79
      %v2896 = vpop.permute.xlu0 %2895
      %2897 = vrot.lane.b32.xlu0 %v2759, 79
      %v2898 = vpop.permute.xlu0 %2897
      %2899 = vrot.lane.b32.xlu0 %v2758, 15
      %v2900 = vpop.permute.xlu0 %2899
      %2901 = vrot.lane.b32.xlu0 %v2759, 15
      %v2902 = vpop.permute.xlu0 %2901
      %vm2903 = vcmask 121856
      %v2906 = vsel %vm2903, %v2896, %v2900
      %v2910 = vsel %vm2903, %v2898, %v2902
      %v2912 = vshrl.u32 %v2885, 16
      %v2913 = vpack.i.b16 %v2912, %v2912
      %v2915 = vlaneseq
      %v2916 = vshrl.u32 %v2915, 7
      %v2917 = vsub.s32 2, %v2916
      %v2918 = vrot.slane %v2913, %v2917
      %v2919 = vmul.bf16 %v2906, %v2918
      %v2920 = vmul.bf16 %v2910, %v2918
      %2921 = vrot.lane.b32.xlu0 %v2758, 77
      %v2922 = vpop.permute.xlu0 %2921
      %2923 = vrot.lane.b32.xlu0 %v2759, 77
      %v2924 = vpop.permute.xlu0 %2923
      %2925 = vrot.lane.b32.xlu0 %v2758, 13
      %v2926 = vpop.permute.xlu0 %2925
      %2927 = vrot.lane.b32.xlu0 %v2759, 13
      %v2928 = vpop.permute.xlu0 %2927
      %vm2929 = vcmask 105472
      %v2932 = vsel %vm2929, %v2922, %v2926
      %v2936 = vsel %vm2929, %v2924, %v2928
      %v2938 = vld [vmem:[%s7] sm:$0x8]
      %v2940 = vpack.i.b16 %v2938, %v2938
      %v2942 = vlaneseq
      %v2943 = vshrl.u32 %v2942, 7
      %v2944 = vsub.s32 3, %v2943
      %v2945 = vrot.slane %v2940, %v2944
      %v2946 = vmul.bf16 %v2932, %v2945
      %v2947 = vmul.bf16 %v2936, %v2945
      %2948 = vrot.lane.b32.xlu0 %v2758, 76
      %v2949 = vpop.permute.xlu0 %2948
      %2950 = vrot.lane.b32.xlu0 %v2759, 76
      %v2951 = vpop.permute.xlu0 %2950
      %2952 = vrot.lane.b32.xlu0 %v2758, 12
      %v2953 = vpop.permute.xlu0 %2952
      %2954 = vrot.lane.b32.xlu0 %v2759, 12
      %v2955 = vpop.permute.xlu0 %2954
      %vm2956 = vcmask 97280
      %v2959 = vsel %vm2956, %v2949, %v2953
      %v2963 = vsel %vm2956, %v2951, %v2955
      %v2965 = vshrl.u32 %v2938, 16
      %v2966 = vpack.i.b16 %v2965, %v2965
      %v2968 = vlaneseq
      %v2969 = vshrl.u32 %v2968, 7
      %v2970 = vsub.s32 3, %v2969
      %v2971 = vrot.slane %v2966, %v2970
      %v2972 = vmul.bf16 %v2959, %v2971
      %v2973 = vmul.bf16 %v2963, %v2971
      %2974 = vrot.lane.b32.xlu0 %v2758, 75
      %v2975 = vpop.permute.xlu0 %2974
      %2976 = vrot.lane.b32.xlu0 %v2759, 75
      %v2977 = vpop.permute.xlu0 %2976
      %2978 = vrot.lane.b32.xlu0 %v2758, 11
      %v2979 = vpop.permute.xlu0 %2978
      %2980 = vrot.lane.b32.xlu0 %v2759, 11
      %v2981 = vpop.permute.xlu0 %2980
      %vm2982 = vcmask 89088
      %v2985 = vsel %vm2982, %v2975, %v2979
      %v2989 = vsel %vm2982, %v2977, %v2981
      %v2991 = vld [vmem:[%s7 + $0x4] sm:$0x1]
      %v2993 = vpack.i.b16 %v2991, %v2991
      %v2995 = vlaneseq
      %v2996 = vshrl.u32 %v2995, 7
      %v2997 = vsub.s32 0, %v2996
      %v2998 = vrot.slane %v2993, %v2997
      %v2999 = vmul.bf16 %v2985, %v2998
      %v3000 = vmul.bf16 %v2989, %v2998
      %3001 = vrot.lane.b32.xlu0 %v2758, 69
      %v3002 = vpop.permute.xlu0 %3001
      %3003 = vrot.lane.b32.xlu0 %v2759, 69
      %v3004 = vpop.permute.xlu0 %3003
      %3005 = vrot.lane.b32.xlu0 %v2758, 5
      %v3006 = vpop.permute.xlu0 %3005
      %3007 = vrot.lane.b32.xlu0 %v2759, 5
      %v3008 = vpop.permute.xlu0 %3007
      %vm3009 = vcmask 39936
      %v3012 = vsel %vm3009, %v3002, %v3006
      %v3016 = vsel %vm3009, %v3004, %v3008
      %v3018 = vshrl.u32 %v2991, 16
      %v3019 = vpack.i.b16 %v3018, %v3018
      %v3021 = vlaneseq
      %v3022 = vshrl.u32 %v3021, 7
      %v3023 = vsub.s32 0, %v3022
      %v3024 = vrot.slane %v3019, %v3023
      %v3025 = vmul.bf16 %v3012, %v3024
      %v3026 = vmul.bf16 %v3016, %v3024
      %3027 = vrot.lane.b32.xlu0 %v2758, 68
      %v3028 = vpop.permute.xlu0 %3027
      %3029 = vrot.lane.b32.xlu0 %v2759, 68
      %v3030 = vpop.permute.xlu0 %3029
      %3031 = vrot.lane.b32.xlu0 %v2758, 4
      %v3032 = vpop.permute.xlu0 %3031
      %3033 = vrot.lane.b32.xlu0 %v2759, 4
      %v3034 = vpop.permute.xlu0 %3033
      %vm3035 = vcmask 31744
      %v3038 = vsel %vm3035, %v3028, %v3032
      %v3042 = vsel %vm3035, %v3030, %v3034
      %v3044 = vld [vmem:[%s7 + $0x4] sm:$0x2]
      %v3046 = vpack.i.b16 %v3044, %v3044
      %v3048 = vlaneseq
      %v3049 = vshrl.u32 %v3048, 7
      %v3050 = vsub.s32 1, %v3049
      %v3051 = vrot.slane %v3046, %v3050
      %v3052 = vmul.bf16 %v3038, %v3051
      %v3053 = vmul.bf16 %v3042, %v3051
      %3054 = vrot.lane.b32.xlu0 %v2758, 67
      %v3055 = vpop.permute.xlu0 %3054
      %3056 = vrot.lane.b32.xlu0 %v2759, 67
      %v3057 = vpop.permute.xlu0 %3056
      %3058 = vrot.lane.b32.xlu0 %v2758, 3
      %v3059 = vpop.permute.xlu0 %3058
      %3060 = vrot.lane.b32.xlu0 %v2759, 3
      %v3061 = vpop.permute.xlu0 %3060
      %vm3062 = vcmask 23552
      %v3065 = vsel %vm3062, %v3055, %v3059
      %v3069 = vsel %vm3062, %v3057, %v3061
      %v3071 = vshrl.u32 %v3044, 16
      %v3072 = vpack.i.b16 %v3071, %v3071
      %v3074 = vlaneseq
      %v3075 = vshrl.u32 %v3074, 7
      %v3076 = vsub.s32 1, %v3075
      %v3077 = vrot.slane %v3072, %v3076
      %v3078 = vmul.bf16 %v3065, %v3077
      %v3079 = vmul.bf16 %v3069, %v3077
      %3080 = vrot.lane.b32.xlu0 %v2758, 65
      %v3081 = vpop.permute.xlu0 %3080
      %3082 = vrot.lane.b32.xlu0 %v2759, 65
      %v3083 = vpop.permute.xlu0 %3082
      %3084 = vrot.lane.b32.xlu0 %v2758, 1
      %v3085 = vpop.permute.xlu0 %3084
      %3086 = vrot.lane.b32.xlu0 %v2759, 1
      %v3087 = vpop.permute.xlu0 %3086
      %v3090 = vsel %vm1119, %v3081, %v3085
      %v3094 = vsel %vm1119, %v3083, %v3087
      %v3096 = vld [vmem:[%s7 + $0x4] sm:$0x4]
      %v3098 = vpack.i.b16 %v3096, %v3096
      %v3100 = vlaneseq
      %v3101 = vshrl.u32 %v3100, 7
      %v3102 = vsub.s32 2, %v3101
      %v3103 = vrot.slane %v3098, %v3102
      %v3104 = vmul.bf16 %v3090, %v3103
      %v3105 = vmul.bf16 %v3094, %v3103
      %3106 = vrot.lane.b32.xlu0 %v2758, 127
      %v3107 = vpop.permute.xlu0 %3106
      %3108 = vrot.lane.b32.xlu0 %v2759, 127
      %v3109 = vpop.permute.xlu0 %3108
      %3110 = vrot.lane.b32.xlu0 %v2758, 63
      %v3111 = vpop.permute.xlu0 %3110
      %3112 = vrot.lane.b32.xlu0 %v2759, 63
      %v3113 = vpop.permute.xlu0 %3112
      %v3116 = vsel %vm719, %v3107, %v3111
      %v3120 = vsel %vm719, %v3109, %v3113
      %v3122 = vld [vmem:[%s7 + $0x4] sm:$0x8]
      %v3124 = vpack.i.b16 %v3122, %v3122
      %v3126 = vlaneseq
      %v3127 = vshrl.u32 %v3126, 7
      %v3128 = vsub.s32 3, %v3127
      %v3129 = vrot.slane %v3124, %v3128
      %v3130 = vmul.bf16 %v3116, %v3129
      %v3131 = vmul.bf16 %v3120, %v3129
      %3132 = vrot.lane.b32.xlu0 %v2758, 125
      %v3133 = vpop.permute.xlu0 %3132
      %3134 = vrot.lane.b32.xlu0 %v2759, 125
      %v3135 = vpop.permute.xlu0 %3134
      %3136 = vrot.lane.b32.xlu0 %v2758, 61
      %v3137 = vpop.permute.xlu0 %3136
      %3138 = vrot.lane.b32.xlu0 %v2759, 61
      %v3139 = vpop.permute.xlu0 %3138
      %vm3140 = vcmask 498688
      %v3143 = vsel %vm3140, %v3133, %v3137
      %v3147 = vsel %vm3140, %v3135, %v3139
      %v3149 = vshrl.u32 %v3122, 16
      %v3150 = vpack.i.b16 %v3149, %v3149
      %v3152 = vlaneseq
      %v3153 = vshrl.u32 %v3152, 7
      %v3154 = vsub.s32 3, %v3153
      %v3155 = vrot.slane %v3150, %v3154
      %v3156 = vmul.bf16 %v3143, %v3155
      %v3157 = vmul.bf16 %v3147, %v3155
      %3158 = vrot.lane.b32.xlu0 %v2758, 124
      %v3159 = vpop.permute.xlu0 %3158
      %3160 = vrot.lane.b32.xlu0 %v2759, 124
      %v3161 = vpop.permute.xlu0 %3160
      %3162 = vrot.lane.b32.xlu0 %v2758, 60
      %v3163 = vpop.permute.xlu0 %3162
      %3164 = vrot.lane.b32.xlu0 %v2759, 60
      %v3165 = vpop.permute.xlu0 %3164
      %vm3166 = vcmask 490496
      %v3169 = vsel %vm3166, %v3159, %v3163
      %v3173 = vsel %vm3166, %v3161, %v3165
      %v3175 = vld [vmem:[%s7 + $0x8] sm:$0x1]
      %v3177 = vpack.i.b16 %v3175, %v3175
      %v3179 = vlaneseq
      %v3180 = vshrl.u32 %v3179, 7
      %v3181 = vsub.s32 0, %v3180
      %v3182 = vrot.slane %v3177, %v3181
      %v3183 = vmul.bf16 %v3169, %v3182
      %v3184 = vmul.bf16 %v3173, %v3182
      %3185 = vrot.lane.b32.xlu0 %v2758, 123
      %v3186 = vpop.permute.xlu0 %3185
      %3187 = vrot.lane.b32.xlu0 %v2759, 123
      %v3188 = vpop.permute.xlu0 %3187
      %3189 = vrot.lane.b32.xlu0 %v2758, 59
      %v3190 = vpop.permute.xlu0 %3189
      %3191 = vrot.lane.b32.xlu0 %v2759, 59
      %v3192 = vpop.permute.xlu0 %3191
      %vm3193 = vcmask 482304
      %v3196 = vsel %vm3193, %v3186, %v3190
      %v3200 = vsel %vm3193, %v3188, %v3192
      %v3202 = vshrl.u32 %v3175, 16
      %v3203 = vpack.i.b16 %v3202, %v3202
      %v3205 = vlaneseq
      %v3206 = vshrl.u32 %v3205, 7
      %v3207 = vsub.s32 0, %v3206
      %v3208 = vrot.slane %v3203, %v3207
      %v3209 = vmul.bf16 %v3196, %v3208
      %v3210 = vmul.bf16 %v3200, %v3208
      %3211 = vrot.lane.b32.xlu0 %v2758, 117
      %v3212 = vpop.permute.xlu0 %3211
      %3213 = vrot.lane.b32.xlu0 %v2759, 117
      %v3214 = vpop.permute.xlu0 %3213
      %3215 = vrot.lane.b32.xlu0 %v2758, 53
      %v3216 = vpop.permute.xlu0 %3215
      %3217 = vrot.lane.b32.xlu0 %v2759, 53
      %v3218 = vpop.permute.xlu0 %3217
      %vm3219 = vcmask 433152
      %v3222 = vsel %vm3219, %v3212, %v3216
      %v3226 = vsel %vm3219, %v3214, %v3218
      %v3228 = vld [vmem:[%s7 + $0x8] sm:$0x2]
      %v3230 = vpack.i.b16 %v3228, %v3228
      %v3232 = vlaneseq
      %v3233 = vshrl.u32 %v3232, 7
      %v3234 = vsub.s32 1, %v3233
      %v3235 = vrot.slane %v3230, %v3234
      %v3236 = vmul.bf16 %v3222, %v3235
      %v3237 = vmul.bf16 %v3226, %v3235
      %3238 = vrot.lane.b32.xlu0 %v2758, 116
      %v3239 = vpop.permute.xlu0 %3238
      %3240 = vrot.lane.b32.xlu0 %v2759, 116
      %v3241 = vpop.permute.xlu0 %3240
      %3242 = vrot.lane.b32.xlu0 %v2758, 52
      %v3243 = vpop.permute.xlu0 %3242
      %3244 = vrot.lane.b32.xlu0 %v2759, 52
      %v3245 = vpop.permute.xlu0 %3244
      %vm3246 = vcmask 424960
      %v3249 = vsel %vm3246, %v3239, %v3243
      %v3253 = vsel %vm3246, %v3241, %v3245
      %v3255 = vshrl.u32 %v3228, 16
      %v3256 = vpack.i.b16 %v3255, %v3255
      %v3258 = vlaneseq
      %v3259 = vshrl.u32 %v3258, 7
      %v3260 = vsub.s32 1, %v3259
      %v3261 = vrot.slane %v3256, %v3260
      %v3262 = vmul.bf16 %v3249, %v3261
      %v3263 = vmul.bf16 %v3253, %v3261
      %3264 = vrot.lane.b32.xlu0 %v2758, 115
      %v3265 = vpop.permute.xlu0 %3264
      %3266 = vrot.lane.b32.xlu0 %v2759, 115
      %v3267 = vpop.permute.xlu0 %3266
      %3268 = vrot.lane.b32.xlu0 %v2758, 51
      %v3269 = vpop.permute.xlu0 %3268
      %3270 = vrot.lane.b32.xlu0 %v2759, 51
      %v3271 = vpop.permute.xlu0 %3270
      %vm3272 = vcmask 416768
      %v3275 = vsel %vm3272, %v3265, %v3269
      %v3279 = vsel %vm3272, %v3267, %v3271
      %v3281 = vld [vmem:[%s7 + $0x8] sm:$0x4]
      %v3283 = vpack.i.b16 %v3281, %v3281
      %v3285 = vlaneseq
      %v3286 = vshrl.u32 %v3285, 7
      %v3287 = vsub.s32 2, %v3286
      %v3288 = vrot.slane %v3283, %v3287
      %v3289 = vmul.bf16 %v3275, %v3288
      %v3290 = vmul.bf16 %v3279, %v3288
      %3291 = vrot.lane.b32.xlu0 %v2758, 113
      %v3292 = vpop.permute.xlu0 %3291
      %3293 = vrot.lane.b32.xlu0 %v2759, 113
      %v3294 = vpop.permute.xlu0 %3293
      %3295 = vrot.lane.b32.xlu0 %v2758, 49
      %v3296 = vpop.permute.xlu0 %3295
      %3297 = vrot.lane.b32.xlu0 %v2759, 49
      %v3298 = vpop.permute.xlu0 %3297
      %vm3299 = vcmask 400384
      %v3302 = vsel %vm3299, %v3292, %v3296
      %v3306 = vsel %vm3299, %v3294, %v3298
      %v3308 = vshrl.u32 %v3281, 16
      %v3309 = vpack.i.b16 %v3308, %v3308
      %v3311 = vlaneseq
      %v3312 = vshrl.u32 %v3311, 7
      %v3313 = vsub.s32 2, %v3312
      %v3314 = vrot.slane %v3309, %v3313
      %v3315 = vmul.bf16 %v3302, %v3314
      %v3316 = vmul.bf16 %v3306, %v3314
      %3317 = vrot.lane.b32.xlu0 %v2758, 112
      %v3318 = vpop.permute.xlu0 %3317
      %3319 = vrot.lane.b32.xlu0 %v2759, 112
      %v3320 = vpop.permute.xlu0 %3319
      %3321 = vrot.lane.b32.xlu0 %v2758, 48
      %v3322 = vpop.permute.xlu0 %3321
      %3323 = vrot.lane.b32.xlu0 %v2759, 48
      %v3324 = vpop.permute.xlu0 %3323
      %vm3325 = vcmask 392192
      %v3328 = vsel %vm3325, %v3318, %v3322
      %v3332 = vsel %vm3325, %v3320, %v3324
      %v3334 = vld [vmem:[%s7 + $0x8] sm:$0x8]
      %v3336 = vpack.i.b16 %v3334, %v3334
      %v3338 = vlaneseq
      %v3339 = vshrl.u32 %v3338, 7
      %v3340 = vsub.s32 3, %v3339
      %v3341 = vrot.slane %v3336, %v3340
      %v3342 = vmul.bf16 %v3328, %v3341
      %v3343 = vmul.bf16 %v3332, %v3341
      %3344 = vrot.lane.b32.xlu0 %v2758, 111
      %v3345 = vpop.permute.xlu0 %3344
      %3346 = vrot.lane.b32.xlu0 %v2759, 111
      %v3347 = vpop.permute.xlu0 %3346
      %3348 = vrot.lane.b32.xlu0 %v2758, 47
      %v3349 = vpop.permute.xlu0 %3348
      %3350 = vrot.lane.b32.xlu0 %v2759, 47
      %v3351 = vpop.permute.xlu0 %3350
      %vm3352 = vcmask 384000
      %v3355 = vsel %vm3352, %v3345, %v3349
      %v3359 = vsel %vm3352, %v3347, %v3351
      %v3361 = vshrl.u32 %v3334, 16
      %v3362 = vpack.i.b16 %v3361, %v3361
      %v3364 = vlaneseq
      %v3365 = vshrl.u32 %v3364, 7
      %v3366 = vsub.s32 3, %v3365
      %v3367 = vrot.slane %v3362, %v3366
      %v3368 = vmul.bf16 %v3355, %v3367
      %v3369 = vmul.bf16 %v3359, %v3367
      %3370 = vrot.lane.b32.xlu0 %v2758, 109
      %v3371 = vpop.permute.xlu0 %3370
      %3372 = vrot.lane.b32.xlu0 %v2759, 109
      %v3373 = vpop.permute.xlu0 %3372
      %3374 = vrot.lane.b32.xlu0 %v2758, 45
      %v3375 = vpop.permute.xlu0 %3374
      %3376 = vrot.lane.b32.xlu0 %v2759, 45
      %v3377 = vpop.permute.xlu0 %3376
      %vm3378 = vcmask 367616
      %v3381 = vsel %vm3378, %v3371, %v3375
      %v3385 = vsel %vm3378, %v3373, %v3377
      %v3387 = vld [vmem:[%s7 + $0xc] sm:$0x1]
      %v3389 = vpack.i.b16 %v3387, %v3387
      %v3391 = vlaneseq
      %v3392 = vshrl.u32 %v3391, 7
      %v3393 = vsub.s32 0, %v3392
      %v3394 = vrot.slane %v3389, %v3393
      %v3395 = vmul.bf16 %v3381, %v3394
      %v3396 = vmul.bf16 %v3385, %v3394
      %3397 = vrot.lane.b32.xlu0 %v2758, 108
      %v3398 = vpop.permute.xlu0 %3397
      %3399 = vrot.lane.b32.xlu0 %v2759, 108
      %v3400 = vpop.permute.xlu0 %3399
      %3401 = vrot.lane.b32.xlu0 %v2758, 44
      %v3402 = vpop.permute.xlu0 %3401
      %3403 = vrot.lane.b32.xlu0 %v2759, 44
      %v3404 = vpop.permute.xlu0 %3403
      %vm3405 = vcmask 359424
      %v3408 = vsel %vm3405, %v3398, %v3402
      %v3412 = vsel %vm3405, %v3400, %v3404
      %v3414 = vshrl.u32 %v3387, 16
      %v3415 = vpack.i.b16 %v3414, %v3414
      %v3417 = vlaneseq
      %v3418 = vshrl.u32 %v3417, 7
      %v3419 = vsub.s32 0, %v3418
      %v3420 = vrot.slane %v3415, %v3419
      %v3421 = vmul.bf16 %v3408, %v3420
      %v3422 = vmul.bf16 %v3412, %v3420
      %3423 = vrot.lane.b32.xlu0 %v2758, 107
      %v3424 = vpop.permute.xlu0 %3423
      %3425 = vrot.lane.b32.xlu0 %v2759, 107
      %v3426 = vpop.permute.xlu0 %3425
      %3427 = vrot.lane.b32.xlu0 %v2758, 43
      %v3428 = vpop.permute.xlu0 %3427
      %3429 = vrot.lane.b32.xlu0 %v2759, 43
      %v3430 = vpop.permute.xlu0 %3429
      %vm3431 = vcmask 351232
      %v3434 = vsel %vm3431, %v3424, %v3428
      %v3438 = vsel %vm3431, %v3426, %v3430
      %v3440 = vld [vmem:[%s7 + $0xc] sm:$0x2]
      %v3442 = vpack.i.b16 %v3440, %v3440
      %v3444 = vlaneseq
      %v3445 = vshrl.u32 %v3444, 7
      %v3446 = vsub.s32 1, %v3445
      %v3447 = vrot.slane %v3442, %v3446
      %v3448 = vmul.bf16 %v3434, %v3447
      %v3449 = vmul.bf16 %v3438, %v3447
      %v3450 = vld [vmem:[%s6] sm:$0xff]
      %v3451 = vld [vmem:[%s6 + $0x8] sm:$0xff]
      %v3452 = vld [vmem:[%s6 + $0x10] sm:$0xff]
      %v3453 = vld [vmem:[%s6 + $0x18] sm:$0xf]
      %v3454 = vld [vmem:[%s6 + $0x1c] sm:$0xff]
      %v3455 = vld [vmem:[%s6 + $0x24] sm:$0xff]
      %v3456 = vld [vmem:[%s6 + $0x2c] sm:$0xff]
      %v3457 = vld [vmem:[%s6 + $0x34] sm:$0xf]
      %v3458 = vld [vmem:[%s6 + $0x38] sm:$0xff]
      %v3459 = vld [vmem:[%s6 + $0x40] sm:$0xff]
      %v3460 = vld [vmem:[%s6 + $0x48] sm:$0xff]
      %v3461 = vld [vmem:[%s6 + $0x50] sm:$0xf]
      %v3462 = vld [vmem:[%s6 + $0x54] sm:$0xff]
      %v3463 = vld [vmem:[%s6 + $0x5c] sm:$0xff]
      %v3464 = vld [vmem:[%s6 + $0x64] sm:$0xff]
      %v3465 = vld [vmem:[%s6 + $0x6c] sm:$0xf]
      %v3482 = vunpack.c.l.b16 %v3450
      %v3483 = vunpack.c.h.b16 %v3450
      %v3484 = vunpack.c.l.b16 %v3451
      %v3485 = vunpack.c.h.b16 %v3451
      %v3486 = vunpack.c.l.b16 %v3452
      %v3487 = vunpack.c.h.b16 %v3452
      %v3488 = vunpack.c.l.b16 %v3453
      %v3489 = vunpack.c.l.b16 %v3454
      %v3490 = vunpack.c.h.b16 %v3454
      %v3491 = vunpack.c.l.b16 %v3455
      %v3492 = vunpack.c.h.b16 %v3455
      %v3493 = vunpack.c.l.b16 %v3456
      %v3494 = vunpack.c.h.b16 %v3456
      %v3495 = vunpack.c.l.b16 %v3457
      %v3496 = vunpack.c.l.b16 %v3458
      %v3497 = vunpack.c.h.b16 %v3458
      %v3498 = vunpack.c.l.b16 %v3459
      %v3499 = vunpack.c.h.b16 %v3459
      %v3500 = vunpack.c.l.b16 %v3460
      %v3501 = vunpack.c.h.b16 %v3460
      %v3502 = vunpack.c.l.b16 %v3461
      %v3503 = vunpack.c.l.b16 %v3462
      %v3504 = vunpack.c.h.b16 %v3462
      %v3505 = vunpack.c.l.b16 %v3463
      %v3506 = vunpack.c.h.b16 %v3463
      %v3507 = vunpack.c.l.b16 %v3464
      %v3508 = vunpack.c.h.b16 %v3464
      %v3509 = vunpack.c.l.b16 %v3465
      %v3510 = vpack.c.b16 %v3489, %v3482
      %v3511 = vpack.c.b16 %v3490, %v3483
      %v3512 = vpack.c.b16 %v3491, %v3484
      %v3513 = vpack.c.b16 %v3492, %v3485
      %v3514 = vpack.c.b16 %v3493, %v3486
      %v3515 = vpack.c.b16 %v3494, %v3487
      %v3516 = vpack.c.b16 %v3495, %v3488
      %v3517 = vpack.c.b16 %v3503, %v3496
      %v3518 = vpack.c.b16 %v3504, %v3497
      %v3519 = vpack.c.b16 %v3505, %v3498
      %v3520 = vpack.c.b16 %v3506, %v3499
      %v3521 = vpack.c.b16 %v3507, %v3500
      %v3522 = vpack.c.b16 %v3508, %v3501
      %v3523 = vpack.c.b16 %v3509, %v3502
      %3538 = vmatprep.subr.bf16.mxu0 0
      %3539 = vmatpush1.bf16.msra.mxu0 %v2787
      %3540 = vmatprep.subr.bf16.mxu0 0
      %3541 = vmatpush1.bf16.msra.mxu0 %v2788
      %3542 = vmatprep.subr.bf16.mxu0 0
      %3543 = vmatpush1.bf16.msra.mxu0 %v2813
      %3544 = vmatprep.subr.bf16.mxu0 0
      %3545 = vmatpush1.bf16.msra.mxu0 %v2814
      %3546 = vmatprep.subr.bf16.mxu0 0
      %3547 = vmatpush1.bf16.msra.mxu0 %v2840
      %3548 = vmatprep.subr.bf16.mxu0 0
      %3549 = vmatpush1.bf16.msra.mxu0 %v2841
      %3550 = vmatprep.subr.bf16.mxu0 0
      %3551 = vmatpush1.bf16.msra.mxu0 %v2866
      %3552 = vmatprep.subr.bf16.mxu0 0
      %3553 = vmatpush1.bf16.msra.mxu0 %v2867
      %3554 = vmatprep.subr.bf16.mxu0 0
      %3555 = vmatpush1.bf16.msra.mxu0 %v2893
      %3556 = vmatprep.subr.bf16.mxu0 0
      %3557 = vmatpush1.bf16.msra.mxu0 %v2894
      %3558 = vmatprep.subr.bf16.mxu0 0
      %3559 = vmatpush1.bf16.msra.mxu0 %v2919
      %3560 = vmatprep.subr.bf16.mxu0 0
      %3561 = vmatpush1.bf16.msra.mxu0 %v2920
      %3562 = vmatprep.subr.bf16.mxu0 0
      %3563 = vmatpush1.bf16.msra.mxu0 %v2946
      %3564 = vmatprep.subr.bf16.mxu0 0
      %3565 = vmatpush1.bf16.msra.mxu0 %v2947
      %3566 = vmatprep.subr.bf16.mxu0 0
      %3567 = vmatpush1.bf16.msra.mxu0 %v2972
      %3568 = vmatprep.subr.bf16.mxu0 0
      %3569 = vmatpush1.bf16.msra.mxu0 %v2973
      %3570 = vmatprep.mubr.bf16.mxu0 %v3511
      %3571 = vmatmul.mubr.bf16.gmra.mrb[0].mxu0 %v3510
      %v3572 = vpop.f32.mrb[0].mxu0
      %v3573 = vadd.f32 0.0, %v3572
      %v3574 = vpop.f32.mrb[0].mxu0
      %v3575 = vpop.f32.mrb[0].mxu0
      %v3576 = vadd.f32 0.0, %v3575
      %v3577 = vpop.f32.mrb[0].mxu0
      %3578 = vmatprep.mubr.bf16.mxu0 %v3518
      %3579 = vmatmul.mubr.bf16.gmra.mrb[0].mxu0 %v3517
      %v3580 = vpop.f32.mrb[0].mxu0
      %v3581 = vadd.f32 0.0, %v3580
      %v3582 = vpop.f32.mrb[0].mxu0
      %v3583 = vpop.f32.mrb[0].mxu0
      %v3584 = vadd.f32 0.0, %v3583
      %v3585 = vpop.f32.mrb[0].mxu0
      %3586 = vdwg.mxu0
      %3587 = vmatprep.subr.bf16.mxu0 0
      %3588 = vmatpush1.bf16.msra.mxu0 %v2999
      %3589 = vmatprep.subr.bf16.mxu0 0
      %3590 = vmatpush1.bf16.msra.mxu0 %v3000
      %3591 = vmatprep.subr.bf16.mxu0 0
      %3592 = vmatpush1.bf16.msra.mxu0 %v3025
      %3593 = vmatprep.subr.bf16.mxu0 0
      %3594 = vmatpush1.bf16.msra.mxu0 %v3026
      %3595 = vmatprep.subr.bf16.mxu0 0
      %3596 = vmatpush1.bf16.msra.mxu0 %v3052
      %3597 = vmatprep.subr.bf16.mxu0 0
      %3598 = vmatpush1.bf16.msra.mxu0 %v3053
      %3599 = vmatprep.subr.bf16.mxu0 0
      %3600 = vmatpush1.bf16.msra.mxu0 %v3078
      %3601 = vmatprep.subr.bf16.mxu0 0
      %3602 = vmatpush1.bf16.msra.mxu0 %v3079
      %3603 = vmatprep.subr.bf16.mxu0 0
      %3604 = vmatpush1.bf16.msra.mxu0 %v3104
      %3605 = vmatprep.subr.bf16.mxu0 0
      %3606 = vmatpush1.bf16.msra.mxu0 %v3105
      %3607 = vmatprep.subr.bf16.mxu0 0
      %3608 = vmatpush1.bf16.msra.mxu0 %v2758
      %3609 = vmatprep.subr.bf16.mxu0 0
      %3610 = vmatpush1.bf16.msra.mxu0 %v2759
      %3611 = vmatprep.subr.bf16.mxu0 0
      %3612 = vmatpush1.bf16.msra.mxu0 %v3130
      %3613 = vmatprep.subr.bf16.mxu0 0
      %3614 = vmatpush1.bf16.msra.mxu0 %v3131
      %3615 = vmatprep.subr.bf16.mxu0 0
      %3616 = vmatpush1.bf16.msra.mxu0 %v3156
      %3617 = vmatprep.subr.bf16.mxu0 0
      %3618 = vmatpush1.bf16.msra.mxu0 %v3157
      %3619 = vmatprep.mubr.bf16.mxu0 %v3513
      %3620 = vmatmul.mubr.bf16.gmra.mrb[0].mxu0 %v3512
      %v3621 = vpop.f32.mrb[0].mxu0
      %v3622 = vadd.f32 %v3573, %v3621
      %v3623 = vpop.f32.mrb[0].mxu0
      %v3624 = vpop.f32.mrb[0].mxu0
      %v3625 = vadd.f32 %v3576, %v3624
      %v3626 = vpop.f32.mrb[0].mxu0
      %3627 = vmatprep.mubr.bf16.mxu0 %v3520
      %3628 = vmatmul.mubr.bf16.gmra.mrb[0].mxu0 %v3519
      %v3629 = vpop.f32.mrb[0].mxu0
      %v3630 = vadd.f32 %v3581, %v3629
      %v3631 = vpop.f32.mrb[0].mxu0
      %v3632 = vpop.f32.mrb[0].mxu0
      %v3633 = vadd.f32 %v3584, %v3632
      %v3634 = vpop.f32.mrb[0].mxu0
      %3635 = vdwg.mxu0
      %3636 = vmatprep.subr.bf16.mxu0 0
      %3637 = vmatpush1.bf16.msra.mxu0 %v3183
      %3638 = vmatprep.subr.bf16.mxu0 0
      %3639 = vmatpush1.bf16.msra.mxu0 %v3184
      %3640 = vmatprep.subr.bf16.mxu0 0
      %3641 = vmatpush1.bf16.msra.mxu0 %v3209
      %3642 = vmatprep.subr.bf16.mxu0 0
      %3643 = vmatpush1.bf16.msra.mxu0 %v3210
      %3644 = vmatprep.subr.bf16.mxu0 0
      %3645 = vmatpush1.bf16.msra.mxu0 %v3236
      %3646 = vmatprep.subr.bf16.mxu0 0
      %3647 = vmatpush1.bf16.msra.mxu0 %v3237
      %3648 = vmatprep.subr.bf16.mxu0 0
      %3649 = vmatpush1.bf16.msra.mxu0 %v3262
      %3650 = vmatprep.subr.bf16.mxu0 0
      %3651 = vmatpush1.bf16.msra.mxu0 %v3263
      %3652 = vmatprep.subr.bf16.mxu0 0
      %3653 = vmatpush1.bf16.msra.mxu0 %v3289
      %3654 = vmatprep.subr.bf16.mxu0 0
      %3655 = vmatpush1.bf16.msra.mxu0 %v3290
      %3656 = vmatprep.subr.bf16.mxu0 0
      %3657 = vmatpush1.bf16.msra.mxu0 %v3315
      %3658 = vmatprep.subr.bf16.mxu0 0
      %3659 = vmatpush1.bf16.msra.mxu0 %v3316
      %3660 = vmatprep.subr.bf16.mxu0 0
      %3661 = vmatpush1.bf16.msra.mxu0 %v3342
      %3662 = vmatprep.subr.bf16.mxu0 0
      %3663 = vmatpush1.bf16.msra.mxu0 %v3343
      %3664 = vmatprep.subr.bf16.mxu0 0
      %3665 = vmatpush1.bf16.msra.mxu0 %v3368
      %3666 = vmatprep.subr.bf16.mxu0 0
      %3667 = vmatpush1.bf16.msra.mxu0 %v3369
      %3668 = vmatprep.mubr.bf16.mxu0 %v3515
      %3669 = vmatmul.mubr.bf16.gmra.mrb[0].mxu0 %v3514
      %v3670 = vpop.f32.mrb[0].mxu0
      %v3671 = vadd.f32 %v3622, %v3670
      %v3672 = vpop.f32.mrb[0].mxu0
      %v3673 = vpop.f32.mrb[0].mxu0
      %v3674 = vadd.f32 %v3625, %v3673
      %v3675 = vpop.f32.mrb[0].mxu0
      %3676 = vmatprep.mubr.bf16.mxu0 %v3522
      %3677 = vmatmul.mubr.bf16.gmra.mrb[0].mxu0 %v3521
      %v3678 = vpop.f32.mrb[0].mxu0
      %v3679 = vadd.f32 %v3630, %v3678
      %v3680 = vpop.f32.mrb[0].mxu0
      %v3681 = vpop.f32.mrb[0].mxu0
      %v3682 = vadd.f32 %v3633, %v3681
      %v3683 = vpop.f32.mrb[0].mxu0
      %3684 = vdwg.mxu0
      %3685 = vmatprep.subr.bf16.mxu0 0
      %3686 = vmatpush1.bf16.msra.mxu0 %v3395
      %3687 = vmatprep.subr.bf16.mxu0 0
      %3688 = vmatpush1.bf16.msra.mxu0 %v3396
      %3689 = vmatprep.subr.bf16.mxu0 0
      %3690 = vmatpush1.bf16.msra.mxu0 %v3421
      %3691 = vmatprep.subr.bf16.mxu0 0
      %3692 = vmatpush1.bf16.msra.mxu0 %v3422
      %3693 = vmatprep.subr.bf16.mxu0 0
      %3694 = vmatpush1.bf16.msra.mxu0 %v3448
      %3695 = vmatprep.subr.bf16.mxu0 0
      %3696 = vmatpush1.bf16.msra.mxu0 %v3449
      %3697 = vmatprep.subr.bf16.mxu0 0
      %3698 = vmatpush1.bf16.msra.mxu0 0
      %3699 = vmatprep.subr.bf16.mxu0 0
      %3700 = vmatpush1.bf16.msra.mxu0 0
      %3701 = vmatprep.subr.bf16.mxu0 0
      %3702 = vmatpush1.bf16.msra.mxu0 0
      %3703 = vmatprep.subr.bf16.mxu0 0
      %3704 = vmatpush1.bf16.msra.mxu0 0
      %3705 = vmatprep.subr.bf16.mxu0 0
      %3706 = vmatpush1.bf16.msra.mxu0 0
      %3707 = vmatprep.subr.bf16.mxu0 0
      %3708 = vmatpush1.bf16.msra.mxu0 0
      %3709 = vmatprep.subr.bf16.mxu0 0
      %3710 = vmatpush1.bf16.msra.mxu0 0
      %3711 = vmatprep.subr.bf16.mxu0 0
      %3712 = vmatpush1.bf16.msra.mxu0 0
      %3713 = vmatprep.subr.bf16.mxu0 0
      %3714 = vmatpush1.bf16.msra.mxu0 0
      %3715 = vmatprep.subr.bf16.mxu0 0
      %3716 = vmatpush1.bf16.msra.mxu0 0
      %3717 = vmatprep.mubr.bf16.mxu0 0
      %3718 = vmatmul.mubr.bf16.gmra.mrb[0].mxu0 %v3516
      %v3719 = vpop.f32.mrb[0].mxu0
      %v3720 = vadd.f32 %v3671, %v3719
      %v3721 = vpop.f32.mrb[0].mxu0
      %v3722 = vpop.f32.mrb[0].mxu0
      %v3723 = vadd.f32 %v3674, %v3722
      %v3724 = vpop.f32.mrb[0].mxu0
      %3725 = vmatprep.mubr.bf16.mxu0 0
      %3726 = vmatmul.mubr.bf16.gmra.mrb[0].mxu0 %v3523
      %v3727 = vpop.f32.mrb[0].mxu0
      %v3728 = vadd.f32 %v3679, %v3727
      %v3729 = vpop.f32.mrb[0].mxu0
      %v3730 = vpop.f32.mrb[0].mxu0
      %v3731 = vadd.f32 %v3682, %v3730
      %v3732 = vpop.f32.mrb[0].mxu0
      %3733 = vdwg.mxu0
      %v3734 = vld [vmem:[%s8] sm:$0xff]
      %v3735 = vld [vmem:[%s8 + $0x8] sm:$0xff]
      %v3736 = vld [vmem:[%s8 + $0x10] sm:$0xff]
      %v3737 = vld [vmem:[%s8 + $0x18] sm:$0xff]
      %3739 = vset.pattern.permute.xlu0 0
      %3740 = vperm.xlu0 %3739, %v3734
      %v3741 = vpop.permute.xlu0 %3740
      %3744 = vset.pattern.permute.xlu0 0
      %3745 = vperm.xlu0 %3744, %v3735
      %v3746 = vpop.permute.xlu0 %3745
      %3749 = vset.pattern.permute.xlu0 0
      %3750 = vperm.xlu0 %3749, %v3736
      %v3751 = vpop.permute.xlu0 %3750
      %3754 = vset.pattern.permute.xlu0 0
      %3755 = vperm.xlu0 %3754, %v3737
      %v3756 = vpop.permute.xlu0 %3755
      %v3758 = vmul.f32 %v3720, %v3741
      %v3759 = vmul.f32 %v3723, %v3746
      %v3760 = vmul.f32 %v3728, %v3751
      %v3761 = vmul.f32 %v3731, %v3756
      %v3762 = vld [vmem:[%s9] sm:$0xff]
      %v3763 = vld [vmem:[%s9 + $0x8] sm:$0xff]
      %v3764 = vld [vmem:[%s9 + $0x10] sm:$0xff]
      %v3765 = vld [vmem:[%s9 + $0x18] sm:$0xff]
      %3767 = vset.pattern.permute.xlu0 0
      %3768 = vperm.xlu0 %3767, %v3762
      %v3769 = vpop.permute.xlu0 %3768
      %3772 = vset.pattern.permute.xlu0 0
      %3773 = vperm.xlu0 %3772, %v3763
      %v3774 = vpop.permute.xlu0 %3773
      %3777 = vset.pattern.permute.xlu0 0
      %3778 = vperm.xlu0 %3777, %v3764
      %v3779 = vpop.permute.xlu0 %3778
      %3782 = vset.pattern.permute.xlu0 0
      %3783 = vperm.xlu0 %3782, %v3765
      %v3784 = vpop.permute.xlu0 %3783
      %v3786 = vadd.f32 %v3758, %v3769
      %v3787 = vadd.f32 %v3759, %v3774
      %v3788 = vadd.f32 %v3760, %v3779
      %v3789 = vadd.f32 %v3761, %v3784
      %3794 = vrot.lane.b32.xlu0 %v3786, 127
      %v3795 = vpop.permute.xlu0 %3794
      %3796 = vrot.lane.b32.xlu0 %v3787, 127
      %v3797 = vpop.permute.xlu0 %3796
      %3798 = vrot.lane.b32.xlu0 %v3788, 127
      %v3799 = vpop.permute.xlu0 %3798
      %3800 = vrot.lane.b32.xlu0 %v3789, 127
      %v3801 = vpop.permute.xlu0 %3800
      %3806 = vrot.lane.b32.xlu0 %v3786, 63
      %v3807 = vpop.permute.xlu0 %3806
      %3808 = vrot.lane.b32.xlu0 %v3787, 63
      %v3809 = vpop.permute.xlu0 %3808
      %3810 = vrot.lane.b32.xlu0 %v3788, 63
      %v3811 = vpop.permute.xlu0 %3810
      %3812 = vrot.lane.b32.xlu0 %v3789, 63
      %v3813 = vpop.permute.xlu0 %3812
      %v3818 = vsel %vm719, %v3795, %v3807
      %v3819 = vsel %vm719, %v3797, %v3809
      %v3820 = vsel %vm719, %v3799, %v3811
      %v3821 = vsel %vm719, %v3801, %v3813
      %v3822 = vmax.f32 %v3786, %v3818
      %v3823 = vmax.f32 %v3787, %v3819
      %v3824 = vmax.f32 %v3788, %v3820
      %v3825 = vmax.f32 %v3789, %v3821
      %3830 = vrot.lane.b32.xlu0 %v3822, 124
      %v3831 = vpop.permute.xlu0 %3830
      %3832 = vrot.lane.b32.xlu0 %v3823, 124
      %v3833 = vpop.permute.xlu0 %3832
      %3834 = vrot.lane.b32.xlu0 %v3824, 124
      %v3835 = vpop.permute.xlu0 %3834
      %3836 = vrot.lane.b32.xlu0 %v3825, 124
      %v3837 = vpop.permute.xlu0 %3836
      %3842 = vrot.lane.b32.xlu0 %v3822, 60
      %v3843 = vpop.permute.xlu0 %3842
      %3844 = vrot.lane.b32.xlu0 %v3823, 60
      %v3845 = vpop.permute.xlu0 %3844
      %3846 = vrot.lane.b32.xlu0 %v3824, 60
      %v3847 = vpop.permute.xlu0 %3846
      %3848 = vrot.lane.b32.xlu0 %v3825, 60
      %v3849 = vpop.permute.xlu0 %3848
      %v3854 = vsel %vm3166, %v3831, %v3843
      %v3855 = vsel %vm3166, %v3833, %v3845
      %v3856 = vsel %vm3166, %v3835, %v3847
      %v3857 = vsel %vm3166, %v3837, %v3849
      %v3858 = vmax.f32 %v3822, %v3854
      %v3859 = vmax.f32 %v3823, %v3855
      %v3860 = vmax.f32 %v3824, %v3856
      %v3861 = vmax.f32 %v3825, %v3857
      %3866 = vrot.lane.b32.xlu0 %v3858, 112
      %v3867 = vpop.permute.xlu0 %3866
      %3868 = vrot.lane.b32.xlu0 %v3859, 112
      %v3869 = vpop.permute.xlu0 %3868
      %3870 = vrot.lane.b32.xlu0 %v3860, 112
      %v3871 = vpop.permute.xlu0 %3870
      %3872 = vrot.lane.b32.xlu0 %v3861, 112
      %v3873 = vpop.permute.xlu0 %3872
      %3878 = vrot.lane.b32.xlu0 %v3858, 48
      %v3879 = vpop.permute.xlu0 %3878
      %3880 = vrot.lane.b32.xlu0 %v3859, 48
      %v3881 = vpop.permute.xlu0 %3880
      %3882 = vrot.lane.b32.xlu0 %v3860, 48
      %v3883 = vpop.permute.xlu0 %3882
      %3884 = vrot.lane.b32.xlu0 %v3861, 48
      %v3885 = vpop.permute.xlu0 %3884
      %v3890 = vsel %vm3325, %v3867, %v3879
      %v3891 = vsel %vm3325, %v3869, %v3881
      %v3892 = vsel %vm3325, %v3871, %v3883
      %v3893 = vsel %vm3325, %v3873, %v3885
      %v3894 = vmax.f32 %v3858, %v3890
      %v3895 = vmax.f32 %v3859, %v3891
      %v3896 = vmax.f32 %v3860, %v3892
      %v3897 = vmax.f32 %v3861, %v3893
      %v3898 = vpack.c.bf16 %v3895, %v3894
      %v3899 = vpack.c.bf16 %v3897, %v3896
      %v3900 = vld [vmem:[%s10] sm:$0xf]
      %v3901 = vld [vmem:[%s10 + $0x4] sm:$0xf]
      %v3902 = vld [vmem:[%s10 + $0x8] sm:$0xf]
      %v3903 = vld [vmem:[%s10 + $0xc] sm:$0xf]
      %v3904 = vld [vmem:[%s10 + $0x10] sm:$0xf]
      %v3905 = vld [vmem:[%s10 + $0x14] sm:$0xf]
      %v3906 = vld [vmem:[%s10 + $0x18] sm:$0xf]
      %v3907 = vld [vmem:[%s10 + $0x1c] sm:$0xf]
      %v3916 = vunpack.c.l.b16 %v3900
      %v3917 = vunpack.c.l.b16 %v3901
      %v3918 = vunpack.c.l.b16 %v3902
      %v3919 = vunpack.c.l.b16 %v3903
      %v3920 = vunpack.c.l.b16 %v3904
      %v3921 = vunpack.c.l.b16 %v3905
      %v3922 = vunpack.c.l.b16 %v3906
      %v3923 = vunpack.c.l.b16 %v3907
      %v3924 = vpack.c.b16 %v3917, %v3916
      %v3925 = vpack.c.b16 %v3919, %v3918
      %v3926 = vpack.c.b16 %v3921, %v3920
      %v3927 = vpack.c.b16 %v3923, %v3922
      %v3933 = vsel %vm655, %v3898, 0
      %v3936 = vsel %vm655, %v3899, 0
      %3938 = vmatprep.subr.bf16.mxu0 0
      %3939 = vmatpush1.bf16.msra.mxu0 %v3924
      %3940 = vmatprep.subr.bf16.mxu0 0
      %3941 = vmatpush1.bf16.msra.mxu0 %v3925
      %3942 = vmatprep.subr.bf16.mxu0 0
      %3943 = vmatpush1.bf16.msra.mxu0 %v3926
      %3944 = vmatprep.subr.bf16.mxu0 0
      %3945 = vmatpush1.bf16.msra.mxu0 %v3927
      %3946 = vmatprep.subr.bf16.mxu0 0
      %3947 = vmatpush1.bf16.msra.mxu0 0
      %3948 = vmatprep.subr.bf16.mxu0 0
      %3949 = vmatpush1.bf16.msra.mxu0 0
      %3950 = vmatprep.subr.bf16.mxu0 0
      %3951 = vmatpush1.bf16.msra.mxu0 0
      %3952 = vmatprep.subr.bf16.mxu0 0
      %3953 = vmatpush1.bf16.msra.mxu0 0
      %3954 = vmatprep.subr.bf16.mxu0 0
      %3955 = vmatpush1.bf16.msra.mxu0 0
      %3956 = vmatprep.subr.bf16.mxu0 0
      %3957 = vmatpush1.bf16.msra.mxu0 0
      %3958 = vmatprep.subr.bf16.mxu0 0
      %3959 = vmatpush1.bf16.msra.mxu0 0
      %3960 = vmatprep.subr.bf16.mxu0 0
      %3961 = vmatpush1.bf16.msra.mxu0 0
      %3962 = vmatprep.subr.bf16.mxu0 0
      %3963 = vmatpush1.bf16.msra.mxu0 0
      %3964 = vmatprep.subr.bf16.mxu0 0
      %3965 = vmatpush1.bf16.msra.mxu0 0
      %3966 = vmatprep.subr.bf16.mxu0 0
      %3967 = vmatpush1.bf16.msra.mxu0 0
      %3968 = vmatprep.subr.bf16.mxu0 0
      %3969 = vmatpush1.bf16.msra.mxu0 0
      %3970 = vmatprep.mubr.bf16.mxu0 0
      %3971 = vmatmul.mubr.bf16.gmra.mrb[0].mxu0 %v3933
      %v3972 = vpop.f32.mrb[0].mxu0
      %v3973 = vadd.f32 0.0, %v3972
      %v3974 = vpop.f32.mrb[0].mxu0
      %v3975 = vpop.f32.mrb[0].mxu0
      %v3976 = vadd.f32 0.0, %v3975
      %v3977 = vpop.f32.mrb[0].mxu0
      %3978 = vmatprep.mubr.bf16.mxu0 0
      %3979 = vmatmul.mubr.bf16.gmra.mrb[0].mxu0 %v3936
      %v3980 = vpop.f32.mrb[0].mxu0
      %v3981 = vadd.f32 0.0, %v3980
      %v3982 = vpop.f32.mrb[0].mxu0
      %v3983 = vpop.f32.mrb[0].mxu0
      %v3984 = vadd.f32 0.0, %v3983
      %v3985 = vpop.f32.mrb[0].mxu0
      %3986 = vdwg.mxu0
      %v3987 = vmax.f32 %v3973, 0.0
      %v3988 = vmax.f32 %v3976, 0.0
      %v3989 = vmax.f32 %v3981, 0.0
      %v3990 = vmax.f32 %v3984, 0.0
      %3991 = vst.msk [vmem:[%s386] sm:$0xff] %vm1003, %v3987
      %3992 = vst.msk [vmem:[%s386 + $0x8] sm:$0xff] %vm1003, %v3988
      %3993 = vst.msk [vmem:[%s386 + $0x10] sm:$0xff] %vm1003, %v3989
      %3994 = vst.msk [vmem:[%s386 + $0x18] sm:$0xff] %vm1003, %v3990
      %p3995 = scmp.lt.s32.totalorder %s22, 1
      %s3996 = scalar_select %p3995, %s22, 1
      %s3997 = smul.addr %s3996, 4
      %s3998 = smul.addr %s3997, 8
      %s3999 = scalar_lea.vmem %s11, %s3998
      // Predicated region
      $region65: #{localizer_features.1} parent=63 // pred_check
        %p4000 = pneg %p276
      $region66: #{localizer_features.1} parent=63 // pred_check_branch
        %4002 = sbr.rel (%p4000) target = $region68
      $region67: #{localizer_features.1} parent=63 // pred_region
        _
      $region68: #{localizer_features.1} parent=63 // pred_fallthru
        _
    $region64: #{localizer_features.1} parent=5 // pred_fallthru
      _
    %p4003 = scmp.le.s32.totalorder 2, %s17
    // Predicated region
    $region69: #{localizer_features.1} parent=5 // pred_check
      %p4004 = pneg %p4003
    $region70: #{localizer_features.1} parent=5 // pred_check_branch
      %4006 = sbr.rel (%p4004) target = $region72
    $region71: #{localizer_features.1} parent=5 // pred_region
      %s4007 = ssub.s32 %s17, 2
      // Predicated region
      $region73: #{localizer_features.1} parent=71 // pred_check
        %p4008 = pneg %p282
      $region74: #{localizer_features.1} parent=71 // pred_check_branch
        %4010 = sbr.rel (%p4008) target = $region76
      $region75: #{localizer_features.1} parent=71 // pred_region
        %p4011 = scmp.lt.s32.totalorder %s23, 1
        %s4012 = scalar_select %p4011, %s23, 1
        %s4013 = smul.addr %s4012, 4
        %s4014 = smul.addr %s4013, 8
        %s4015 = scalar_lea.vmem %s11, %s4014
      $region76: #{localizer_features.1} parent=71 // pred_fallthru
        _
    $region72: #{localizer_features.1} parent=5 // pred_fallthru
      _
  $region6: #{localizer_features.1} parent=0 // loop_footer
    %s21 = sadd.s32 1, %s17
  $region7: #{localizer_features.1} parent=0 // loop_footer_branch
    %16 = sbr.rel target = $region3
  $region8: #{localizer_features.1} parent=0 // loop_exit
    _

</llo_original>
